<compile_context>
chip_gen: v7x
topology: tpu7x:2x2x1
jax: 0.10.0
libtpu: 0.0.40
codegen_flags: <defaults>
</compile_context>

<pallas_src>
import functools

import jax
import jax.numpy as jnp
from jax.experimental import pallas as pl
from jax.experimental.pallas import tpu as pltpu

_SQRT_2_OVER_PI = 0.7978845608028654  # sqrt(2 / pi)


def _gelu_tanh(x):
    # Module's GELU: 0.5*x*(1 + tanh(sqrt(2/pi)*(x + 0.044715*x^3)))
    # (cubic folded as x*(1 + 0.044715*x*x) -- same math, fewer VALU ops).
    inner = x * (1.0 + 0.044715 * x * x)
    return 0.5 * x * (1.0 + jnp.tanh(_SQRT_2_OVER_PI * inner))


def _mlp_kernel(x_ref, w1_ref, b1_ref, w2_ref, b2_ref, o_ref, acc_ref):
    # Grid: (row tiles ["parallel"], hidden chunks ["arbitrary" reduction]).
    # x_ref : (tm, Din)  bf16      w1_ref: (Din, tH) bf16   b1_ref: (1, tH) f32
    # w2_ref: (tH, Dout) bf16      b2_ref: (1, Dout) f32
    # o_ref : (tm, Dout)           acc_ref: (tm, Dout) f32 scratch
    k = pl.program_id(1)

    @pl.when(k == 0)
    def _():
        acc_ref[...] = jnp.zeros_like(acc_ref)

    # fc1 chunk: bf16 operands on the MXU, f32 accumulation.
    h = jnp.dot(x_ref[...], w1_ref[...], preferred_element_type=jnp.float32)
    h = h + b1_ref[...]
    # GELU in f32 (keeps v5e happy: no bf16 VPU/EUP there; also keeps accuracy).
    a = _gelu_tanh(h)
    # fc2 partial, accumulated in f32.
    acc_ref[...] += jnp.dot(a.astype(w2_ref.dtype), w2_ref[...],
                            preferred_element_type=jnp.float32)

    @pl.when(k == pl.num_programs(1) - 1)
    def _():
        # Dropout(p=0.0) in the module forward is the identity.
        o_ref[...] = (acc_ref[...] + b2_ref[...]).astype(o_ref.dtype)


def prepare_mlp_params(w1, b1, w2, b2, compute_dtype=jnp.bfloat16):
    """One-time conversion of PyTorch nn.Linear layout -> kernel layout.

    Hoisted out of the hot path: transpose + bf16 cast happen once at load,
    not per forward call.
    """
    w1_t = jnp.asarray(w1).T.astype(compute_dtype)          # (Din, H)
    w2_t = jnp.asarray(w2).T.astype(compute_dtype)          # (H, Dout)
    b1_r = jnp.asarray(b1).reshape(1, -1).astype(jnp.float32)
    b2_r = jnp.asarray(b2).reshape(1, -1).astype(jnp.float32)
    return w1_t, b1_r, w2_t, b2_r


def _round_up(n, d):
    return ((n + d - 1) // d) * d


def _choose_h_tile(hidden, din, dout, h_block=None):
    """Pick the hidden-dim chunk size (multiple of 128 dividing `hidden`)."""
    if h_block is None:
        # Keep weights fully resident unless they would eat too much VMEM
        # (budget sized for v7x's 64 MiB per-TC VMEM, single-buffered bf16).
        if (din + dout) * hidden * 2 <= (24 << 20):
            return hidden
        h_block = 2048
    if h_block >= hidden:
        return hidden
    th = (h_block // 128) * 128
    while th >= 128:
        if hidden % th == 0:
            return th
        th -= 128
    return hidden


def _vmem_limit_bytes(tm, din, th, dout, n_h):
    """Right-sized VMEM budget: actual footprint + headroom, below 64 MiB."""
    wdt = 2                                  # bf16 weights / activations
    wbuf = 1 if n_h == 1 else 2              # single-buffered when invariant
    b = 0
    b += wbuf * din * th * wdt               # W1 tile(s)
    b += wbuf * th * dout * wdt              # W2 tile(s)
    b += 2 * (th + dout) * 4                 # biases
    b += 2 * tm * din * wdt                  # x tiles (double-buffered)
    b += 2 * tm * dout * 4                   # out tiles
    b += tm * dout * 4                       # f32 accumulator scratch
    b += 2 * tm * th * 4                     # fc1 / GELU f32 intermediates
    b = int(b * 1.5) + (4 << 20)             # Mosaic internal scratch headroom
    return max(32 << 20, min(b, 56 << 20))   # stay below v7x's 64 MiB/TC


def _build_mlp_call(m_pad, din, hidden, dout, tm, th, out_dtype,
                    single_buffer):
    n_m = m_pad // tm
    n_h = hidden // th
    weights_invariant = (n_h == 1)

    def spec(shape, index_map, invariant):
        if invariant and single_buffer:
            # Constant index_map -> one buffer is enough, halves weight VMEM.
            return pl.BlockSpec(shape, index_map, pipeline_mode=pl.Buffered(1))
        return pl.BlockSpec(shape, index_map)

    return pl.pallas_call(
        _mlp_kernel,
        out_shape=jax.ShapeDtypeStruct((m_pad, dout), out_dtype),
        grid_spec=pltpu.PrefetchScalarGridSpec(
            num_scalar_prefetch=0,
            grid=(n_m, n_h),
            in_specs=[
                pl.BlockSpec((tm, din), lambda i, k: (i, 0)),              # x
                spec((din, th), lambda i, k: (0, k), weights_invariant),   # W1
                spec((1, th), lambda i, k: (0, k), weights_invariant),     # b1
                spec((th, dout), lambda i, k: (k, 0), weights_invariant),  # W2
                spec((1, dout), lambda i, k: (0, 0), True),                # b2
            ],
            out_specs=pl.BlockSpec((tm, dout), lambda i, k: (i, 0)),
            scratch_shapes=[pltpu.VMEM((tm, dout), jnp.float32)],
        ),
        compiler_params=pltpu.CompilerParams(
            dimension_semantics=("parallel", "arbitrary"),
            vmem_limit_bytes=_vmem_limit_bytes(tm, din, th, dout, n_h),
        ),
    )


def mlp_forward(x, w1_t, b1_r, w2_t, b2_r, *, block_m=256, h_block=None,
                compute_dtype=jnp.bfloat16):
    """Fused Mlp forward.

    x    : (..., Din)
    w1_t : (Din, H)   bf16   (from prepare_mlp_params)
    b1_r : (1, H)     f32
    w2_t : (H, Dout)  bf16
    b2_r : (1, Dout)  f32
    returns (..., Dout) in x.dtype.
    """
    *lead, din = x.shape
    hidden = w1_t.shape[1]
    dout = w2_t.shape[1]
    m = 1
    for d in lead:
        m *= d

    x2 = x.reshape(m, din).astype(compute_dtype)

    # Large row tile (amortizes ~0.35us per-step overhead); pad M instead of
    # falling back to a whole-array block.
    tm = min(block_m, _round_up(m, 8))
    m_pad = _round_up(m, tm)
    if m_pad != m:
        x2 = jnp.pad(x2, ((0, m_pad - m), (0, 0)))

    th = _choose_h_tile(hidden, din, dout, h_block)

    build = functools.partial(_build_mlp_call, m_pad, din, hidden, dout, tm,
                              th, x.dtype)
    try:
        out2 = build(single_buffer=True)(x2, w1_t, b1_r, w2_t, b2_r)
    except Exception:
        # Fallback if pipeline_mode=pl.Buffered(1) is not supported: default
        # double-buffered specs (correct, slightly more VMEM).
        out2 = build(single_buffer=False)(x2, w1_t, b1_r, w2_t, b2_r)

    if m_pad != m:
        out2 = out2[:m]
    return out2.reshape(*lead, dout)


def _reference(x, w1, b1, w2, b2):
    """Pure-JAX f32 reference of the PyTorch Mlp forward (drop=0.0)."""
    h = x @ w1.T + b1
    a = 0.5 * h * (1.0 + jnp.tanh(_SQRT_2_OVER_PI * (h + 0.044715 * h ** 3)))
    return a @ w2.T + b2


if __name__ == "__main__":
    # ViT-style token stack: batch=2, seq=128 tokens, dim=128, hidden=256.
    B, S, DIN, HID = 2, 128, 128, 256
    DOUT = DIN  # out_features defaults to in_features in the module

    key = jax.random.PRNGKey(0)
    kx, k1, kb1, k2, kb2 = jax.random.split(key, 5)
    x = jax.random.normal(kx, (B, S, DIN), dtype=jnp.float32)

    # Deterministic nn.Linear-style init (uniform with 1/sqrt(fan_in) bound).
    bound1 = 1.0 / DIN ** 0.5
    w1 = jax.random.uniform(k1, (HID, DIN), jnp.float32, -bound1, bound1)
    b1 = jax.random.uniform(kb1, (HID,), jnp.float32, -bound1, bound1)
    bound2 = 1.0 / HID ** 0.5
    w2 = jax.random.uniform(k2, (DOUT, HID), jnp.float32, -bound2, bound2)
    b2 = jax.random.uniform(kb2, (DOUT,), jnp.float32, -bound2, bound2)

    # One-time weight prep (transpose + bf16 cast hoisted out of the hot path).
    params = prepare_mlp_params(w1, b1, w2, b2)
    ref = _reference(x, w1, b1, w2, b2)

    # 1) Resident-weight path: one row step, one hidden chunk.
    out = jax.block_until_ready(mlp_forward(x, *params))
    assert out.shape == (B, S, DOUT)
    err = jnp.max(jnp.abs(out - ref))
    assert jnp.allclose(out, ref, atol=2.5e-2, rtol=2.5e-2), f"max err {err}"

    # 2) Hidden-tiled reduction path (exercises the f32 accumulator / k-axis).
    out_t = jax.block_until_ready(mlp_forward(x, *params, h_block=128))
    err_t = jnp.max(jnp.abs(out_t - ref))
    assert jnp.allclose(out_t, ref, atol=2.5e-2, rtol=2.5e-2), f"max err {err_t}"

    print("KERNEL_OK")
</pallas_src>

<mosaic_0001>
module attributes {stable_mosaic.version = 11 : i64} {
  func.func @_mlp_kernel(%arg0: i32, %arg1: i32, %arg2: memref<256x128xbf16, #tpu.memory_space<vmem>>, %arg3: memref<128x256xbf16, #tpu.memory_space<vmem>>, %arg4: memref<1x256xf32, #tpu.memory_space<vmem>>, %arg5: memref<256x128xbf16, #tpu.memory_space<vmem>>, %arg6: memref<1x128xf32, #tpu.memory_space<vmem>>, %arg7: memref<256x128xf32, #tpu.memory_space<vmem>>, %arg8: memref<256x128xf32, #tpu.memory_space<vmem>>) attributes {dimension_semantics = [#tpu.dimension_semantics<parallel>, #tpu.dimension_semantics<arbitrary>], iteration_bounds = array<i64: 1, 1>, scalar_prefetch = 0 : i64, scratch_operands = 1 : i64, tpu.core_type = #tpu.core_type<tc>, window_params = [{transform_indices = @transform_0, window_bounds = array<i64: 256, 128>}, {pipeline_mode = #tpu.pipeline_mode<synchronous>, transform_indices = @transform_1, window_bounds = array<i64: 128, 256>}, {pipeline_mode = #tpu.pipeline_mode<synchronous>, transform_indices = @transform_2, window_bounds = array<i64: 1, 256>}, {pipeline_mode = #tpu.pipeline_mode<synchronous>, transform_indices = @transform_3, window_bounds = array<i64: 256, 128>}, {pipeline_mode = #tpu.pipeline_mode<synchronous>, transform_indices = @transform_4, window_bounds = array<i64: 1, 128>}, {transform_indices = @transform_5, window_bounds = array<i64: 256, 128>}]} {
    %c0_i32 = arith.constant 0 : i32
    %0 = arith.cmpi eq, %arg1, %c0_i32 : i32
    %1 = arith.extui %0 : i1 to i32
    %c0_i32_0 = arith.constant 0 : i32
    %2 = arith.cmpi ne, %1, %c0_i32_0 : i32
    scf.if %2 {
      %cst_20 = arith.constant 0.000000e+00 : f32
      %32 = vector.broadcast %cst_20 : f32 to vector<256x128xf32>
      %c0_21 = arith.constant 0 : index
      %c0_22 = arith.constant 0 : index
      %33 = vector.load %arg8[%c0_21, %c0_22] : memref<256x128xf32, #tpu.memory_space<vmem>>, vector<256x128xf32>
      tpu.vector_store %arg8[%c0_21, %c0_22], %32 {strides = array<i32>} : memref<256x128xf32, #tpu.memory_space<vmem>>, vector<256x128xf32>,
    } else {
    }
    %c0 = arith.constant 0 : index
    %c0_1 = arith.constant 0 : index
    %3 = vector.load %arg2[%c0, %c0_1] : memref<256x128xbf16, #tpu.memory_space<vmem>>, vector<256x128xbf16>
    %c0_2 = arith.constant 0 : index
    %c0_3 = arith.constant 0 : index
    %4 = vector.load %arg3[%c0_2, %c0_3] : memref<128x256xbf16, #tpu.memory_space<vmem>>, vector<128x256xbf16>
    %cst = arith.constant dense<0.000000e+00> : vector<256x256xf32>
    %5 = tpu.matmul %3, %4, %cst {dimension_numbers = #tpu.dot_dimension_numbers<[1], [0], [0], [1], [0, 0, 1, 1], [], []>} : vector<256x128xbf16>, vector<128x256xbf16>, vector<256x256xf32> -> vector<256x256xf32>
    %c0_4 = arith.constant 0 : index
    %c0_5 = arith.constant 0 : index
    %6 = vector.load %arg4[%c0_4, %c0_5] : memref<1x256xf32, #tpu.memory_space<vmem>>, vector<1x256xf32>
    %7 = vector.broadcast %6 : vector<1x256xf32> to vector<256x256xf32>
    %8 = arith.addf %5, %7 : vector<256x256xf32>
    %cst_6 = arith.constant 4.471500e-02 : f32
    %9 = vector.broadcast %cst_6 : f32 to vector<256x256xf32>
    %10 = arith.mulf %9, %8 : vector<256x256xf32>
    %11 = arith.mulf %10, %8 : vector<256x256xf32>
    %cst_7 = arith.constant 1.000000e+00 : f32
    %12 = vector.broadcast %cst_7 : f32 to vector<256x256xf32>
    %13 = arith.addf %12, %11 : vector<256x256xf32>
    %14 = arith.mulf %8, %13 : vector<256x256xf32>
    %cst_8 = arith.constant 5.000000e-01 : f32
    %15 = vector.broadcast %cst_8 : f32 to vector<256x256xf32>
    %16 = arith.mulf %15, %8 : vector<256x256xf32>
    %cst_9 = arith.constant 0.797884583 : f32
    %17 = vector.broadcast %cst_9 : f32 to vector<256x256xf32>
    %18 = arith.mulf %17, %14 : vector<256x256xf32>
    %19 = math.tanh %18 : vector<256x256xf32>
    %cst_10 = arith.constant 1.000000e+00 : f32
    %20 = vector.broadcast %cst_10 : f32 to vector<256x256xf32>
    %21 = arith.addf %20, %19 : vector<256x256xf32>
    %22 = arith.mulf %16, %21 : vector<256x256xf32>
    %c0_11 = arith.constant 0 : index
    %c0_12 = arith.constant 0 : index
    %23 = vector.load %arg8[%c0_11, %c0_12] : memref<256x128xf32, #tpu.memory_space<vmem>>, vector<256x128xf32>
    %24 = arith.truncf %22 : vector<256x256xf32> to vector<256x256xbf16>
    %c0_13 = arith.constant 0 : index
    %c0_14 = arith.constant 0 : index
    %25 = vector.load %arg5[%c0_13, %c0_14] : memref<256x128xbf16, #tpu.memory_space<vmem>>, vector<256x128xbf16>
    %cst_15 = arith.constant dense<0.000000e+00> : vector<256x128xf32>
    %26 = tpu.matmul %24, %25, %cst_15 {dimension_numbers = #tpu.dot_dimension_numbers<[1], [0], [0], [1], [0, 0, 1, 1], [], []>} : vector<256x256xbf16>, vector<256x128xbf16>, vector<256x128xf32> -> vector<256x128xf32>
    %27 = arith.addf %23, %26 : vector<256x128xf32>
    %c0_16 = arith.constant 0 : index
    %c0_17 = arith.constant 0 : index
    %28 = vector.load %arg8[%c0_16, %c0_17] : memref<256x128xf32, #tpu.memory_space<vmem>>, vector<256x128xf32>
    tpu.vector_store %arg8[%c0_16, %c0_17], %27 {strides = array<i32>} : memref<256x128xf32, #tpu.memory_space<vmem>>, vector<256x128xf32>,
    %c0_i32_18 = arith.constant 0 : i32
    %29 = arith.cmpi eq, %arg1, %c0_i32_18 : i32
    %30 = arith.extui %29 : i1 to i32
    %c0_i32_19 = arith.constant 0 : i32
    %31 = arith.cmpi ne, %30, %c0_i32_19 : i32
    scf.if %31 {
      %c0_20 = arith.constant 0 : index
      %c0_21 = arith.constant 0 : index
      %32 = vector.load %arg8[%c0_20, %c0_21] : memref<256x128xf32, #tpu.memory_space<vmem>>, vector<256x128xf32>
      %c0_22 = arith.constant 0 : index
      %c0_23 = arith.constant 0 : index
      %33 = vector.load %arg6[%c0_22, %c0_23] : memref<1x128xf32, #tpu.memory_space<vmem>>, vector<1x128xf32>
      %34 = vector.broadcast %33 : vector<1x128xf32> to vector<256x128xf32>
      %35 = arith.addf %32, %34 : vector<256x128xf32>
      %c0_24 = arith.constant 0 : index
      %c0_25 = arith.constant 0 : index
      %36 = vector.load %arg7[%c0_24, %c0_25] : memref<256x128xf32, #tpu.memory_space<vmem>>, vector<256x128xf32>
      tpu.vector_store %arg7[%c0_24, %c0_25], %35 {strides = array<i32>} : memref<256x128xf32, #tpu.memory_space<vmem>>, vector<256x128xf32>,
    } else {
    }
    return
  }
  func.func @transform_0(%arg0: i32, %arg1: i32) -> (i32, i32) {
    %c0_i32 = arith.constant 0 : i32
    %c0_i32_0 = arith.constant 0 : i32
    return %arg0, %c0_i32 : i32, i32
  }
  func.func @transform_1(%arg0: i32, %arg1: i32) -> (i32, i32) {
    %c0_i32 = arith.constant 0 : i32
    %c0_i32_0 = arith.constant 0 : i32
    return %c0_i32, %arg1 : i32, i32
  }
  func.func @transform_2(%arg0: i32, %arg1: i32) -> (i32, i32) {
    %c0_i32 = arith.constant 0 : i32
    %c0_i32_0 = arith.constant 0 : i32
    return %c0_i32, %arg1 : i32, i32
  }
  func.func @transform_3(%arg0: i32, %arg1: i32) -> (i32, i32) {
    %c0_i32 = arith.constant 0 : i32
    %c0_i32_0 = arith.constant 0 : i32
    return %arg1, %c0_i32 : i32, i32
  }
  func.func @transform_4(%arg0: i32, %arg1: i32) -> (i32, i32) {
    %c0_i32 = arith.constant 0 : i32
    %c0_i32_0 = arith.constant 0 : i32
    %c0_i32_1 = arith.constant 0 : i32
    return %c0_i32, %c0_i32_0 : i32, i32
  }
  func.func @transform_5(%arg0: i32, %arg1: i32) -> (i32, i32) {
    %c0_i32 = arith.constant 0 : i32
    %c0_i32_0 = arith.constant 0 : i32
    return %arg0, %c0_i32 : i32, i32
  }
}

module attributes {stable_mosaic.version = 11 : i64} {
  func.func @_mlp_kernel(%arg0: i32, %arg1: i32, %arg2: memref<256x128xbf16, #tpu.memory_space<vmem>>, %arg3: memref<128x256xbf16, #tpu.memory_space<vmem>>, %arg4: memref<1x256xf32, #tpu.memory_space<vmem>>, %arg5: memref<256x128xbf16, #tpu.memory_space<vmem>>, %arg6: memref<1x128xf32, #tpu.memory_space<vmem>>, %arg7: memref<256x128xf32, #tpu.memory_space<vmem>>, %arg8: memref<256x128xf32, #tpu.memory_space<vmem>>) attributes {dimension_semantics = [#tpu.dimension_semantics<parallel>, #tpu.dimension_semantics<arbitrary>], iteration_bounds = array<i64: 1, 1>, scalar_prefetch = 0 : i64, scratch_operands = 1 : i64, tpu.core_type = #tpu.core_type<tc>, window_params = [{transform_indices = @transform_0, window_bounds = array<i64: 256, 128>}, {transform_indices = @transform_1, window_bounds = array<i64: 128, 256>}, {transform_indices = @transform_2, window_bounds = array<i64: 1, 256>}, {transform_indices = @transform_3, window_bounds = array<i64: 256, 128>}, {pipeline_mode = #tpu.pipeline_mode<synchronous>, transform_indices = @transform_4, window_bounds = array<i64: 1, 128>}, {transform_indices = @transform_5, window_bounds = array<i64: 256, 128>}]} {
    %c0_i32 = arith.constant 0 : i32
    %0 = arith.cmpi eq, %arg1, %c0_i32 : i32
    %1 = arith.extui %0 : i1 to i32
    %c0_i32_0 = arith.constant 0 : i32
    %2 = arith.cmpi ne, %1, %c0_i32_0 : i32
    scf.if %2 {
      %cst_20 = arith.constant 0.000000e+00 : f32
      %32 = vector.broadcast %cst_20 : f32 to vector<256x128xf32>
      %c0_21 = arith.constant 0 : index
      %c0_22 = arith.constant 0 : index
      %33 = vector.load %arg8[%c0_21, %c0_22] : memref<256x128xf32, #tpu.memory_space<vmem>>, vector<256x128xf32>
      tpu.vector_store %arg8[%c0_21, %c0_22], %32 {strides = array<i32>} : memref<256x128xf32, #tpu.memory_space<vmem>>, vector<256x128xf32>,
    } else {
    }
    %c0 = arith.constant 0 : index
    %c0_1 = arith.constant 0 : index
    %3 = vector.load %arg2[%c0, %c0_1] : memref<256x128xbf16, #tpu.memory_space<vmem>>, vector<256x128xbf16>
    %c0_2 = arith.constant 0 : index
    %c0_3 = arith.constant 0 : index
    %4 = vector.load %arg3[%c0_2, %c0_3] : memref<128x256xbf16, #tpu.memory_space<vmem>>, vector<128x256xbf16>
    %cst = arith.constant dense<0.000000e+00> : vector<256x256xf32>
    %5 = tpu.matmul %3, %4, %cst {dimension_numbers = #tpu.dot_dimension_numbers<[1], [0], [0], [1], [0, 0, 1, 1], [], []>} : vector<256x128xbf16>, vector<128x256xbf16>, vector<256x256xf32> -> vector<256x256xf32>
    %c0_4 = arith.constant 0 : index
    %c0_5 = arith.constant 0 : index
    %6 = vector.load %arg4[%c0_4, %c0_5] : memref<1x256xf32, #tpu.memory_space<vmem>>, vector<1x256xf32>
    %7 = vector.broadcast %6 : vector<1x256xf32> to vector<256x256xf32>
    %8 = arith.addf %5, %7 : vector<256x256xf32>
    %cst_6 = arith.constant 4.471500e-02 : f32
    %9 = vector.broadcast %cst_6 : f32 to vector<256x256xf32>
    %10 = arith.mulf %9, %8 : vector<256x256xf32>
    %11 = arith.mulf %10, %8 : vector<256x256xf32>
    %cst_7 = arith.constant 1.000000e+00 : f32
    %12 = vector.broadcast %cst_7 : f32 to vector<256x256xf32>
    %13 = arith.addf %12, %11 : vector<256x256xf32>
    %14 = arith.mulf %8, %13 : vector<256x256xf32>
    %cst_8 = arith.constant 5.000000e-01 : f32
    %15 = vector.broadcast %cst_8 : f32 to vector<256x256xf32>
    %16 = arith.mulf %15, %8 : vector<256x256xf32>
    %cst_9 = arith.constant 0.797884583 : f32
    %17 = vector.broadcast %cst_9 : f32 to vector<256x256xf32>
    %18 = arith.mulf %17, %14 : vector<256x256xf32>
    %19 = math.tanh %18 : vector<256x256xf32>
    %cst_10 = arith.constant 1.000000e+00 : f32
    %20 = vector.broadcast %cst_10 : f32 to vector<256x256xf32>
    %21 = arith.addf %20, %19 : vector<256x256xf32>
    %22 = arith.mulf %16, %21 : vector<256x256xf32>
    %c0_11 = arith.constant 0 : index
    %c0_12 = arith.constant 0 : index
    %23 = vector.load %arg8[%c0_11, %c0_12] : memref<256x128xf32, #tpu.memory_space<vmem>>, vector<256x128xf32>
    %24 = arith.truncf %22 : vector<256x256xf32> to vector<256x256xbf16>
    %c0_13 = arith.constant 0 : index
    %c0_14 = arith.constant 0 : index
    %25 = vector.load %arg5[%c0_13, %c0_14] : memref<256x128xbf16, #tpu.memory_space<vmem>>, vector<256x128xbf16>
    %cst_15 = arith.constant dense<0.000000e+00> : vector<256x128xf32>
    %26 = tpu.matmul %24, %25, %cst_15 {dimension_numbers = #tpu.dot_dimension_numbers<[1], [0], [0], [1], [0, 0, 1, 1], [], []>} : vector<256x256xbf16>, vector<256x128xbf16>, vector<256x128xf32> -> vector<256x128xf32>
    %27 = arith.addf %23, %26 : vector<256x128xf32>
    %c0_16 = arith.constant 0 : index
    %c0_17 = arith.constant 0 : index
    %28 = vector.load %arg8[%c0_16, %c0_17] : memref<256x128xf32, #tpu.memory_space<vmem>>, vector<256x128xf32>
    tpu.vector_store %arg8[%c0_16, %c0_17], %27 {strides = array<i32>} : memref<256x128xf32, #tpu.memory_space<vmem>>, vector<256x128xf32>,
    %c0_i32_18 = arith.constant 0 : i32
    %29 = arith.cmpi eq, %arg1, %c0_i32_18 : i32
    %30 = arith.extui %29 : i1 to i32
    %c0_i32_19 = arith.constant 0 : i32
    %31 = arith.cmpi ne, %30, %c0_i32_19 : i32
    scf.if %31 {
      %c0_20 = arith.constant 0 : index
      %c0_21 = arith.constant 0 : index
      %32 = vector.load %arg8[%c0_20, %c0_21] : memref<256x128xf32, #tpu.memory_space<vmem>>, vector<256x128xf32>
      %c0_22 = arith.constant 0 : index
      %c0_23 = arith.constant 0 : index
      %33 = vector.load %arg6[%c0_22, %c0_23] : memref<1x128xf32, #tpu.memory_space<vmem>>, vector<1x128xf32>
      %34 = vector.broadcast %33 : vector<1x128xf32> to vector<256x128xf32>
      %35 = arith.addf %32, %34 : vector<256x128xf32>
      %c0_24 = arith.constant 0 : index
      %c0_25 = arith.constant 0 : index
      %36 = vector.load %arg7[%c0_24, %c0_25] : memref<256x128xf32, #tpu.memory_space<vmem>>, vector<256x128xf32>
      tpu.vector_store %arg7[%c0_24, %c0_25], %35 {strides = array<i32>} : memref<256x128xf32, #tpu.memory_space<vmem>>, vector<256x128xf32>,
    } else {
    }
    return
  }
  func.func @transform_0(%arg0: i32, %arg1: i32) -> (i32, i32) {
    %c0_i32 = arith.constant 0 : i32
    %c0_i32_0 = arith.constant 0 : i32
    return %arg0, %c0_i32 : i32, i32
  }
  func.func @transform_1(%arg0: i32, %arg1: i32) -> (i32, i32) {
    %c0_i32 = arith.constant 0 : i32
    %c0_i32_0 = arith.constant 0 : i32
    return %c0_i32, %arg1 : i32, i32
  }
  func.func @transform_2(%arg0: i32, %arg1: i32) -> (i32, i32) {
    %c0_i32 = arith.constant 0 : i32
    %c0_i32_0 = arith.constant 0 : i32
    return %c0_i32, %arg1 : i32, i32
  }
  func.func @transform_3(%arg0: i32, %arg1: i32) -> (i32, i32) {
    %c0_i32 = arith.constant 0 : i32
    %c0_i32_0 = arith.constant 0 : i32
    return %arg1, %c0_i32 : i32, i32
  }
  func.func @transform_4(%arg0: i32, %arg1: i32) -> (i32, i32) {
    %c0_i32 = arith.constant 0 : i32
    %c0_i32_0 = arith.constant 0 : i32
    %c0_i32_1 = arith.constant 0 : i32
    return %c0_i32, %c0_i32_0 : i32, i32
  }
  func.func @transform_5(%arg0: i32, %arg1: i32) -> (i32, i32) {
    %c0_i32 = arith.constant 0 : i32
    %c0_i32_0 = arith.constant 0 : i32
    return %arg0, %c0_i32 : i32, i32
  }
}

</mosaic_0001>

<llo_original>
// kernel: tpu_custom_call.1
$region0: #{tpu_custom_call.1}
  #allocation0 [shape = 'u32[]', space=smem, size = 0x4, offset = 0x4, fixed_abs, tag = 'smem constant byte address 0x4 - core index']
  #allocation1 [shape = 'u32[144,128]{1,0:T(1,128)}', space=vmem, size = 0x12000, scoped, tag = 'internal scratch']
  #allocation2 [shape = 'f32[256,128]{1,0:T(8,128)}', space=vmem, size = 0x20000, scoped, tag = 'scratch operand']
  %s0 = inlined_call_operand.hbm [shape: bf16[256,128], index: 0, kind: input, shape index: {}]
  %s1 = inlined_call_operand.hbm [shape: bf16[128,256], index: 1, kind: input, shape index: {}]
  %s2 = inlined_call_operand.vmem [shape: f32[1,256], index: 2, kind: input, shape index: {}]
  %s3 = inlined_call_operand.hbm [shape: bf16[256,128], index: 3, kind: input, shape index: {}]
  %s4 = inlined_call_operand.vmem [shape: f32[1,128], index: 4, kind: input, shape index: {}]
  %s5 = inlined_call_operand.hbm [shape: f32[256,128], index: 5, kind: output, shape index: {}]
  %s6 = sld [smem:[#allocation0]]
  $region50: #{tpu_custom_call.1} parent=0
    _
  %s8 = ssub.s32 1, %s6
  %s9 = scalar_select 0, %s8, %s6
  $region1: #{tpu_custom_call.1} parent=0
    #allocation3 [shape = 'u8[65536]{0}', space=vmem, size = 0x10000, scoped, tag = 'input window, operand 0, single buffered']
    #allocation4 [shape = 's32[1]{0}', space=sflag, size = 0x4, scoped, tag = 'scoped memory for tpu_custom_call.1']
    #allocation5 [shape = 's32[1]{0}', space=sflag, size = 0x4, scoped, tag = 'scoped memory for tpu_custom_call.1']
    #allocation6 [shape = 'u8[65536]{0}', space=vmem, size = 0x10000, scoped, tag = 'input window, operand 1, single buffered']
    #allocation7 [shape = 's32[1]{0}', space=sflag, size = 0x4, scoped, tag = 'scoped memory for tpu_custom_call.1']
    #allocation8 [shape = 'u8[65536]{0}', space=vmem, size = 0x10000, scoped, tag = 'input window, operand 3, single buffered']
    #allocation9 [shape = 'u8[131072]{0}', space=vmem, size = 0x20000, scoped, tag = 'output window, operand 0, single buffered']
    %10 = vsyncpa [#allocation4], 0
    %11 = vsyncpa [#allocation7], 0
    %12 = vsyncpa [#allocation5], 0
    // Predicated region
    $region2: #{tpu_custom_call.1} parent=1 // pred_check
      _
    $region3: #{tpu_custom_call.1} parent=1 // pred_check_branch
      %14 = sbr.rel (0) target = $region5
    $region4: #{tpu_custom_call.1} parent=1 // pred_region
      %s16 = ssub.s32 2048, 2048
      %17 = vsyncadd [#allocation4], %s16
      %s18 = sshll.u32 [#allocation3], 4
      %s19 = int_to_ptr.vmem [resolvable:$true] %s18
      %24 = dma.hbm_to_vmem [thread:$0]  %s0, 2048, %s19, [#allocation4], 64, 64, 4
    $region5: #{tpu_custom_call.1} parent=1 // pred_fallthru
      _
    // Predicated region
    $region6: #{tpu_custom_call.1} parent=1 // pred_check
      _
    $region7: #{tpu_custom_call.1} parent=1 // pred_check_branch
      %26 = sbr.rel (0) target = $region9
    $region8: #{tpu_custom_call.1} parent=1 // pred_region
      %s28 = ssub.s32 2048, 2048
      %29 = vsyncadd [#allocation7], %s28
      %s30 = sshll.u32 [#allocation6], 4
      %s31 = int_to_ptr.vmem [resolvable:$true] %s30
      %36 = dma.hbm_to_vmem [thread:$0]  %s1, 2048, %s31, [#allocation7], 128, 128, 8
    $region9: #{tpu_custom_call.1} parent=1 // pred_fallthru
      _
    // Predicated region
    $region10: #{tpu_custom_call.1} parent=1 // pred_check
      _
    $region11: #{tpu_custom_call.1} parent=1 // pred_check_branch
      %38 = sbr.rel (0) target = $region13
    $region12: #{tpu_custom_call.1} parent=1 // pred_region
      _
    $region13: #{tpu_custom_call.1} parent=1 // pred_fallthru
      _
    // Predicated region
    $region14: #{tpu_custom_call.1} parent=1 // pred_check
      _
    $region15: #{tpu_custom_call.1} parent=1 // pred_check_branch
      %40 = sbr.rel (0) target = $region17
    $region16: #{tpu_custom_call.1} parent=1 // pred_region
      %s42 = ssub.s32 2048, 2048
      %43 = vsyncadd [#allocation7], %s42
      %s44 = sshll.u32 [#allocation8], 4
      %s45 = int_to_ptr.vmem [resolvable:$true] %s44
      %50 = dma.hbm_to_vmem [thread:$0]  %s3, 2048, %s45, [#allocation7], 64, 64, 4
    $region17: #{tpu_custom_call.1} parent=1 // pred_fallthru
      _
    // Predicated region
    $region18: #{tpu_custom_call.1} parent=1 // pred_check
      _
    $region19: #{tpu_custom_call.1} parent=1 // pred_check_branch
      %52 = sbr.rel (0) target = $region21
    $region20: #{tpu_custom_call.1} parent=1 // pred_region
      _
    $region21: #{tpu_custom_call.1} parent=1 // pred_fallthru
      _
    // Predicated region
    $region22: #{tpu_custom_call.1} parent=1 // pred_check
      _
    $region23: #{tpu_custom_call.1} parent=1 // pred_check_branch
      %54 = sbr.rel (0) target = $region25
    $region24: #{tpu_custom_call.1} parent=1 // pred_region
      %55 = dma.done [#allocation4], 2048
    $region25: #{tpu_custom_call.1} parent=1 // pred_fallthru
      _
    // Predicated region
    $region26: #{tpu_custom_call.1} parent=1 // pred_check
      _
    $region27: #{tpu_custom_call.1} parent=1 // pred_check_branch
      %57 = sbr.rel (0) target = $region29
    $region28: #{tpu_custom_call.1} parent=1 // pred_region
      %58 = dma.done [#allocation7], 2048
    $region29: #{tpu_custom_call.1} parent=1 // pred_fallthru
      _
    // Predicated region
    $region30: #{tpu_custom_call.1} parent=1 // pred_check
      _
    $region31: #{tpu_custom_call.1} parent=1 // pred_check_branch
      %60 = sbr.rel (0) target = $region33
    $region32: #{tpu_custom_call.1} parent=1 // pred_region
      %61 = dma.done [#allocation7], 2048
    $region33: #{tpu_custom_call.1} parent=1 // pred_fallthru
      _
    %p63 = scmp.eq.s32.totalorder 0, 0
    // Predicated region
    $region34: #{tpu_custom_call.1} parent=1 // pred_check
      %p64 = pneg %p63
    $region35: #{tpu_custom_call.1} parent=1 // pred_check_branch
      %66 = sbr.rel (%p64) target = $region37
    $region36: #{tpu_custom_call.1} parent=1 // pred_region
      %67 = vst [vmem:[#allocation2] sm:$0xff] 0.0
      %68 = vst [vmem:[#allocation2 + $0x8] sm:$0xff] 0.0
      %69 = vst [vmem:[#allocation2 + $0x10] sm:$0xff] 0.0
      %70 = vst [vmem:[#allocation2 + $0x18] sm:$0xff] 0.0
      %71 = vst [vmem:[#allocation2 + $0x20] sm:$0xff] 0.0
      %72 = vst [vmem:[#allocation2 + $0x28] sm:$0xff] 0.0
      %73 = vst [vmem:[#allocation2 + $0x30] sm:$0xff] 0.0
      %74 = vst [vmem:[#allocation2 + $0x38] sm:$0xff] 0.0
      %75 = vst [vmem:[#allocation2 + $0x40] sm:$0xff] 0.0
      %76 = vst [vmem:[#allocation2 + $0x48] sm:$0xff] 0.0
      %77 = vst [vmem:[#allocation2 + $0x50] sm:$0xff] 0.0
      %78 = vst [vmem:[#allocation2 + $0x58] sm:$0xff] 0.0
      %79 = vst [vmem:[#allocation2 + $0x60] sm:$0xff] 0.0
      %80 = vst [vmem:[#allocation2 + $0x68] sm:$0xff] 0.0
      %81 = vst [vmem:[#allocation2 + $0x70] sm:$0xff] 0.0
      %82 = vst [vmem:[#allocation2 + $0x78] sm:$0xff] 0.0
      %83 = vst [vmem:[#allocation2 + $0x80] sm:$0xff] 0.0
      %84 = vst [vmem:[#allocation2 + $0x88] sm:$0xff] 0.0
      %85 = vst [vmem:[#allocation2 + $0x90] sm:$0xff] 0.0
      %86 = vst [vmem:[#allocation2 + $0x98] sm:$0xff] 0.0
      %87 = vst [vmem:[#allocation2 + $0xa0] sm:$0xff] 0.0
      %88 = vst [vmem:[#allocation2 + $0xa8] sm:$0xff] 0.0
      %89 = vst [vmem:[#allocation2 + $0xb0] sm:$0xff] 0.0
      %90 = vst [vmem:[#allocation2 + $0xb8] sm:$0xff] 0.0
      %91 = vst [vmem:[#allocation2 + $0xc0] sm:$0xff] 0.0
      %92 = vst [vmem:[#allocation2 + $0xc8] sm:$0xff] 0.0
      %93 = vst [vmem:[#allocation2 + $0xd0] sm:$0xff] 0.0
      %94 = vst [vmem:[#allocation2 + $0xd8] sm:$0xff] 0.0
      %95 = vst [vmem:[#allocation2 + $0xe0] sm:$0xff] 0.0
      %96 = vst [vmem:[#allocation2 + $0xe8] sm:$0xff] 0.0
      %97 = vst [vmem:[#allocation2 + $0xf0] sm:$0xff] 0.0
      %98 = vst [vmem:[#allocation2 + $0xf8] sm:$0xff] 0.0
    $region37: #{tpu_custom_call.1} parent=1 // pred_fallthru
      _
    %v99 = vld [vmem:[#allocation3] sm:$0xf]
    %v100 = vld [vmem:[#allocation3 + $0x4] sm:$0xf]
    %v101 = vld [vmem:[#allocation3 + $0x8] sm:$0xf]
    %v102 = vld [vmem:[#allocation3 + $0xc] sm:$0xf]
    %v103 = vld [vmem:[#allocation3 + $0x10] sm:$0xf]
    %v104 = vld [vmem:[#allocation3 + $0x14] sm:$0xf]
    %v105 = vld [vmem:[#allocation3 + $0x18] sm:$0xf]
    %v106 = vld [vmem:[#allocation3 + $0x1c] sm:$0xf]
    %v107 = vld [vmem:[#allocation3 + $0x20] sm:$0xf]
    %v108 = vld [vmem:[#allocation3 + $0x24] sm:$0xf]
    %v109 = vld [vmem:[#allocation3 + $0x28] sm:$0xf]
    %v110 = vld [vmem:[#allocation3 + $0x2c] sm:$0xf]
    %v111 = vld [vmem:[#allocation3 + $0x30] sm:$0xf]
    %v112 = vld [vmem:[#allocation3 + $0x34] sm:$0xf]
    %v113 = vld [vmem:[#allocation3 + $0x38] sm:$0xf]
    %v114 = vld [vmem:[#allocation3 + $0x3c] sm:$0xf]
    %v115 = vld [vmem:[#allocation3 + $0x40] sm:$0xf]
    %v116 = vld [vmem:[#allocation3 + $0x44] sm:$0xf]
    %v117 = vld [vmem:[#allocation3 + $0x48] sm:$0xf]
    %v118 = vld [vmem:[#allocation3 + $0x4c] sm:$0xf]
    %v119 = vld [vmem:[#allocation3 + $0x50] sm:$0xf]
    %v120 = vld [vmem:[#allocation3 + $0x54] sm:$0xf]
    %v121 = vld [vmem:[#allocation3 + $0x58] sm:$0xf]
    %v122 = vld [vmem:[#allocation3 + $0x5c] sm:$0xf]
    %v123 = vld [vmem:[#allocation3 + $0x60] sm:$0xf]
    %v124 = vld [vmem:[#allocation3 + $0x64] sm:$0xf]
    %v125 = vld [vmem:[#allocation3 + $0x68] sm:$0xf]
    %v126 = vld [vmem:[#allocation3 + $0x6c] sm:$0xf]
    %v127 = vld [vmem:[#allocation3 + $0x70] sm:$0xf]
    %v128 = vld [vmem:[#allocation3 + $0x74] sm:$0xf]
    %v129 = vld [vmem:[#allocation3 + $0x78] sm:$0xf]
    %v130 = vld [vmem:[#allocation3 + $0x7c] sm:$0xf]
    %v131 = vld [vmem:[#allocation6] sm:$0xff]
    %v132 = vld [vmem:[#allocation6 + $0x8] sm:$0xff]
    %v133 = vld [vmem:[#allocation6 + $0x10] sm:$0xff]
    %v134 = vld [vmem:[#allocation6 + $0x18] sm:$0xff]
    %v135 = vld [vmem:[#allocation6 + $0x20] sm:$0xff]
    %v136 = vld [vmem:[#allocation6 + $0x28] sm:$0xff]
    %v137 = vld [vmem:[#allocation6 + $0x30] sm:$0xff]
    %v138 = vld [vmem:[#allocation6 + $0x38] sm:$0xff]
    %v139 = vld [vmem:[#allocation6 + $0x40] sm:$0xff]
    %v140 = vld [vmem:[#allocation6 + $0x48] sm:$0xff]
    %v141 = vld [vmem:[#allocation6 + $0x50] sm:$0xff]
    %v142 = vld [vmem:[#allocation6 + $0x58] sm:$0xff]
    %v143 = vld [vmem:[#allocation6 + $0x60] sm:$0xff]
    %v144 = vld [vmem:[#allocation6 + $0x68] sm:$0xff]
    %v145 = vld [vmem:[#allocation6 + $0x70] sm:$0xff]
    %v146 = vld [vmem:[#allocation6 + $0x78] sm:$0xff]
    %v147 = vld [vmem:[%s2] sm:$0x3]
    %v149 = vlaneseq
    %v150 = vshrl.u32 %v149, 7
    %v151 = vsub.s32 0, %v150
    %v152 = vrot.slane %v147, %v151
    %v153 = vlaneseq
    %v154 = vshrl.u32 %v153, 7
    %v155 = vsub.s32 1, %v154
    %v156 = vrot.slane %v147, %v155
    %v191 = vunpack.c.l.b16 %v99
    %v192 = vunpack.c.l.b16 %v100
    %v193 = vunpack.c.l.b16 %v101
    %v194 = vunpack.c.l.b16 %v102
    %v195 = vunpack.c.l.b16 %v103
    %v196 = vunpack.c.l.b16 %v104
    %v197 = vunpack.c.l.b16 %v105
    %v198 = vunpack.c.l.b16 %v106
    %v199 = vunpack.c.l.b16 %v107
    %v200 = vunpack.c.l.b16 %v108
    %v201 = vunpack.c.l.b16 %v109
    %v202 = vunpack.c.l.b16 %v110
    %v203 = vunpack.c.l.b16 %v111
    %v204 = vunpack.c.l.b16 %v112
    %v205 = vunpack.c.l.b16 %v113
    %v206 = vunpack.c.l.b16 %v114
    %v207 = vunpack.c.l.b16 %v115
    %v208 = vunpack.c.l.b16 %v116
    %v209 = vunpack.c.l.b16 %v117
    %v210 = vunpack.c.l.b16 %v118
    %v211 = vunpack.c.l.b16 %v119
    %v212 = vunpack.c.l.b16 %v120
    %v213 = vunpack.c.l.b16 %v121
    %v214 = vunpack.c.l.b16 %v122
    %v215 = vunpack.c.l.b16 %v123
    %v216 = vunpack.c.l.b16 %v124
    %v217 = vunpack.c.l.b16 %v125
    %v218 = vunpack.c.l.b16 %v126
    %v219 = vunpack.c.l.b16 %v127
    %v220 = vunpack.c.l.b16 %v128
    %v221 = vunpack.c.l.b16 %v129
    %v222 = vunpack.c.l.b16 %v130
    %v223 = vpack.c.b16 %v192, %v191
    %v224 = vpack.c.b16 %v194, %v193
    %v225 = vpack.c.b16 %v196, %v195
    %v226 = vpack.c.b16 %v198, %v197
    %v227 = vpack.c.b16 %v200, %v199
    %v228 = vpack.c.b16 %v202, %v201
    %v229 = vpack.c.b16 %v204, %v203
    %v230 = vpack.c.b16 %v206, %v205
    %v231 = vpack.c.b16 %v208, %v207
    %v232 = vpack.c.b16 %v210, %v209
    %v233 = vpack.c.b16 %v212, %v211
    %v234 = vpack.c.b16 %v214, %v213
    %v235 = vpack.c.b16 %v216, %v215
    %v236 = vpack.c.b16 %v218, %v217
    %v237 = vpack.c.b16 %v220, %v219
    %v238 = vpack.c.b16 %v222, %v221
    %v271 = vunpack.c.l.b16 %v131
    %v272 = vunpack.c.h.b16 %v131
    %v273 = vunpack.c.l.b16 %v132
    %v274 = vunpack.c.h.b16 %v132
    %v275 = vunpack.c.l.b16 %v133
    %v276 = vunpack.c.h.b16 %v133
    %v277 = vunpack.c.l.b16 %v134
    %v278 = vunpack.c.h.b16 %v134
    %v279 = vunpack.c.l.b16 %v135
    %v280 = vunpack.c.h.b16 %v135
    %v281 = vunpack.c.l.b16 %v136
    %v282 = vunpack.c.h.b16 %v136
    %v283 = vunpack.c.l.b16 %v137
    %v284 = vunpack.c.h.b16 %v137
    %v285 = vunpack.c.l.b16 %v138
    %v286 = vunpack.c.h.b16 %v138
    %v287 = vunpack.c.l.b16 %v139
    %v288 = vunpack.c.h.b16 %v139
    %v289 = vunpack.c.l.b16 %v140
    %v290 = vunpack.c.h.b16 %v140
    %v291 = vunpack.c.l.b16 %v141
    %v292 = vunpack.c.h.b16 %v141
    %v293 = vunpack.c.l.b16 %v142
    %v294 = vunpack.c.h.b16 %v142
    %v295 = vunpack.c.l.b16 %v143
    %v296 = vunpack.c.h.b16 %v143
    %v297 = vunpack.c.l.b16 %v144
    %v298 = vunpack.c.h.b16 %v144
    %v299 = vunpack.c.l.b16 %v145
    %v300 = vunpack.c.h.b16 %v145
    %v301 = vunpack.c.l.b16 %v146
    %v302 = vunpack.c.h.b16 %v146
    %v303 = vpack.c.b16 %v273, %v271
    %v304 = vpack.c.b16 %v274, %v272
    %v305 = vpack.c.b16 %v277, %v275
    %v306 = vpack.c.b16 %v278, %v276
    %v307 = vpack.c.b16 %v281, %v279
    %v308 = vpack.c.b16 %v282, %v280
    %v309 = vpack.c.b16 %v285, %v283
    %v310 = vpack.c.b16 %v286, %v284
    %v311 = vpack.c.b16 %v289, %v287
    %v312 = vpack.c.b16 %v290, %v288
    %v313 = vpack.c.b16 %v293, %v291
    %v314 = vpack.c.b16 %v294, %v292
    %v315 = vpack.c.b16 %v297, %v295
    %v316 = vpack.c.b16 %v298, %v296
    %v317 = vpack.c.b16 %v301, %v299
    %v318 = vpack.c.b16 %v302, %v300
    %335 = vmatprep.subr.bf16.mxu0 %v304
    %336 = vmatpush1.bf16.msra.mxu0 %v303
    %337 = vmatprep.subr.bf16.mxu0 %v306
    %338 = vmatpush1.bf16.msra.mxu0 %v305
    %339 = vmatprep.subr.bf16.mxu0 %v308
    %340 = vmatpush1.bf16.msra.mxu0 %v307
    %341 = vmatprep.subr.bf16.mxu0 %v310
    %342 = vmatpush1.bf16.msra.mxu0 %v309
    %343 = vmatprep.subr.bf16.mxu0 %v312
    %344 = vmatpush1.bf16.msra.mxu0 %v311
    %345 = vmatprep.subr.bf16.mxu0 %v314
    %346 = vmatpush1.bf16.msra.mxu0 %v313
    %347 = vmatprep.subr.bf16.mxu0 %v316
    %348 = vmatpush1.bf16.msra.mxu0 %v315
    %349 = vmatprep.subr.bf16.mxu0 %v318
    %350 = vmatpush1.bf16.msra.mxu0 %v317
    %351 = vmatprep.subr.bf16.mxu0 0
    %352 = vmatpush1.bf16.msra.mxu0 0
    %353 = vmatprep.subr.bf16.mxu0 0
    %354 = vmatpush1.bf16.msra.mxu0 0
    %355 = vmatprep.subr.bf16.mxu0 0
    %356 = vmatpush1.bf16.msra.mxu0 0
    %357 = vmatprep.subr.bf16.mxu0 0
    %358 = vmatpush1.bf16.msra.mxu0 0
    %359 = vmatprep.subr.bf16.mxu0 0
    %360 = vmatpush1.bf16.msra.mxu0 0
    %361 = vmatprep.subr.bf16.mxu0 0
    %362 = vmatpush1.bf16.msra.mxu0 0
    %363 = vmatprep.subr.bf16.mxu0 0
    %364 = vmatpush1.bf16.msra.mxu0 0
    %365 = vmatprep.subr.bf16.mxu0 0
    %366 = vmatpush1.bf16.msra.mxu0 0
    %367 = vmatprep.mubr.bf16.mxu0 0
    %368 = vmatmul.mubr.bf16.gmra.mrb[0].mxu0 %v223
    %v369 = vpop.f32.mrb[0].mxu0
    %v370 = vadd.f32 %v152, %v369
    %v371 = vpop.f32.mrb[0].mxu0
    %v372 = vadd.f32 %v156, %v371
    %v373 = vpop.f32.mrb[0].mxu0
    %v374 = vadd.f32 %v152, %v373
    %v375 = vpop.f32.mrb[0].mxu0
    %v376 = vadd.f32 %v156, %v375
    %377 = vmatprep.mubr.bf16.mxu0 0
    %378 = vmatmul.mubr.bf16.gmra.mrb[0].mxu0 %v224
    %v379 = vpop.f32.mrb[0].mxu0
    %v380 = vadd.f32 %v152, %v379
    %v381 = vpop.f32.mrb[0].mxu0
    %v382 = vadd.f32 %v156, %v381
    %v383 = vpop.f32.mrb[0].mxu0
    %v384 = vadd.f32 %v152, %v383
    %v385 = vpop.f32.mrb[0].mxu0
    %v386 = vadd.f32 %v156, %v385
    %387 = vmatprep.mubr.bf16.mxu0 0
    %388 = vmatmul.mubr.bf16.gmra.mrb[0].mxu0 %v225
    %v389 = vpop.f32.mrb[0].mxu0
    %v390 = vadd.f32 %v152, %v389
    %v391 = vpop.f32.mrb[0].mxu0
    %v392 = vadd.f32 %v156, %v391
    %v393 = vpop.f32.mrb[0].mxu0
    %v394 = vadd.f32 %v152, %v393
    %v395 = vpop.f32.mrb[0].mxu0
    %v396 = vadd.f32 %v156, %v395
    %397 = vmatprep.mubr.bf16.mxu0 0
    %398 = vmatmul.mubr.bf16.gmra.mrb[0].mxu0 %v226
    %v399 = vpop.f32.mrb[0].mxu0
    %v400 = vadd.f32 %v152, %v399
    %v401 = vpop.f32.mrb[0].mxu0
    %v402 = vadd.f32 %v156, %v401
    %v403 = vpop.f32.mrb[0].mxu0
    %v404 = vadd.f32 %v152, %v403
    %v405 = vpop.f32.mrb[0].mxu0
    %v406 = vadd.f32 %v156, %v405
    %407 = vmatprep.mubr.bf16.mxu0 0
    %408 = vmatmul.mubr.bf16.gmra.mrb[0].mxu0 %v227
    %v409 = vpop.f32.mrb[0].mxu0
    %v410 = vadd.f32 %v152, %v409
    %v411 = vpop.f32.mrb[0].mxu0
    %v412 = vadd.f32 %v156, %v411
    %v413 = vpop.f32.mrb[0].mxu0
    %v414 = vadd.f32 %v152, %v413
    %v415 = vpop.f32.mrb[0].mxu0
    %v416 = vadd.f32 %v156, %v415
    %417 = vmatprep.mubr.bf16.mxu0 0
    %418 = vmatmul.mubr.bf16.gmra.mrb[0].mxu0 %v228
    %v419 = vpop.f32.mrb[0].mxu0
    %v420 = vadd.f32 %v152, %v419
    %v421 = vpop.f32.mrb[0].mxu0
    %v422 = vadd.f32 %v156, %v421
    %v423 = vpop.f32.mrb[0].mxu0
    %v424 = vadd.f32 %v152, %v423
    %v425 = vpop.f32.mrb[0].mxu0
    %v426 = vadd.f32 %v156, %v425
    %427 = vmatprep.mubr.bf16.mxu0 0
    %428 = vmatmul.mubr.bf16.gmra.mrb[0].mxu0 %v229
    %v429 = vpop.f32.mrb[0].mxu0
    %v430 = vadd.f32 %v152, %v429
    %v431 = vpop.f32.mrb[0].mxu0
    %v432 = vadd.f32 %v156, %v431
    %v433 = vpop.f32.mrb[0].mxu0
    %v434 = vadd.f32 %v152, %v433
    %v435 = vpop.f32.mrb[0].mxu0
    %v436 = vadd.f32 %v156, %v435
    %437 = vmatprep.mubr.bf16.mxu0 0
    %438 = vmatmul.mubr.bf16.gmra.mrb[0].mxu0 %v230
    %v439 = vpop.f32.mrb[0].mxu0
    %v440 = vadd.f32 %v152, %v439
    %v441 = vpop.f32.mrb[0].mxu0
    %v442 = vadd.f32 %v156, %v441
    %v443 = vpop.f32.mrb[0].mxu0
    %v444 = vadd.f32 %v152, %v443
    %v445 = vpop.f32.mrb[0].mxu0
    %v446 = vadd.f32 %v156, %v445
    %447 = vmatprep.mubr.bf16.mxu0 0
    %448 = vmatmul.mubr.bf16.gmra.mrb[0].mxu0 %v231
    %v449 = vpop.f32.mrb[0].mxu0
    %v450 = vadd.f32 %v152, %v449
    %v451 = vpop.f32.mrb[0].mxu0
    %v452 = vadd.f32 %v156, %v451
    %v453 = vpop.f32.mrb[0].mxu0
    %v454 = vadd.f32 %v152, %v453
    %v455 = vpop.f32.mrb[0].mxu0
    %v456 = vadd.f32 %v156, %v455
    %457 = vmatprep.mubr.bf16.mxu0 0
    %458 = vmatmul.mubr.bf16.gmra.mrb[0].mxu0 %v232
    %v459 = vpop.f32.mrb[0].mxu0
    %v460 = vadd.f32 %v152, %v459
    %v461 = vpop.f32.mrb[0].mxu0
    %v462 = vadd.f32 %v156, %v461
    %v463 = vpop.f32.mrb[0].mxu0
    %v464 = vadd.f32 %v152, %v463
    %v465 = vpop.f32.mrb[0].mxu0
    %v466 = vadd.f32 %v156, %v465
    %467 = vmatprep.mubr.bf16.mxu0 0
    %468 = vmatmul.mubr.bf16.gmra.mrb[0].mxu0 %v233
    %v469 = vpop.f32.mrb[0].mxu0
    %v470 = vadd.f32 %v152, %v469
    %v471 = vpop.f32.mrb[0].mxu0
    %v472 = vadd.f32 %v156, %v471
    %v473 = vpop.f32.mrb[0].mxu0
    %v474 = vadd.f32 %v152, %v473
    %v475 = vpop.f32.mrb[0].mxu0
    %v476 = vadd.f32 %v156, %v475
    %477 = vmatprep.mubr.bf16.mxu0 0
    %478 = vmatmul.mubr.bf16.gmra.mrb[0].mxu0 %v234
    %v479 = vpop.f32.mrb[0].mxu0
    %v480 = vadd.f32 %v152, %v479
    %v481 = vpop.f32.mrb[0].mxu0
    %v482 = vadd.f32 %v156, %v481
    %v483 = vpop.f32.mrb[0].mxu0
    %v484 = vadd.f32 %v152, %v483
    %v485 = vpop.f32.mrb[0].mxu0
    %v486 = vadd.f32 %v156, %v485
    %487 = vmatprep.mubr.bf16.mxu0 0
    %488 = vmatmul.mubr.bf16.gmra.mrb[0].mxu0 %v235
    %v489 = vpop.f32.mrb[0].mxu0
    %v490 = vadd.f32 %v152, %v489
    %v491 = vpop.f32.mrb[0].mxu0
    %v492 = vadd.f32 %v156, %v491
    %v493 = vpop.f32.mrb[0].mxu0
    %v494 = vadd.f32 %v152, %v493
    %v495 = vpop.f32.mrb[0].mxu0
    %v496 = vadd.f32 %v156, %v495
    %497 = vmatprep.mubr.bf16.mxu0 0
    %498 = vmatmul.mubr.bf16.gmra.mrb[0].mxu0 %v236
    %v499 = vpop.f32.mrb[0].mxu0
    %v500 = vadd.f32 %v152, %v499
    %v501 = vpop.f32.mrb[0].mxu0
    %v502 = vadd.f32 %v156, %v501
    %v503 = vpop.f32.mrb[0].mxu0
    %v504 = vadd.f32 %v152, %v503
    %v505 = vpop.f32.mrb[0].mxu0
    %v506 = vadd.f32 %v156, %v505
    %507 = vmatprep.mubr.bf16.mxu0 0
    %508 = vmatmul.mubr.bf16.gmra.mrb[0].mxu0 %v237
    %v509 = vpop.f32.mrb[0].mxu0
    %v510 = vadd.f32 %v152, %v509
    %v511 = vpop.f32.mrb[0].mxu0
    %v512 = vadd.f32 %v156, %v511
    %v513 = vpop.f32.mrb[0].mxu0
    %v514 = vadd.f32 %v152, %v513
    %v515 = vpop.f32.mrb[0].mxu0
    %v516 = vadd.f32 %v156, %v515
    %517 = vmatprep.mubr.bf16.mxu0 0
    %518 = vmatmul.mubr.bf16.gmra.mrb[0].mxu0 %v238
    %v519 = vpop.f32.mrb[0].mxu0
    %v520 = vadd.f32 %v152, %v519
    %v521 = vpop.f32.mrb[0].mxu0
    %v522 = vadd.f32 %v156, %v521
    %v523 = vpop.f32.mrb[0].mxu0
    %v524 = vadd.f32 %v152, %v523
    %v525 = vpop.f32.mrb[0].mxu0
    %v526 = vadd.f32 %v156, %v525
    %527 = vdwg.mxu0
    %v528 = vmul.f32 %v370, 0.044715
    %v529 = vmul.f32 %v372, 0.044715
    %v530 = vmul.f32 %v374, 0.044715
    %v531 = vmul.f32 %v376, 0.044715
    %v532 = vmul.f32 %v380, 0.044715
    %v533 = vmul.f32 %v382, 0.044715
    %v534 = vmul.f32 %v384, 0.044715
    %v535 = vmul.f32 %v386, 0.044715
    %v536 = vmul.f32 %v390, 0.044715
    %v537 = vmul.f32 %v392, 0.044715
    %v538 = vmul.f32 %v394, 0.044715
    %v539 = vmul.f32 %v396, 0.044715
    %v540 = vmul.f32 %v400, 0.044715
    %v541 = vmul.f32 %v402, 0.044715
    %v542 = vmul.f32 %v404, 0.044715
    %v543 = vmul.f32 %v406, 0.044715
    %v544 = vmul.f32 %v410, 0.044715
    %v545 = vmul.f32 %v412, 0.044715
    %v546 = vmul.f32 %v414, 0.044715
    %v547 = vmul.f32 %v416, 0.044715
    %v548 = vmul.f32 %v420, 0.044715
    %v549 = vmul.f32 %v422, 0.044715
    %v550 = vmul.f32 %v424, 0.044715
    %v551 = vmul.f32 %v426, 0.044715
    %v552 = vmul.f32 %v430, 0.044715
    %v553 = vmul.f32 %v432, 0.044715
    %v554 = vmul.f32 %v434, 0.044715
    %v555 = vmul.f32 %v436, 0.044715
    %v556 = vmul.f32 %v440, 0.044715
    %v557 = vmul.f32 %v442, 0.044715
    %v558 = vmul.f32 %v444, 0.044715
    %v559 = vmul.f32 %v446, 0.044715
    %v560 = vmul.f32 %v450, 0.044715
    %v561 = vmul.f32 %v452, 0.044715
    %v562 = vmul.f32 %v454, 0.044715
    %v563 = vmul.f32 %v456, 0.044715
    %v564 = vmul.f32 %v460, 0.044715
    %v565 = vmul.f32 %v462, 0.044715
    %v566 = vmul.f32 %v464, 0.044715
    %v567 = vmul.f32 %v466, 0.044715
    %v568 = vmul.f32 %v470, 0.044715
    %v569 = vmul.f32 %v472, 0.044715
    %v570 = vmul.f32 %v474, 0.044715
    %v571 = vmul.f32 %v476, 0.044715
    %v572 = vmul.f32 %v480, 0.044715
    %v573 = vmul.f32 %v482, 0.044715
    %v574 = vmul.f32 %v484, 0.044715
    %v575 = vmul.f32 %v486, 0.044715
    %v576 = vmul.f32 %v490, 0.044715
    %v577 = vmul.f32 %v492, 0.044715
    %v578 = vmul.f32 %v494, 0.044715
    %v579 = vmul.f32 %v496, 0.044715
    %v580 = vmul.f32 %v500, 0.044715
    %v581 = vmul.f32 %v502, 0.044715
    %v582 = vmul.f32 %v504, 0.044715
    %v583 = vmul.f32 %v506, 0.044715
    %v584 = vmul.f32 %v510, 0.044715
    %v585 = vmul.f32 %v512, 0.044715
    %v586 = vmul.f32 %v514, 0.044715
    %v587 = vmul.f32 %v516, 0.044715
    %v588 = vmul.f32 %v520, 0.044715
    %v589 = vmul.f32 %v522, 0.044715
    %v590 = vmul.f32 %v524, 0.044715
    %v591 = vmul.f32 %v526, 0.044715
    %v592 = vmul.f32 %v528, %v370
    %v593 = vmul.f32 %v529, %v372
    %v594 = vmul.f32 %v530, %v374
    %v595 = vmul.f32 %v531, %v376
    %v596 = vmul.f32 %v532, %v380
    %v597 = vmul.f32 %v533, %v382
    %v598 = vmul.f32 %v534, %v384
    %v599 = vmul.f32 %v535, %v386
    %v600 = vmul.f32 %v536, %v390
    %v601 = vmul.f32 %v537, %v392
    %v602 = vmul.f32 %v538, %v394
    %v603 = vmul.f32 %v539, %v396
    %v604 = vmul.f32 %v540, %v400
    %v605 = vmul.f32 %v541, %v402
    %v606 = vmul.f32 %v542, %v404
    %v607 = vmul.f32 %v543, %v406
    %v608 = vmul.f32 %v544, %v410
    %v609 = vmul.f32 %v545, %v412
    %v610 = vmul.f32 %v546, %v414
    %v611 = vmul.f32 %v547, %v416
    %v612 = vmul.f32 %v548, %v420
    %v613 = vmul.f32 %v549, %v422
    %v614 = vmul.f32 %v550, %v424
    %v615 = vmul.f32 %v551, %v426
    %v616 = vmul.f32 %v552, %v430
    %v617 = vmul.f32 %v553, %v432
    %v618 = vmul.f32 %v554, %v434
    %v619 = vmul.f32 %v555, %v436
    %v620 = vmul.f32 %v556, %v440
    %v621 = vmul.f32 %v557, %v442
    %v622 = vmul.f32 %v558, %v444
    %v623 = vmul.f32 %v559, %v446
    %v624 = vmul.f32 %v560, %v450
    %v625 = vmul.f32 %v561, %v452
    %v626 = vmul.f32 %v562, %v454
    %v627 = vmul.f32 %v563, %v456
    %v628 = vmul.f32 %v564, %v460
    %v629 = vmul.f32 %v565, %v462
    %v630 = vmul.f32 %v566, %v464
    %v631 = vmul.f32 %v567, %v466
    %v632 = vmul.f32 %v568, %v470
    %v633 = vmul.f32 %v569, %v472
    %v634 = vmul.f32 %v570, %v474
    %v635 = vmul.f32 %v571, %v476
    %v636 = vmul.f32 %v572, %v480
    %v637 = vmul.f32 %v573, %v482
    %v638 = vmul.f32 %v574, %v484
    %v639 = vmul.f32 %v575, %v486
    %v640 = vmul.f32 %v576, %v490
    %v641 = vmul.f32 %v577, %v492
    %v642 = vmul.f32 %v578, %v494
    %v643 = vmul.f32 %v579, %v496
    %v644 = vmul.f32 %v580, %v500
    %v645 = vmul.f32 %v581, %v502
    %v646 = vmul.f32 %v582, %v504
    %v647 = vmul.f32 %v583, %v506
    %v648 = vmul.f32 %v584, %v510
    %v649 = vmul.f32 %v585, %v512
    %v650 = vmul.f32 %v586, %v514
    %v651 = vmul.f32 %v587, %v516
    %v652 = vmul.f32 %v588, %v520
    %v653 = vmul.f32 %v589, %v522
    %v654 = vmul.f32 %v590, %v524
    %v655 = vmul.f32 %v591, %v526
    %v656 = vadd.f32 %v592, 1.0
    %v657 = vadd.f32 %v593, 1.0
    %v658 = vadd.f32 %v594, 1.0
    %v659 = vadd.f32 %v595, 1.0
    %v660 = vadd.f32 %v596, 1.0
    %v661 = vadd.f32 %v597, 1.0
    %v662 = vadd.f32 %v598, 1.0
    %v663 = vadd.f32 %v599, 1.0
    %v664 = vadd.f32 %v600, 1.0
    %v665 = vadd.f32 %v601, 1.0
    %v666 = vadd.f32 %v602, 1.0
    %v667 = vadd.f32 %v603, 1.0
    %v668 = vadd.f32 %v604, 1.0
    %v669 = vadd.f32 %v605, 1.0
    %v670 = vadd.f32 %v606, 1.0
    %v671 = vadd.f32 %v607, 1.0
    %v672 = vadd.f32 %v608, 1.0
    %v673 = vadd.f32 %v609, 1.0
    %v674 = vadd.f32 %v610, 1.0
    %v675 = vadd.f32 %v611, 1.0
    %v676 = vadd.f32 %v612, 1.0
    %v677 = vadd.f32 %v613, 1.0
    %v678 = vadd.f32 %v614, 1.0
    %v679 = vadd.f32 %v615, 1.0
    %v680 = vadd.f32 %v616, 1.0
    %v681 = vadd.f32 %v617, 1.0
    %v682 = vadd.f32 %v618, 1.0
    %v683 = vadd.f32 %v619, 1.0
    %v684 = vadd.f32 %v620, 1.0
    %v685 = vadd.f32 %v621, 1.0
    %v686 = vadd.f32 %v622, 1.0
    %v687 = vadd.f32 %v623, 1.0
    %v688 = vadd.f32 %v624, 1.0
    %v689 = vadd.f32 %v625, 1.0
    %v690 = vadd.f32 %v626, 1.0
    %v691 = vadd.f32 %v627, 1.0
    %v692 = vadd.f32 %v628, 1.0
    %v693 = vadd.f32 %v629, 1.0
    %v694 = vadd.f32 %v630, 1.0
    %v695 = vadd.f32 %v631, 1.0
    %v696 = vadd.f32 %v632, 1.0
    %v697 = vadd.f32 %v633, 1.0
    %v698 = vadd.f32 %v634, 1.0
    %v699 = vadd.f32 %v635, 1.0
    %v700 = vadd.f32 %v636, 1.0
    %v701 = vadd.f32 %v637, 1.0
    %v702 = vadd.f32 %v638, 1.0
    %v703 = vadd.f32 %v639, 1.0
    %v704 = vadd.f32 %v640, 1.0
    %v705 = vadd.f32 %v641, 1.0
    %v706 = vadd.f32 %v642, 1.0
    %v707 = vadd.f32 %v643, 1.0
    %v708 = vadd.f32 %v644, 1.0
    %v709 = vadd.f32 %v645, 1.0
    %v710 = vadd.f32 %v646, 1.0
    %v711 = vadd.f32 %v647, 1.0
    %v712 = vadd.f32 %v648, 1.0
    %v713 = vadd.f32 %v649, 1.0
    %v714 = vadd.f32 %v650, 1.0
    %v715 = vadd.f32 %v651, 1.0
    %v716 = vadd.f32 %v652, 1.0
    %v717 = vadd.f32 %v653, 1.0
    %v718 = vadd.f32 %v654, 1.0
    %v719 = vadd.f32 %v655, 1.0
    %v720 = vmul.f32 %v370, %v656
    %v721 = vmul.f32 %v372, %v657
    %v722 = vmul.f32 %v374, %v658
    %v723 = vmul.f32 %v376, %v659
    %v724 = vmul.f32 %v380, %v660
    %v725 = vmul.f32 %v382, %v661
    %v726 = vmul.f32 %v384, %v662
    %v727 = vmul.f32 %v386, %v663
    %v728 = vmul.f32 %v390, %v664
    %v729 = vmul.f32 %v392, %v665
    %v730 = vmul.f32 %v394, %v666
    %v731 = vmul.f32 %v396, %v667
    %v732 = vmul.f32 %v400, %v668
    %v733 = vmul.f32 %v402, %v669
    %v734 = vmul.f32 %v404, %v670
    %v735 = vmul.f32 %v406, %v671
    %v736 = vmul.f32 %v410, %v672
    %v737 = vmul.f32 %v412, %v673
    %v738 = vmul.f32 %v414, %v674
    %v739 = vmul.f32 %v416, %v675
    %v740 = vmul.f32 %v420, %v676
    %v741 = vmul.f32 %v422, %v677
    %v742 = vmul.f32 %v424, %v678
    %v743 = vmul.f32 %v426, %v679
    %v744 = vmul.f32 %v430, %v680
    %v745 = vmul.f32 %v432, %v681
    %v746 = vmul.f32 %v434, %v682
    %v747 = vmul.f32 %v436, %v683
    %v748 = vmul.f32 %v440, %v684
    %v749 = vmul.f32 %v442, %v685
    %v750 = vmul.f32 %v444, %v686
    %v751 = vmul.f32 %v446, %v687
    %v752 = vmul.f32 %v450, %v688
    %v753 = vmul.f32 %v452, %v689
    %v754 = vmul.f32 %v454, %v690
    %v755 = vmul.f32 %v456, %v691
    %v756 = vmul.f32 %v460, %v692
    %v757 = vmul.f32 %v462, %v693
    %v758 = vmul.f32 %v464, %v694
    %v759 = vmul.f32 %v466, %v695
    %v760 = vmul.f32 %v470, %v696
    %v761 = vmul.f32 %v472, %v697
    %v762 = vmul.f32 %v474, %v698
    %v763 = vmul.f32 %v476, %v699
    %v764 = vmul.f32 %v480, %v700
    %v765 = vmul.f32 %v482, %v701
    %v766 = vmul.f32 %v484, %v702
    %v767 = vmul.f32 %v486, %v703
    %v768 = vmul.f32 %v490, %v704
    %v769 = vmul.f32 %v492, %v705
    %v770 = vmul.f32 %v494, %v706
    %v771 = vmul.f32 %v496, %v707
    %v772 = vmul.f32 %v500, %v708
    %v773 = vmul.f32 %v502, %v709
    %v774 = vmul.f32 %v504, %v710
    %v775 = vmul.f32 %v506, %v711
    %v776 = vmul.f32 %v510, %v712
    %v777 = vmul.f32 %v512, %v713
    %v778 = vmul.f32 %v514, %v714
    %v779 = vmul.f32 %v516, %v715
    %v780 = vmul.f32 %v520, %v716
    %v781 = vmul.f32 %v522, %v717
    %v782 = vmul.f32 %v524, %v718
    %v783 = vmul.f32 %v526, %v719
    %v784 = vmul.f32 %v370, 0.5
    %v785 = vmul.f32 %v372, 0.5
    %v786 = vmul.f32 %v374, 0.5
    %v787 = vmul.f32 %v376, 0.5
    %v788 = vmul.f32 %v380, 0.5
    %v789 = vmul.f32 %v382, 0.5
    %v790 = vmul.f32 %v384, 0.5
    %v791 = vmul.f32 %v386, 0.5
    %v792 = vmul.f32 %v390, 0.5
    %v793 = vmul.f32 %v392, 0.5
    %v794 = vmul.f32 %v394, 0.5
    %v795 = vmul.f32 %v396, 0.5
    %v796 = vmul.f32 %v400, 0.5
    %v797 = vmul.f32 %v402, 0.5
    %v798 = vmul.f32 %v404, 0.5
    %v799 = vmul.f32 %v406, 0.5
    %v800 = vmul.f32 %v410, 0.5
    %v801 = vmul.f32 %v412, 0.5
    %v802 = vmul.f32 %v414, 0.5
    %v803 = vmul.f32 %v416, 0.5
    %v804 = vmul.f32 %v420, 0.5
    %v805 = vmul.f32 %v422, 0.5
    %v806 = vmul.f32 %v424, 0.5
    %v807 = vmul.f32 %v426, 0.5
    %v808 = vmul.f32 %v430, 0.5
    %v809 = vmul.f32 %v432, 0.5
    %v810 = vmul.f32 %v434, 0.5
    %v811 = vmul.f32 %v436, 0.5
    %v812 = vmul.f32 %v440, 0.5
    %v813 = vmul.f32 %v442, 0.5
    %v814 = vmul.f32 %v444, 0.5
    %v815 = vmul.f32 %v446, 0.5
    %v816 = vmul.f32 %v450, 0.5
    %v817 = vmul.f32 %v452, 0.5
    %v818 = vmul.f32 %v454, 0.5
    %v819 = vmul.f32 %v456, 0.5
    %v820 = vmul.f32 %v460, 0.5
    %v821 = vmul.f32 %v462, 0.5
    %v822 = vmul.f32 %v464, 0.5
    %v823 = vmul.f32 %v466, 0.5
    %v824 = vmul.f32 %v470, 0.5
    %v825 = vmul.f32 %v472, 0.5
    %v826 = vmul.f32 %v474, 0.5
    %v827 = vmul.f32 %v476, 0.5
    %v828 = vmul.f32 %v480, 0.5
    %v829 = vmul.f32 %v482, 0.5
    %v830 = vmul.f32 %v484, 0.5
    %v831 = vmul.f32 %v486, 0.5
    %v832 = vmul.f32 %v490, 0.5
    %v833 = vmul.f32 %v492, 0.5
    %v834 = vmul.f32 %v494, 0.5
    %v835 = vmul.f32 %v496, 0.5
    %v836 = vmul.f32 %v500, 0.5
    %v837 = vmul.f32 %v502, 0.5
    %v838 = vmul.f32 %v504, 0.5
    %v839 = vmul.f32 %v506, 0.5
    %v840 = vmul.f32 %v510, 0.5
    %v841 = vmul.f32 %v512, 0.5
    %v842 = vmul.f32 %v514, 0.5
    %v843 = vmul.f32 %v516, 0.5
    %v844 = vmul.f32 %v520, 0.5
    %v845 = vmul.f32 %v522, 0.5
    %v846 = vmul.f32 %v524, 0.5
    %v847 = vmul.f32 %v526, 0.5
    %v848 = vmul.f32 %v720, 0.7978846
    %v849 = vmul.f32 %v721, 0.7978846
    %v850 = vmul.f32 %v722, 0.7978846
    %v851 = vmul.f32 %v723, 0.7978846
    %v852 = vmul.f32 %v724, 0.7978846
    %v853 = vmul.f32 %v725, 0.7978846
    %v854 = vmul.f32 %v726, 0.7978846
    %v855 = vmul.f32 %v727, 0.7978846
    %v856 = vmul.f32 %v728, 0.7978846
    %v857 = vmul.f32 %v729, 0.7978846
    %v858 = vmul.f32 %v730, 0.7978846
    %v859 = vmul.f32 %v731, 0.7978846
    %v860 = vmul.f32 %v732, 0.7978846
    %v861 = vmul.f32 %v733, 0.7978846
    %v862 = vmul.f32 %v734, 0.7978846
    %v863 = vmul.f32 %v735, 0.7978846
    %v864 = vmul.f32 %v736, 0.7978846
    %v865 = vmul.f32 %v737, 0.7978846
    %v866 = vmul.f32 %v738, 0.7978846
    %v867 = vmul.f32 %v739, 0.7978846
    %v868 = vmul.f32 %v740, 0.7978846
    %v869 = vmul.f32 %v741, 0.7978846
    %v870 = vmul.f32 %v742, 0.7978846
    %v871 = vmul.f32 %v743, 0.7978846
    %v872 = vmul.f32 %v744, 0.7978846
    %v873 = vmul.f32 %v745, 0.7978846
    %v874 = vmul.f32 %v746, 0.7978846
    %v875 = vmul.f32 %v747, 0.7978846
    %v876 = vmul.f32 %v748, 0.7978846
    %v877 = vmul.f32 %v749, 0.7978846
    %v878 = vmul.f32 %v750, 0.7978846
    %v879 = vmul.f32 %v751, 0.7978846
    %v880 = vmul.f32 %v752, 0.7978846
    %v881 = vmul.f32 %v753, 0.7978846
    %v882 = vmul.f32 %v754, 0.7978846
    %v883 = vmul.f32 %v755, 0.7978846
    %v884 = vmul.f32 %v756, 0.7978846
    %v885 = vmul.f32 %v757, 0.7978846
    %v886 = vmul.f32 %v758, 0.7978846
    %v887 = vmul.f32 %v759, 0.7978846
    %v888 = vmul.f32 %v760, 0.7978846
    %v889 = vmul.f32 %v761, 0.7978846
    %v890 = vmul.f32 %v762, 0.7978846
    %v891 = vmul.f32 %v763, 0.7978846
    %v892 = vmul.f32 %v764, 0.7978846
    %v893 = vmul.f32 %v765, 0.7978846
    %v894 = vmul.f32 %v766, 0.7978846
    %v895 = vmul.f32 %v767, 0.7978846
    %v896 = vmul.f32 %v768, 0.7978846
    %v897 = vmul.f32 %v769, 0.7978846
    %v898 = vmul.f32 %v770, 0.7978846
    %v899 = vmul.f32 %v771, 0.7978846
    %v900 = vmul.f32 %v772, 0.7978846
    %v901 = vmul.f32 %v773, 0.7978846
    %v902 = vmul.f32 %v774, 0.7978846
    %v903 = vmul.f32 %v775, 0.7978846
    %v904 = vmul.f32 %v776, 0.7978846
    %v905 = vmul.f32 %v777, 0.7978846
    %v906 = vmul.f32 %v778, 0.7978846
    %v907 = vmul.f32 %v779, 0.7978846
    %v908 = vmul.f32 %v780, 0.7978846
    %v909 = vmul.f32 %v781, 0.7978846
    %v910 = vmul.f32 %v782, 0.7978846
    %v911 = vmul.f32 %v783, 0.7978846
    %v912 = vtanh.pop %v848
    %v913 = vtanh.pop %v849
    %v914 = vtanh.pop %v850
    %v915 = vtanh.pop %v851
    %v916 = vtanh.pop %v852
    %v917 = vtanh.pop %v853
    %v918 = vtanh.pop %v854
    %v919 = vtanh.pop %v855
    %v920 = vtanh.pop %v856
    %v921 = vtanh.pop %v857
    %v922 = vtanh.pop %v858
    %v923 = vtanh.pop %v859
    %v924 = vtanh.pop %v860
    %v925 = vtanh.pop %v861
    %v926 = vtanh.pop %v862
    %v927 = vtanh.pop %v863
    %v928 = vtanh.pop %v864
    %v929 = vtanh.pop %v865
    %v930 = vtanh.pop %v866
    %v931 = vtanh.pop %v867
    %v932 = vtanh.pop %v868
    %v933 = vtanh.pop %v869
    %v934 = vtanh.pop %v870
    %v935 = vtanh.pop %v871
    %v936 = vtanh.pop %v872
    %v937 = vtanh.pop %v873
    %v938 = vtanh.pop %v874
    %v939 = vtanh.pop %v875
    %v940 = vtanh.pop %v876
    %v941 = vtanh.pop %v877
    %v942 = vtanh.pop %v878
    %v943 = vtanh.pop %v879
    %v944 = vtanh.pop %v880
    %v945 = vtanh.pop %v881
    %v946 = vtanh.pop %v882
    %v947 = vtanh.pop %v883
    %v948 = vtanh.pop %v884
    %v949 = vtanh.pop %v885
    %v950 = vtanh.pop %v886
    %v951 = vtanh.pop %v887
    %v952 = vtanh.pop %v888
    %v953 = vtanh.pop %v889
    %v954 = vtanh.pop %v890
    %v955 = vtanh.pop %v891
    %v956 = vtanh.pop %v892
    %v957 = vtanh.pop %v893
    %v958 = vtanh.pop %v894
    %v959 = vtanh.pop %v895
    %v960 = vtanh.pop %v896
    %v961 = vtanh.pop %v897
    %v962 = vtanh.pop %v898
    %v963 = vtanh.pop %v899
    %v964 = vtanh.pop %v900
    %v965 = vtanh.pop %v901
    %v966 = vtanh.pop %v902
    %v967 = vtanh.pop %v903
    %v968 = vtanh.pop %v904
    %v969 = vtanh.pop %v905
    %v970 = vtanh.pop %v906
    %v971 = vtanh.pop %v907
    %v972 = vtanh.pop %v908
    %v973 = vtanh.pop %v909
    %v974 = vtanh.pop %v910
    %v975 = vtanh.pop %v911
    %v976 = vadd.f32 %v912, 1.0
    %v977 = vadd.f32 %v913, 1.0
    %v978 = vadd.f32 %v914, 1.0
    %v979 = vadd.f32 %v915, 1.0
    %v980 = vadd.f32 %v916, 1.0
    %v981 = vadd.f32 %v917, 1.0
    %v982 = vadd.f32 %v918, 1.0
    %v983 = vadd.f32 %v919, 1.0
    %v984 = vadd.f32 %v920, 1.0
    %v985 = vadd.f32 %v921, 1.0
    %v986 = vadd.f32 %v922, 1.0
    %v987 = vadd.f32 %v923, 1.0
    %v988 = vadd.f32 %v924, 1.0
    %v989 = vadd.f32 %v925, 1.0
    %v990 = vadd.f32 %v926, 1.0
    %v991 = vadd.f32 %v927, 1.0
    %v992 = vadd.f32 %v928, 1.0
    %v993 = vadd.f32 %v929, 1.0
    %v994 = vadd.f32 %v930, 1.0
    %v995 = vadd.f32 %v931, 1.0
    %v996 = vadd.f32 %v932, 1.0
    %v997 = vadd.f32 %v933, 1.0
    %v998 = vadd.f32 %v934, 1.0
    %v999 = vadd.f32 %v935, 1.0
    %v1000 = vadd.f32 %v936, 1.0
    %v1001 = vadd.f32 %v937, 1.0
    %v1002 = vadd.f32 %v938, 1.0
    %v1003 = vadd.f32 %v939, 1.0
    %v1004 = vadd.f32 %v940, 1.0
    %v1005 = vadd.f32 %v941, 1.0
    %v1006 = vadd.f32 %v942, 1.0
    %v1007 = vadd.f32 %v943, 1.0
    %v1008 = vadd.f32 %v944, 1.0
    %v1009 = vadd.f32 %v945, 1.0
    %v1010 = vadd.f32 %v946, 1.0
    %v1011 = vadd.f32 %v947, 1.0
    %v1012 = vadd.f32 %v948, 1.0
    %v1013 = vadd.f32 %v949, 1.0
    %v1014 = vadd.f32 %v950, 1.0
    %v1015 = vadd.f32 %v951, 1.0
    %v1016 = vadd.f32 %v952, 1.0
    %v1017 = vadd.f32 %v953, 1.0
    %v1018 = vadd.f32 %v954, 1.0
    %v1019 = vadd.f32 %v955, 1.0
    %v1020 = vadd.f32 %v956, 1.0
    %v1021 = vadd.f32 %v957, 1.0
    %v1022 = vadd.f32 %v958, 1.0
    %v1023 = vadd.f32 %v959, 1.0
    %v1024 = vadd.f32 %v960, 1.0
    %v1025 = vadd.f32 %v961, 1.0
    %v1026 = vadd.f32 %v962, 1.0
    %v1027 = vadd.f32 %v963, 1.0
    %v1028 = vadd.f32 %v964, 1.0
    %v1029 = vadd.f32 %v965, 1.0
    %v1030 = vadd.f32 %v966, 1.0
    %v1031 = vadd.f32 %v967, 1.0
    %v1032 = vadd.f32 %v968, 1.0
    %v1033 = vadd.f32 %v969, 1.0
    %v1034 = vadd.f32 %v970, 1.0
    %v1035 = vadd.f32 %v971, 1.0
    %v1036 = vadd.f32 %v972, 1.0
    %v1037 = vadd.f32 %v973, 1.0
    %v1038 = vadd.f32 %v974, 1.0
    %v1039 = vadd.f32 %v975, 1.0
    %v1040 = vmul.f32 %v784, %v976
    %v1041 = vmul.f32 %v785, %v977
    %v1042 = vmul.f32 %v786, %v978
    %v1043 = vmul.f32 %v787, %v979
    %v1044 = vmul.f32 %v788, %v980
    %v1045 = vmul.f32 %v789, %v981
    %v1046 = vmul.f32 %v790, %v982
    %v1047 = vmul.f32 %v791, %v983
    %v1048 = vmul.f32 %v792, %v984
    %v1049 = vmul.f32 %v793, %v985
    %v1050 = vmul.f32 %v794, %v986
    %v1051 = vmul.f32 %v795, %v987
    %v1052 = vmul.f32 %v796, %v988
    %v1053 = vmul.f32 %v797, %v989
    %v1054 = vmul.f32 %v798, %v990
    %v1055 = vmul.f32 %v799, %v991
    %v1056 = vmul.f32 %v800, %v992
    %v1057 = vmul.f32 %v801, %v993
    %v1058 = vmul.f32 %v802, %v994
    %v1059 = vmul.f32 %v803, %v995
    %v1060 = vmul.f32 %v804, %v996
    %v1061 = vmul.f32 %v805, %v997
    %v1062 = vmul.f32 %v806, %v998
    %v1063 = vmul.f32 %v807, %v999
    %v1064 = vmul.f32 %v808, %v1000
    %v1065 = vmul.f32 %v809, %v1001
    %v1066 = vmul.f32 %v810, %v1002
    %v1067 = vmul.f32 %v811, %v1003
    %v1068 = vmul.f32 %v812, %v1004
    %v1069 = vmul.f32 %v813, %v1005
    %v1070 = vmul.f32 %v814, %v1006
    %v1071 = vmul.f32 %v815, %v1007
    %v1072 = vmul.f32 %v816, %v1008
    %v1073 = vmul.f32 %v817, %v1009
    %v1074 = vmul.f32 %v818, %v1010
    %v1075 = vmul.f32 %v819, %v1011
    %v1076 = vmul.f32 %v820, %v1012
    %v1077 = vmul.f32 %v821, %v1013
    %v1078 = vmul.f32 %v822, %v1014
    %v1079 = vmul.f32 %v823, %v1015
    %v1080 = vmul.f32 %v824, %v1016
    %v1081 = vmul.f32 %v825, %v1017
    %v1082 = vmul.f32 %v826, %v1018
    %v1083 = vmul.f32 %v827, %v1019
    %v1084 = vmul.f32 %v828, %v1020
    %v1085 = vmul.f32 %v829, %v1021
    %v1086 = vmul.f32 %v830, %v1022
    %v1087 = vmul.f32 %v831, %v1023
    %v1088 = vmul.f32 %v832, %v1024
    %v1089 = vmul.f32 %v833, %v1025
    %v1090 = vmul.f32 %v834, %v1026
    %v1091 = vmul.f32 %v835, %v1027
    %v1092 = vmul.f32 %v836, %v1028
    %v1093 = vmul.f32 %v837, %v1029
    %v1094 = vmul.f32 %v838, %v1030
    %v1095 = vmul.f32 %v839, %v1031
    %v1096 = vmul.f32 %v840, %v1032
    %v1097 = vmul.f32 %v841, %v1033
    %v1098 = vmul.f32 %v842, %v1034
    %v1099 = vmul.f32 %v843, %v1035
    %v1100 = vmul.f32 %v844, %v1036
    %v1101 = vmul.f32 %v845, %v1037
    %v1102 = vmul.f32 %v846, %v1038
    %v1103 = vmul.f32 %v847, %v1039
    %v1104 = vld [vmem:[#allocation2] sm:$0xff]
    %v1105 = vld [vmem:[#allocation2 + $0x8] sm:$0xff]
    %v1106 = vld [vmem:[#allocation2 + $0x10] sm:$0xff]
    %v1107 = vld [vmem:[#allocation2 + $0x18] sm:$0xff]
    %v1108 = vld [vmem:[#allocation2 + $0x20] sm:$0xff]
    %v1109 = vld [vmem:[#allocation2 + $0x28] sm:$0xff]
    %v1110 = vld [vmem:[#allocation2 + $0x30] sm:$0xff]
    %v1111 = vld [vmem:[#allocation2 + $0x38] sm:$0xff]
    %v1112 = vld [vmem:[#allocation2 + $0x40] sm:$0xff]
    %v1113 = vld [vmem:[#allocation2 + $0x48] sm:$0xff]
    %v1114 = vld [vmem:[#allocation2 + $0x50] sm:$0xff]
    %v1115 = vld [vmem:[#allocation2 + $0x58] sm:$0xff]
    %v1116 = vld [vmem:[#allocation2 + $0x60] sm:$0xff]
    %v1117 = vld [vmem:[#allocation2 + $0x68] sm:$0xff]
    %v1118 = vld [vmem:[#allocation2 + $0x70] sm:$0xff]
    %v1119 = vld [vmem:[#allocation2 + $0x78] sm:$0xff]
    %v1120 = vld [vmem:[#allocation2 + $0x80] sm:$0xff]
    %v1121 = vld [vmem:[#allocation2 + $0x88] sm:$0xff]
    %v1122 = vld [vmem:[#allocation2 + $0x90] sm:$0xff]
    %v1123 = vld [vmem:[#allocation2 + $0x98] sm:$0xff]
    %v1124 = vld [vmem:[#allocation2 + $0xa0] sm:$0xff]
    %v1125 = vld [vmem:[#allocation2 + $0xa8] sm:$0xff]
    %v1126 = vld [vmem:[#allocation2 + $0xb0] sm:$0xff]
    %v1127 = vld [vmem:[#allocation2 + $0xb8] sm:$0xff]
    %v1128 = vld [vmem:[#allocation2 + $0xc0] sm:$0xff]
    %v1129 = vld [vmem:[#allocation2 + $0xc8] sm:$0xff]
    %v1130 = vld [vmem:[#allocation2 + $0xd0] sm:$0xff]
    %v1131 = vld [vmem:[#allocation2 + $0xd8] sm:$0xff]
    %v1132 = vld [vmem:[#allocation2 + $0xe0] sm:$0xff]
    %v1133 = vld [vmem:[#allocation2 + $0xe8] sm:$0xff]
    %v1134 = vld [vmem:[#allocation2 + $0xf0] sm:$0xff]
    %v1135 = vld [vmem:[#allocation2 + $0xf8] sm:$0xff]
    %v1136 = vpack.c.bf16 %v1042, %v1040
    %v1137 = vpack.c.bf16 %v1043, %v1041
    %v1138 = vpack.c.bf16 %v1046, %v1044
    %v1139 = vpack.c.bf16 %v1047, %v1045
    %v1140 = vpack.c.bf16 %v1050, %v1048
    %v1141 = vpack.c.bf16 %v1051, %v1049
    %v1142 = vpack.c.bf16 %v1054, %v1052
    %v1143 = vpack.c.bf16 %v1055, %v1053
    %v1144 = vpack.c.bf16 %v1058, %v1056
    %v1145 = vpack.c.bf16 %v1059, %v1057
    %v1146 = vpack.c.bf16 %v1062, %v1060
    %v1147 = vpack.c.bf16 %v1063, %v1061
    %v1148 = vpack.c.bf16 %v1066, %v1064
    %v1149 = vpack.c.bf16 %v1067, %v1065
    %v1150 = vpack.c.bf16 %v1070, %v1068
    %v1151 = vpack.c.bf16 %v1071, %v1069
    %v1152 = vpack.c.bf16 %v1074, %v1072
    %v1153 = vpack.c.bf16 %v1075, %v1073
    %v1154 = vpack.c.bf16 %v1078, %v1076
    %v1155 = vpack.c.bf16 %v1079, %v1077
    %v1156 = vpack.c.bf16 %v1082, %v1080
    %v1157 = vpack.c.bf16 %v1083, %v1081
    %v1158 = vpack.c.bf16 %v1086, %v1084
    %v1159 = vpack.c.bf16 %v1087, %v1085
    %v1160 = vpack.c.bf16 %v1090, %v1088
    %v1161 = vpack.c.bf16 %v1091, %v1089
    %v1162 = vpack.c.bf16 %v1094, %v1092
    %v1163 = vpack.c.bf16 %v1095, %v1093
    %v1164 = vpack.c.bf16 %v1098, %v1096
    %v1165 = vpack.c.bf16 %v1099, %v1097
    %v1166 = vpack.c.bf16 %v1102, %v1100
    %v1167 = vpack.c.bf16 %v1103, %v1101
    %v1168 = vld [vmem:[#allocation8] sm:$0xf]
    %v1169 = vld [vmem:[#allocation8 + $0x4] sm:$0xf]
    %v1170 = vld [vmem:[#allocation8 + $0x8] sm:$0xf]
    %v1171 = vld [vmem:[#allocation8 + $0xc] sm:$0xf]
    %v1172 = vld [vmem:[#allocation8 + $0x10] sm:$0xf]
    %v1173 = vld [vmem:[#allocation8 + $0x14] sm:$0xf]
    %v1174 = vld [vmem:[#allocation8 + $0x18] sm:$0xf]
    %v1175 = vld [vmem:[#allocation8 + $0x1c] sm:$0xf]
    %v1176 = vld [vmem:[#allocation8 + $0x20] sm:$0xf]
    %v1177 = vld [vmem:[#allocation8 + $0x24] sm:$0xf]
    %v1178 = vld [vmem:[#allocation8 + $0x28] sm:$0xf]
    %v1179 = vld [vmem:[#allocation8 + $0x2c] sm:$0xf]
    %v1180 = vld [vmem:[#allocation8 + $0x30] sm:$0xf]
    %v1181 = vld [vmem:[#allocation8 + $0x34] sm:$0xf]
    %v1182 = vld [vmem:[#allocation8 + $0x38] sm:$0xf]
    %v1183 = vld [vmem:[#allocation8 + $0x3c] sm:$0xf]
    %v1184 = vld [vmem:[#allocation8 + $0x40] sm:$0xf]
    %v1185 = vld [vmem:[#allocation8 + $0x44] sm:$0xf]
    %v1186 = vld [vmem:[#allocation8 + $0x48] sm:$0xf]
    %v1187 = vld [vmem:[#allocation8 + $0x4c] sm:$0xf]
    %v1188 = vld [vmem:[#allocation8 + $0x50] sm:$0xf]
    %v1189 = vld [vmem:[#allocation8 + $0x54] sm:$0xf]
    %v1190 = vld [vmem:[#allocation8 + $0x58] sm:$0xf]
    %v1191 = vld [vmem:[#allocation8 + $0x5c] sm:$0xf]
    %v1192 = vld [vmem:[#allocation8 + $0x60] sm:$0xf]
    %v1193 = vld [vmem:[#allocation8 + $0x64] sm:$0xf]
    %v1194 = vld [vmem:[#allocation8 + $0x68] sm:$0xf]
    %v1195 = vld [vmem:[#allocation8 + $0x6c] sm:$0xf]
    %v1196 = vld [vmem:[#allocation8 + $0x70] sm:$0xf]
    %v1197 = vld [vmem:[#allocation8 + $0x74] sm:$0xf]
    %v1198 = vld [vmem:[#allocation8 + $0x78] sm:$0xf]
    %v1199 = vld [vmem:[#allocation8 + $0x7c] sm:$0xf]
    %v1232 = vunpack.c.l.b16 %v1168
    %v1233 = vunpack.c.l.b16 %v1169
    %v1234 = vunpack.c.l.b16 %v1170
    %v1235 = vunpack.c.l.b16 %v1171
    %v1236 = vunpack.c.l.b16 %v1172
    %v1237 = vunpack.c.l.b16 %v1173
    %v1238 = vunpack.c.l.b16 %v1174
    %v1239 = vunpack.c.l.b16 %v1175
    %v1240 = vunpack.c.l.b16 %v1176
    %v1241 = vunpack.c.l.b16 %v1177
    %v1242 = vunpack.c.l.b16 %v1178
    %v1243 = vunpack.c.l.b16 %v1179
    %v1244 = vunpack.c.l.b16 %v1180
    %v1245 = vunpack.c.l.b16 %v1181
    %v1246 = vunpack.c.l.b16 %v1182
    %v1247 = vunpack.c.l.b16 %v1183
    %v1248 = vunpack.c.l.b16 %v1184
    %v1249 = vunpack.c.l.b16 %v1185
    %v1250 = vunpack.c.l.b16 %v1186
    %v1251 = vunpack.c.l.b16 %v1187
    %v1252 = vunpack.c.l.b16 %v1188
    %v1253 = vunpack.c.l.b16 %v1189
    %v1254 = vunpack.c.l.b16 %v1190
    %v1255 = vunpack.c.l.b16 %v1191
    %v1256 = vunpack.c.l.b16 %v1192
    %v1257 = vunpack.c.l.b16 %v1193
    %v1258 = vunpack.c.l.b16 %v1194
    %v1259 = vunpack.c.l.b16 %v1195
    %v1260 = vunpack.c.l.b16 %v1196
    %v1261 = vunpack.c.l.b16 %v1197
    %v1262 = vunpack.c.l.b16 %v1198
    %v1263 = vunpack.c.l.b16 %v1199
    %v1264 = vpack.c.b16 %v1233, %v1232
    %v1265 = vpack.c.b16 %v1235, %v1234
    %v1266 = vpack.c.b16 %v1237, %v1236
    %v1267 = vpack.c.b16 %v1239, %v1238
    %v1268 = vpack.c.b16 %v1241, %v1240
    %v1269 = vpack.c.b16 %v1243, %v1242
    %v1270 = vpack.c.b16 %v1245, %v1244
    %v1271 = vpack.c.b16 %v1247, %v1246
    %v1272 = vpack.c.b16 %v1249, %v1248
    %v1273 = vpack.c.b16 %v1251, %v1250
    %v1274 = vpack.c.b16 %v1253, %v1252
    %v1275 = vpack.c.b16 %v1255, %v1254
    %v1276 = vpack.c.b16 %v1257, %v1256
    %v1277 = vpack.c.b16 %v1259, %v1258
    %v1278 = vpack.c.b16 %v1261, %v1260
    %v1279 = vpack.c.b16 %v1263, %v1262
    %1296 = vmatprep.subr.bf16.mxu0 0
    %1297 = vmatpush1.bf16.msra.mxu0 %v1264
    %1298 = vmatprep.subr.bf16.mxu0 0
    %1299 = vmatpush1.bf16.msra.mxu0 %v1265
    %1300 = vmatprep.subr.bf16.mxu0 0
    %1301 = vmatpush1.bf16.msra.mxu0 %v1266
    %1302 = vmatprep.subr.bf16.mxu0 0
    %1303 = vmatpush1.bf16.msra.mxu0 %v1267
    %1304 = vmatprep.subr.bf16.mxu0 0
    %1305 = vmatpush1.bf16.msra.mxu0 %v1268
    %1306 = vmatprep.subr.bf16.mxu0 0
    %1307 = vmatpush1.bf16.msra.mxu0 %v1269
    %1308 = vmatprep.subr.bf16.mxu0 0
    %1309 = vmatpush1.bf16.msra.mxu0 %v1270
    %1310 = vmatprep.subr.bf16.mxu0 0
    %1311 = vmatpush1.bf16.msra.mxu0 %v1271
    %1312 = vmatprep.subr.bf16.mxu0 0
    %1313 = vmatpush1.bf16.msra.mxu0 %v1272
    %1314 = vmatprep.subr.bf16.mxu0 0
    %1315 = vmatpush1.bf16.msra.mxu0 %v1273
    %1316 = vmatprep.subr.bf16.mxu0 0
    %1317 = vmatpush1.bf16.msra.mxu0 %v1274
    %1318 = vmatprep.subr.bf16.mxu0 0
    %1319 = vmatpush1.bf16.msra.mxu0 %v1275
    %1320 = vmatprep.subr.bf16.mxu0 0
    %1321 = vmatpush1.bf16.msra.mxu0 %v1276
    %1322 = vmatprep.subr.bf16.mxu0 0
    %1323 = vmatpush1.bf16.msra.mxu0 %v1277
    %1324 = vmatprep.subr.bf16.mxu0 0
    %1325 = vmatpush1.bf16.msra.mxu0 %v1278
    %1326 = vmatprep.subr.bf16.mxu0 0
    %1327 = vmatpush1.bf16.msra.mxu0 %v1279
    %1328 = vmatprep.mubr.bf16.mxu0 %v1137
    %1329 = vmatmul.mubr.bf16.gmra.mrb[0].mxu0 %v1136
    %v1330 = vpop.f32.mrb[0].mxu0
    %v1331 = vadd.f32 0.0, %v1330
    %v1332 = vpop.f32.mrb[0].mxu0
    %v1333 = vpop.f32.mrb[0].mxu0
    %v1334 = vadd.f32 0.0, %v1333
    %v1335 = vpop.f32.mrb[0].mxu0
    %1336 = vmatprep.mubr.bf16.mxu0 %v1139
    %1337 = vmatmul.mubr.bf16.gmra.mrb[0].mxu0 %v1138
    %v1338 = vpop.f32.mrb[0].mxu0
    %v1339 = vadd.f32 0.0, %v1338
    %v1340 = vpop.f32.mrb[0].mxu0
    %v1341 = vpop.f32.mrb[0].mxu0
    %v1342 = vadd.f32 0.0, %v1341
    %v1343 = vpop.f32.mrb[0].mxu0
    %1344 = vmatprep.mubr.bf16.mxu0 %v1141
    %1345 = vmatmul.mubr.bf16.gmra.mrb[0].mxu0 %v1140
    %v1346 = vpop.f32.mrb[0].mxu0
    %v1347 = vadd.f32 0.0, %v1346
    %v1348 = vpop.f32.mrb[0].mxu0
    %v1349 = vpop.f32.mrb[0].mxu0
    %v1350 = vadd.f32 0.0, %v1349
    %v1351 = vpop.f32.mrb[0].mxu0
    %1352 = vmatprep.mubr.bf16.mxu0 %v1143
    %1353 = vmatmul.mubr.bf16.gmra.mrb[0].mxu0 %v1142
    %v1354 = vpop.f32.mrb[0].mxu0
    %v1355 = vadd.f32 0.0, %v1354
    %v1356 = vpop.f32.mrb[0].mxu0
    %v1357 = vpop.f32.mrb[0].mxu0
    %v1358 = vadd.f32 0.0, %v1357
    %v1359 = vpop.f32.mrb[0].mxu0
    %1360 = vmatprep.mubr.bf16.mxu0 %v1145
    %1361 = vmatmul.mubr.bf16.gmra.mrb[0].mxu0 %v1144
    %v1362 = vpop.f32.mrb[0].mxu0
    %v1363 = vadd.f32 0.0, %v1362
    %v1364 = vpop.f32.mrb[0].mxu0
    %v1365 = vpop.f32.mrb[0].mxu0
    %v1366 = vadd.f32 0.0, %v1365
    %v1367 = vpop.f32.mrb[0].mxu0
    %1368 = vmatprep.mubr.bf16.mxu0 %v1147
    %1369 = vmatmul.mubr.bf16.gmra.mrb[0].mxu0 %v1146
    %v1370 = vpop.f32.mrb[0].mxu0
    %v1371 = vadd.f32 0.0, %v1370
    %v1372 = vpop.f32.mrb[0].mxu0
    %v1373 = vpop.f32.mrb[0].mxu0
    %v1374 = vadd.f32 0.0, %v1373
    %v1375 = vpop.f32.mrb[0].mxu0
    %1376 = vmatprep.mubr.bf16.mxu0 %v1149
    %1377 = vmatmul.mubr.bf16.gmra.mrb[0].mxu0 %v1148
    %v1378 = vpop.f32.mrb[0].mxu0
    %v1379 = vadd.f32 0.0, %v1378
    %v1380 = vpop.f32.mrb[0].mxu0
    %v1381 = vpop.f32.mrb[0].mxu0
    %v1382 = vadd.f32 0.0, %v1381
    %v1383 = vpop.f32.mrb[0].mxu0
    %1384 = vmatprep.mubr.bf16.mxu0 %v1151
    %1385 = vmatmul.mubr.bf16.gmra.mrb[0].mxu0 %v1150
    %v1386 = vpop.f32.mrb[0].mxu0
    %v1387 = vadd.f32 0.0, %v1386
    %v1388 = vpop.f32.mrb[0].mxu0
    %v1389 = vpop.f32.mrb[0].mxu0
    %v1390 = vadd.f32 0.0, %v1389
    %v1391 = vpop.f32.mrb[0].mxu0
    %1392 = vmatprep.mubr.bf16.mxu0 %v1153
    %1393 = vmatmul.mubr.bf16.gmra.mrb[0].mxu0 %v1152
    %v1394 = vpop.f32.mrb[0].mxu0
    %v1395 = vadd.f32 0.0, %v1394
    %v1396 = vpop.f32.mrb[0].mxu0
    %v1397 = vpop.f32.mrb[0].mxu0
    %v1398 = vadd.f32 0.0, %v1397
    %v1399 = vpop.f32.mrb[0].mxu0
    %1400 = vmatprep.mubr.bf16.mxu0 %v1155
    %1401 = vmatmul.mubr.bf16.gmra.mrb[0].mxu0 %v1154
    %v1402 = vpop.f32.mrb[0].mxu0
    %v1403 = vadd.f32 0.0, %v1402
    %v1404 = vpop.f32.mrb[0].mxu0
    %v1405 = vpop.f32.mrb[0].mxu0
    %v1406 = vadd.f32 0.0, %v1405
    %v1407 = vpop.f32.mrb[0].mxu0
    %1408 = vmatprep.mubr.bf16.mxu0 %v1157
    %1409 = vmatmul.mubr.bf16.gmra.mrb[0].mxu0 %v1156
    %v1410 = vpop.f32.mrb[0].mxu0
    %v1411 = vadd.f32 0.0, %v1410
    %v1412 = vpop.f32.mrb[0].mxu0
    %v1413 = vpop.f32.mrb[0].mxu0
    %v1414 = vadd.f32 0.0, %v1413
    %v1415 = vpop.f32.mrb[0].mxu0
    %1416 = vmatprep.mubr.bf16.mxu0 %v1159
    %1417 = vmatmul.mubr.bf16.gmra.mrb[0].mxu0 %v1158
    %v1418 = vpop.f32.mrb[0].mxu0
    %v1419 = vadd.f32 0.0, %v1418
    %v1420 = vpop.f32.mrb[0].mxu0
    %v1421 = vpop.f32.mrb[0].mxu0
    %v1422 = vadd.f32 0.0, %v1421
    %v1423 = vpop.f32.mrb[0].mxu0
    %1424 = vmatprep.mubr.bf16.mxu0 %v1161
    %1425 = vmatmul.mubr.bf16.gmra.mrb[0].mxu0 %v1160
    %v1426 = vpop.f32.mrb[0].mxu0
    %v1427 = vadd.f32 0.0, %v1426
    %v1428 = vpop.f32.mrb[0].mxu0
    %v1429 = vpop.f32.mrb[0].mxu0
    %v1430 = vadd.f32 0.0, %v1429
    %v1431 = vpop.f32.mrb[0].mxu0
    %1432 = vmatprep.mubr.bf16.mxu0 %v1163
    %1433 = vmatmul.mubr.bf16.gmra.mrb[0].mxu0 %v1162
    %v1434 = vpop.f32.mrb[0].mxu0
    %v1435 = vadd.f32 0.0, %v1434
    %v1436 = vpop.f32.mrb[0].mxu0
    %v1437 = vpop.f32.mrb[0].mxu0
    %v1438 = vadd.f32 0.0, %v1437
    %v1439 = vpop.f32.mrb[0].mxu0
    %1440 = vmatprep.mubr.bf16.mxu0 %v1165
    %1441 = vmatmul.mubr.bf16.gmra.mrb[0].mxu0 %v1164
    %v1442 = vpop.f32.mrb[0].mxu0
    %v1443 = vadd.f32 0.0, %v1442
    %v1444 = vpop.f32.mrb[0].mxu0
    %v1445 = vpop.f32.mrb[0].mxu0
    %v1446 = vadd.f32 0.0, %v1445
    %v1447 = vpop.f32.mrb[0].mxu0
    %1448 = vmatprep.mubr.bf16.mxu0 %v1167
    %1449 = vmatmul.mubr.bf16.gmra.mrb[0].mxu0 %v1166
    %v1450 = vpop.f32.mrb[0].mxu0
    %v1451 = vadd.f32 0.0, %v1450
    %v1452 = vpop.f32.mrb[0].mxu0
    %v1453 = vpop.f32.mrb[0].mxu0
    %v1454 = vadd.f32 0.0, %v1453
    %v1455 = vpop.f32.mrb[0].mxu0
    %1456 = vdwg.mxu0
    %v1457 = vadd.f32 %v1104, %v1331
    %v1458 = vadd.f32 %v1105, %v1334
    %v1459 = vadd.f32 %v1106, %v1339
    %v1460 = vadd.f32 %v1107, %v1342
    %v1461 = vadd.f32 %v1108, %v1347
    %v1462 = vadd.f32 %v1109, %v1350
    %v1463 = vadd.f32 %v1110, %v1355
    %v1464 = vadd.f32 %v1111, %v1358
    %v1465 = vadd.f32 %v1112, %v1363
    %v1466 = vadd.f32 %v1113, %v1366
    %v1467 = vadd.f32 %v1114, %v1371
    %v1468 = vadd.f32 %v1115, %v1374
    %v1469 = vadd.f32 %v1116, %v1379
    %v1470 = vadd.f32 %v1117, %v1382
    %v1471 = vadd.f32 %v1118, %v1387
    %v1472 = vadd.f32 %v1119, %v1390
    %v1473 = vadd.f32 %v1120, %v1395
    %v1474 = vadd.f32 %v1121, %v1398
    %v1475 = vadd.f32 %v1122, %v1403
    %v1476 = vadd.f32 %v1123, %v1406
    %v1477 = vadd.f32 %v1124, %v1411
    %v1478 = vadd.f32 %v1125, %v1414
    %v1479 = vadd.f32 %v1126, %v1419
    %v1480 = vadd.f32 %v1127, %v1422
    %v1481 = vadd.f32 %v1128, %v1427
    %v1482 = vadd.f32 %v1129, %v1430
    %v1483 = vadd.f32 %v1130, %v1435
    %v1484 = vadd.f32 %v1131, %v1438
    %v1485 = vadd.f32 %v1132, %v1443
    %v1486 = vadd.f32 %v1133, %v1446
    %v1487 = vadd.f32 %v1134, %v1451
    %v1488 = vadd.f32 %v1135, %v1454
    %1489 = vst [vmem:[#allocation2] sm:$0xff] %v1457
    %1490 = vst [vmem:[#allocation2 + $0x8] sm:$0xff] %v1458
    %1491 = vst [vmem:[#allocation2 + $0x10] sm:$0xff] %v1459
    %1492 = vst [vmem:[#allocation2 + $0x18] sm:$0xff] %v1460
    %1493 = vst [vmem:[#allocation2 + $0x20] sm:$0xff] %v1461
    %1494 = vst [vmem:[#allocation2 + $0x28] sm:$0xff] %v1462
    %1495 = vst [vmem:[#allocation2 + $0x30] sm:$0xff] %v1463
    %1496 = vst [vmem:[#allocation2 + $0x38] sm:$0xff] %v1464
    %1497 = vst [vmem:[#allocation2 + $0x40] sm:$0xff] %v1465
    %1498 = vst [vmem:[#allocation2 + $0x48] sm:$0xff] %v1466
    %1499 = vst [vmem:[#allocation2 + $0x50] sm:$0xff] %v1467
    %1500 = vst [vmem:[#allocation2 + $0x58] sm:$0xff] %v1468
    %1501 = vst [vmem:[#allocation2 + $0x60] sm:$0xff] %v1469
    %1502 = vst [vmem:[#allocation2 + $0x68] sm:$0xff] %v1470
    %1503 = vst [vmem:[#allocation2 + $0x70] sm:$0xff] %v1471
    %1504 = vst [vmem:[#allocation2 + $0x78] sm:$0xff] %v1472
    %1505 = vst [vmem:[#allocation2 + $0x80] sm:$0xff] %v1473
    %1506 = vst [vmem:[#allocation2 + $0x88] sm:$0xff] %v1474
    %1507 = vst [vmem:[#allocation2 + $0x90] sm:$0xff] %v1475
    %1508 = vst [vmem:[#allocation2 + $0x98] sm:$0xff] %v1476
    %1509 = vst [vmem:[#allocation2 + $0xa0] sm:$0xff] %v1477
    %1510 = vst [vmem:[#allocation2 + $0xa8] sm:$0xff] %v1478
    %1511 = vst [vmem:[#allocation2 + $0xb0] sm:$0xff] %v1479
    %1512 = vst [vmem:[#allocation2 + $0xb8] sm:$0xff] %v1480
    %1513 = vst [vmem:[#allocation2 + $0xc0] sm:$0xff] %v1481
    %1514 = vst [vmem:[#allocation2 + $0xc8] sm:$0xff] %v1482
    %1515 = vst [vmem:[#allocation2 + $0xd0] sm:$0xff] %v1483
    %1516 = vst [vmem:[#allocation2 + $0xd8] sm:$0xff] %v1484
    %1517 = vst [vmem:[#allocation2 + $0xe0] sm:$0xff] %v1485
    %1518 = vst [vmem:[#allocation2 + $0xe8] sm:$0xff] %v1486
    %1519 = vst [vmem:[#allocation2 + $0xf0] sm:$0xff] %v1487
    %1520 = vst [vmem:[#allocation2 + $0xf8] sm:$0xff] %v1488
    // Predicated region
    $region38: #{tpu_custom_call.1} parent=1 // pred_check
      %p1521 = pneg %p63
    $region39: #{tpu_custom_call.1} parent=1 // pred_check_branch
      %1523 = sbr.rel (%p1521) target = $region41
    $region40: #{tpu_custom_call.1} parent=1 // pred_region
      %v1524 = vld [vmem:[#allocation2] sm:$0xff]
      %v1525 = vld [vmem:[#allocation2 + $0x8] sm:$0xff]
      %v1526 = vld [vmem:[#allocation2 + $0x10] sm:$0xff]
      %v1527 = vld [vmem:[#allocation2 + $0x18] sm:$0xff]
      %v1528 = vld [vmem:[#allocation2 + $0x20] sm:$0xff]
      %v1529 = vld [vmem:[#allocation2 + $0x28] sm:$0xff]
      %v1530 = vld [vmem:[#allocation2 + $0x30] sm:$0xff]
      %v1531 = vld [vmem:[#allocation2 + $0x38] sm:$0xff]
      %v1532 = vld [vmem:[#allocation2 + $0x40] sm:$0xff]
      %v1533 = vld [vmem:[#allocation2 + $0x48] sm:$0xff]
      %v1534 = vld [vmem:[#allocation2 + $0x50] sm:$0xff]
      %v1535 = vld [vmem:[#allocation2 + $0x58] sm:$0xff]
      %v1536 = vld [vmem:[#allocation2 + $0x60] sm:$0xff]
      %v1537 = vld [vmem:[#allocation2 + $0x68] sm:$0xff]
      %v1538 = vld [vmem:[#allocation2 + $0x70] sm:$0xff]
      %v1539 = vld [vmem:[#allocation2 + $0x78] sm:$0xff]
      %v1540 = vld [vmem:[#allocation2 + $0x80] sm:$0xff]
      %v1541 = vld [vmem:[#allocation2 + $0x88] sm:$0xff]
      %v1542 = vld [vmem:[#allocation2 + $0x90] sm:$0xff]
      %v1543 = vld [vmem:[#allocation2 + $0x98] sm:$0xff]
      %v1544 = vld [vmem:[#allocation2 + $0xa0] sm:$0xff]
      %v1545 = vld [vmem:[#allocation2 + $0xa8] sm:$0xff]
      %v1546 = vld [vmem:[#allocation2 + $0xb0] sm:$0xff]
      %v1547 = vld [vmem:[#allocation2 + $0xb8] sm:$0xff]
      %v1548 = vld [vmem:[#allocation2 + $0xc0] sm:$0xff]
      %v1549 = vld [vmem:[#allocation2 + $0xc8] sm:$0xff]
      %v1550 = vld [vmem:[#allocation2 + $0xd0] sm:$0xff]
      %v1551 = vld [vmem:[#allocation2 + $0xd8] sm:$0xff]
      %v1552 = vld [vmem:[#allocation2 + $0xe0] sm:$0xff]
      %v1553 = vld [vmem:[#allocation2 + $0xe8] sm:$0xff]
      %v1554 = vld [vmem:[#allocation2 + $0xf0] sm:$0xff]
      %v1555 = vld [vmem:[#allocation2 + $0xf8] sm:$0xff]
      %v1556 = vld [vmem:[%s4] sm:$0x1]
      %v1558 = vlaneseq
      %v1559 = vshrl.u32 %v1558, 7
      %v1560 = vsub.s32 0, %v1559
      %v1561 = vrot.slane %v1556, %v1560
      %v1563 = vadd.f32 %v1524, %v1561
      %v1564 = vadd.f32 %v1525, %v1561
      %v1565 = vadd.f32 %v1526, %v1561
      %v1566 = vadd.f32 %v1527, %v1561
      %v1567 = vadd.f32 %v1528, %v1561
      %v1568 = vadd.f32 %v1529, %v1561
      %v1569 = vadd.f32 %v1530, %v1561
      %v1570 = vadd.f32 %v1531, %v1561
      %v1571 = vadd.f32 %v1532, %v1561
      %v1572 = vadd.f32 %v1533, %v1561
      %v1573 = vadd.f32 %v1534, %v1561
      %v1574 = vadd.f32 %v1535, %v1561
      %v1575 = vadd.f32 %v1536, %v1561
      %v1576 = vadd.f32 %v1537, %v1561
      %v1577 = vadd.f32 %v1538, %v1561
      %v1578 = vadd.f32 %v1539, %v1561
      %v1579 = vadd.f32 %v1540, %v1561
      %v1580 = vadd.f32 %v1541, %v1561
      %v1581 = vadd.f32 %v1542, %v1561
      %v1582 = vadd.f32 %v1543, %v1561
      %v1583 = vadd.f32 %v1544, %v1561
      %v1584 = vadd.f32 %v1545, %v1561
      %v1585 = vadd.f32 %v1546, %v1561
      %v1586 = vadd.f32 %v1547, %v1561
      %v1587 = vadd.f32 %v1548, %v1561
      %v1588 = vadd.f32 %v1549, %v1561
      %v1589 = vadd.f32 %v1550, %v1561
      %v1590 = vadd.f32 %v1551, %v1561
      %v1591 = vadd.f32 %v1552, %v1561
      %v1592 = vadd.f32 %v1553, %v1561
      %v1593 = vadd.f32 %v1554, %v1561
      %v1594 = vadd.f32 %v1555, %v1561
      %1595 = vst [vmem:[#allocation9] sm:$0xff] %v1563
      %1596 = vst [vmem:[#allocation9 + $0x8] sm:$0xff] %v1564
      %1597 = vst [vmem:[#allocation9 + $0x10] sm:$0xff] %v1565
      %1598 = vst [vmem:[#allocation9 + $0x18] sm:$0xff] %v1566
      %1599 = vst [vmem:[#allocation9 + $0x20] sm:$0xff] %v1567
      %1600 = vst [vmem:[#allocation9 + $0x28] sm:$0xff] %v1568
      %1601 = vst [vmem:[#allocation9 + $0x30] sm:$0xff] %v1569
      %1602 = vst [vmem:[#allocation9 + $0x38] sm:$0xff] %v1570
      %1603 = vst [vmem:[#allocation9 + $0x40] sm:$0xff] %v1571
      %1604 = vst [vmem:[#allocation9 + $0x48] sm:$0xff] %v1572
      %1605 = vst [vmem:[#allocation9 + $0x50] sm:$0xff] %v1573
      %1606 = vst [vmem:[#allocation9 + $0x58] sm:$0xff] %v1574
      %1607 = vst [vmem:[#allocation9 + $0x60] sm:$0xff] %v1575
      %1608 = vst [vmem:[#allocation9 + $0x68] sm:$0xff] %v1576
      %1609 = vst [vmem:[#allocation9 + $0x70] sm:$0xff] %v1577
      %1610 = vst [vmem:[#allocation9 + $0x78] sm:$0xff] %v1578
      %1611 = vst [vmem:[#allocation9 + $0x80] sm:$0xff] %v1579
      %1612 = vst [vmem:[#allocation9 + $0x88] sm:$0xff] %v1580
      %1613 = vst [vmem:[#allocation9 + $0x90] sm:$0xff] %v1581
      %1614 = vst [vmem:[#allocation9 + $0x98] sm:$0xff] %v1582
      %1615 = vst [vmem:[#allocation9 + $0xa0] sm:$0xff] %v1583
      %1616 = vst [vmem:[#allocation9 + $0xa8] sm:$0xff] %v1584
      %1617 = vst [vmem:[#allocation9 + $0xb0] sm:$0xff] %v1585
      %1618 = vst [vmem:[#allocation9 + $0xb8] sm:$0xff] %v1586
      %1619 = vst [vmem:[#allocation9 + $0xc0] sm:$0xff] %v1587
      %1620 = vst [vmem:[#allocation9 + $0xc8] sm:$0xff] %v1588
      %1621 = vst [vmem:[#allocation9 + $0xd0] sm:$0xff] %v1589
      %1622 = vst [vmem:[#allocation9 + $0xd8] sm:$0xff] %v1590
      %1623 = vst [vmem:[#allocation9 + $0xe0] sm:$0xff] %v1591
      %1624 = vst [vmem:[#allocation9 + $0xe8] sm:$0xff] %v1592
      %1625 = vst [vmem:[#allocation9 + $0xf0] sm:$0xff] %v1593
      %1626 = vst [vmem:[#allocation9 + $0xf8] sm:$0xff] %v1594
    $region41: #{tpu_custom_call.1} parent=1 // pred_fallthru
      _
    // Predicated region
    $region42: #{tpu_custom_call.1} parent=1 // pred_check
      _
    $region43: #{tpu_custom_call.1} parent=1 // pred_check_branch
      %1628 = sbr.rel (0) target = $region45
    $region44: #{tpu_custom_call.1} parent=1 // pred_region
      %s1630 = ssub.s32 4096, 4096
      %1631 = vsyncadd [#allocation5], %s1630
      %s1632 = sshll.u32 [#allocation9], 4
      %s1633 = int_to_ptr.vmem [resolvable:$true] %s1632
      %1638 = dma.vmem_to_hbm [thread:$0]  %s1633, 4096, %s5, [#allocation5], 128, 128, 8
    $region45: #{tpu_custom_call.1} parent=1 // pred_fallthru
      _
    // Predicated region
    $region46: #{tpu_custom_call.1} parent=1 // pred_check
      _
    $region47: #{tpu_custom_call.1} parent=1 // pred_check_branch
      %1640 = sbr.rel (0) target = $region49
    $region48: #{tpu_custom_call.1} parent=1 // pred_region
      %1641 = dma.done [#allocation5], 4096
    $region49: #{tpu_custom_call.1} parent=1 // pred_fallthru
      _
    %1642 = vsyncpa [#allocation4], 1
    %1643 = vsyncpa [#allocation7], 1
    %1644 = vsyncpa [#allocation5], 1

// kernel: tpu_custom_call.1
$region0: #{tpu_custom_call.1}
  #allocation0 [shape = 'u32[]', space=smem, size = 0x4, offset = 0x4, fixed_abs, tag = 'smem constant byte address 0x4 - core index']
  #allocation1 [shape = 'u32[144,128]{1,0:T(1,128)}', space=vmem, size = 0x12000, scoped, tag = 'internal scratch']
  #allocation2 [shape = 'f32[256,128]{1,0:T(8,128)}', space=vmem, size = 0x20000, scoped, tag = 'scratch operand']
  %s0 = inlined_call_operand.hbm [shape: bf16[256,128], index: 0, kind: input, shape index: {}]
  %s1 = inlined_call_operand.hbm [shape: bf16[128,256], index: 1, kind: input, shape index: {}]
  %s2 = inlined_call_operand.vmem [shape: f32[1,256], index: 2, kind: input, shape index: {}]
  %s3 = inlined_call_operand.hbm [shape: bf16[256,128], index: 3, kind: input, shape index: {}]
  %s4 = inlined_call_operand.vmem [shape: f32[1,128], index: 4, kind: input, shape index: {}]
  %s5 = inlined_call_operand.hbm [shape: f32[256,128], index: 5, kind: output, shape index: {}]
  %s6 = sld [smem:[#allocation0]]
  $region50: #{tpu_custom_call.1} parent=0
    _
  %s8 = ssub.s32 1, %s6
  %s9 = scalar_select 0, %s8, %s6
  $region1: #{tpu_custom_call.1} parent=0
    #allocation3 [shape = 'u8[65536]{0}', space=vmem, size = 0x10000, scoped, tag = 'input window, operand 0, single buffered']
    #allocation4 [shape = 's32[1]{0}', space=sflag, size = 0x4, scoped, tag = 'scoped memory for tpu_custom_call.1']
    #allocation5 [shape = 's32[1]{0}', space=sflag, size = 0x4, scoped, tag = 'scoped memory for tpu_custom_call.1']
    #allocation6 [shape = 'u8[65536]{0}', space=vmem, size = 0x10000, scoped, tag = 'input window, operand 1, single buffered']
    #allocation7 [shape = 's32[1]{0}', space=sflag, size = 0x4, scoped, tag = 'scoped memory for tpu_custom_call.1']
    #allocation8 [shape = 'u8[65536]{0}', space=vmem, size = 0x10000, scoped, tag = 'input window, operand 3, single buffered']
    #allocation9 [shape = 'u8[131072]{0}', space=vmem, size = 0x20000, scoped, tag = 'output window, operand 0, single buffered']
    %10 = vsyncpa [#allocation4], 0
    %11 = vsyncpa [#allocation7], 0
    %12 = vsyncpa [#allocation5], 0
    // Predicated region
    $region2: #{tpu_custom_call.1} parent=1 // pred_check
      _
    $region3: #{tpu_custom_call.1} parent=1 // pred_check_branch
      %14 = sbr.rel (0) target = $region5
    $region4: #{tpu_custom_call.1} parent=1 // pred_region
      %s16 = ssub.s32 2048, 2048
      %17 = vsyncadd [#allocation4], %s16
      %s18 = sshll.u32 [#allocation3], 4
      %s19 = int_to_ptr.vmem [resolvable:$true] %s18
      %24 = dma.hbm_to_vmem [thread:$0]  %s0, 2048, %s19, [#allocation4], 64, 64, 4
    $region5: #{tpu_custom_call.1} parent=1 // pred_fallthru
      _
    // Predicated region
    $region6: #{tpu_custom_call.1} parent=1 // pred_check
      _
    $region7: #{tpu_custom_call.1} parent=1 // pred_check_branch
      %26 = sbr.rel (0) target = $region9
    $region8: #{tpu_custom_call.1} parent=1 // pred_region
      %s28 = ssub.s32 2048, 2048
      %29 = vsyncadd [#allocation7], %s28
      %s30 = sshll.u32 [#allocation6], 4
      %s31 = int_to_ptr.vmem [resolvable:$true] %s30
      %36 = dma.hbm_to_vmem [thread:$0]  %s1, 2048, %s31, [#allocation7], 128, 128, 8
    $region9: #{tpu_custom_call.1} parent=1 // pred_fallthru
      _
    // Predicated region
    $region10: #{tpu_custom_call.1} parent=1 // pred_check
      _
    $region11: #{tpu_custom_call.1} parent=1 // pred_check_branch
      %38 = sbr.rel (0) target = $region13
    $region12: #{tpu_custom_call.1} parent=1 // pred_region
      _
    $region13: #{tpu_custom_call.1} parent=1 // pred_fallthru
      _
    // Predicated region
    $region14: #{tpu_custom_call.1} parent=1 // pred_check
      _
    $region15: #{tpu_custom_call.1} parent=1 // pred_check_branch
      %40 = sbr.rel (0) target = $region17
    $region16: #{tpu_custom_call.1} parent=1 // pred_region
      %s42 = ssub.s32 2048, 2048
      %43 = vsyncadd [#allocation7], %s42
      %s44 = sshll.u32 [#allocation8], 4
      %s45 = int_to_ptr.vmem [resolvable:$true] %s44
      %50 = dma.hbm_to_vmem [thread:$0]  %s3, 2048, %s45, [#allocation7], 64, 64, 4
    $region17: #{tpu_custom_call.1} parent=1 // pred_fallthru
      _
    // Predicated region
    $region18: #{tpu_custom_call.1} parent=1 // pred_check
      _
    $region19: #{tpu_custom_call.1} parent=1 // pred_check_branch
      %52 = sbr.rel (0) target = $region21
    $region20: #{tpu_custom_call.1} parent=1 // pred_region
      _
    $region21: #{tpu_custom_call.1} parent=1 // pred_fallthru
      _
    // Predicated region
    $region22: #{tpu_custom_call.1} parent=1 // pred_check
      _
    $region23: #{tpu_custom_call.1} parent=1 // pred_check_branch
      %54 = sbr.rel (0) target = $region25
    $region24: #{tpu_custom_call.1} parent=1 // pred_region
      %55 = dma.done [#allocation4], 2048
    $region25: #{tpu_custom_call.1} parent=1 // pred_fallthru
      _
    // Predicated region
    $region26: #{tpu_custom_call.1} parent=1 // pred_check
      _
    $region27: #{tpu_custom_call.1} parent=1 // pred_check_branch
      %57 = sbr.rel (0) target = $region29
    $region28: #{tpu_custom_call.1} parent=1 // pred_region
      %58 = dma.done [#allocation7], 2048
    $region29: #{tpu_custom_call.1} parent=1 // pred_fallthru
      _
    // Predicated region
    $region30: #{tpu_custom_call.1} parent=1 // pred_check
      _
    $region31: #{tpu_custom_call.1} parent=1 // pred_check_branch
      %60 = sbr.rel (0) target = $region33
    $region32: #{tpu_custom_call.1} parent=1 // pred_region
      %61 = dma.done [#allocation7], 2048
    $region33: #{tpu_custom_call.1} parent=1 // pred_fallthru
      _
    %p63 = scmp.eq.s32.totalorder 0, 0
    // Predicated region
    $region34: #{tpu_custom_call.1} parent=1 // pred_check
      %p64 = pneg %p63
    $region35: #{tpu_custom_call.1} parent=1 // pred_check_branch
      %66 = sbr.rel (%p64) target = $region37
    $region36: #{tpu_custom_call.1} parent=1 // pred_region
      %67 = vst [vmem:[#allocation2] sm:$0xff] 0.0
      %68 = vst [vmem:[#allocation2 + $0x8] sm:$0xff] 0.0
      %69 = vst [vmem:[#allocation2 + $0x10] sm:$0xff] 0.0
      %70 = vst [vmem:[#allocation2 + $0x18] sm:$0xff] 0.0
      %71 = vst [vmem:[#allocation2 + $0x20] sm:$0xff] 0.0
      %72 = vst [vmem:[#allocation2 + $0x28] sm:$0xff] 0.0
      %73 = vst [vmem:[#allocation2 + $0x30] sm:$0xff] 0.0
      %74 = vst [vmem:[#allocation2 + $0x38] sm:$0xff] 0.0
      %75 = vst [vmem:[#allocation2 + $0x40] sm:$0xff] 0.0
      %76 = vst [vmem:[#allocation2 + $0x48] sm:$0xff] 0.0
      %77 = vst [vmem:[#allocation2 + $0x50] sm:$0xff] 0.0
      %78 = vst [vmem:[#allocation2 + $0x58] sm:$0xff] 0.0
      %79 = vst [vmem:[#allocation2 + $0x60] sm:$0xff] 0.0
      %80 = vst [vmem:[#allocation2 + $0x68] sm:$0xff] 0.0
      %81 = vst [vmem:[#allocation2 + $0x70] sm:$0xff] 0.0
      %82 = vst [vmem:[#allocation2 + $0x78] sm:$0xff] 0.0
      %83 = vst [vmem:[#allocation2 + $0x80] sm:$0xff] 0.0
      %84 = vst [vmem:[#allocation2 + $0x88] sm:$0xff] 0.0
      %85 = vst [vmem:[#allocation2 + $0x90] sm:$0xff] 0.0
      %86 = vst [vmem:[#allocation2 + $0x98] sm:$0xff] 0.0
      %87 = vst [vmem:[#allocation2 + $0xa0] sm:$0xff] 0.0
      %88 = vst [vmem:[#allocation2 + $0xa8] sm:$0xff] 0.0
      %89 = vst [vmem:[#allocation2 + $0xb0] sm:$0xff] 0.0
      %90 = vst [vmem:[#allocation2 + $0xb8] sm:$0xff] 0.0
      %91 = vst [vmem:[#allocation2 + $0xc0] sm:$0xff] 0.0
      %92 = vst [vmem:[#allocation2 + $0xc8] sm:$0xff] 0.0
      %93 = vst [vmem:[#allocation2 + $0xd0] sm:$0xff] 0.0
      %94 = vst [vmem:[#allocation2 + $0xd8] sm:$0xff] 0.0
      %95 = vst [vmem:[#allocation2 + $0xe0] sm:$0xff] 0.0
      %96 = vst [vmem:[#allocation2 + $0xe8] sm:$0xff] 0.0
      %97 = vst [vmem:[#allocation2 + $0xf0] sm:$0xff] 0.0
      %98 = vst [vmem:[#allocation2 + $0xf8] sm:$0xff] 0.0
    $region37: #{tpu_custom_call.1} parent=1 // pred_fallthru
      _
    %v99 = vld [vmem:[#allocation3] sm:$0xf]
    %v100 = vld [vmem:[#allocation3 + $0x4] sm:$0xf]
    %v101 = vld [vmem:[#allocation3 + $0x8] sm:$0xf]
    %v102 = vld [vmem:[#allocation3 + $0xc] sm:$0xf]
    %v103 = vld [vmem:[#allocation3 + $0x10] sm:$0xf]
    %v104 = vld [vmem:[#allocation3 + $0x14] sm:$0xf]
    %v105 = vld [vmem:[#allocation3 + $0x18] sm:$0xf]
    %v106 = vld [vmem:[#allocation3 + $0x1c] sm:$0xf]
    %v107 = vld [vmem:[#allocation3 + $0x20] sm:$0xf]
    %v108 = vld [vmem:[#allocation3 + $0x24] sm:$0xf]
    %v109 = vld [vmem:[#allocation3 + $0x28] sm:$0xf]
    %v110 = vld [vmem:[#allocation3 + $0x2c] sm:$0xf]
    %v111 = vld [vmem:[#allocation3 + $0x30] sm:$0xf]
    %v112 = vld [vmem:[#allocation3 + $0x34] sm:$0xf]
    %v113 = vld [vmem:[#allocation3 + $0x38] sm:$0xf]
    %v114 = vld [vmem:[#allocation3 + $0x3c] sm:$0xf]
    %v115 = vld [vmem:[#allocation3 + $0x40] sm:$0xf]
    %v116 = vld [vmem:[#allocation3 + $0x44] sm:$0xf]
    %v117 = vld [vmem:[#allocation3 + $0x48] sm:$0xf]
    %v118 = vld [vmem:[#allocation3 + $0x4c] sm:$0xf]
    %v119 = vld [vmem:[#allocation3 + $0x50] sm:$0xf]
    %v120 = vld [vmem:[#allocation3 + $0x54] sm:$0xf]
    %v121 = vld [vmem:[#allocation3 + $0x58] sm:$0xf]
    %v122 = vld [vmem:[#allocation3 + $0x5c] sm:$0xf]
    %v123 = vld [vmem:[#allocation3 + $0x60] sm:$0xf]
    %v124 = vld [vmem:[#allocation3 + $0x64] sm:$0xf]
    %v125 = vld [vmem:[#allocation3 + $0x68] sm:$0xf]
    %v126 = vld [vmem:[#allocation3 + $0x6c] sm:$0xf]
    %v127 = vld [vmem:[#allocation3 + $0x70] sm:$0xf]
    %v128 = vld [vmem:[#allocation3 + $0x74] sm:$0xf]
    %v129 = vld [vmem:[#allocation3 + $0x78] sm:$0xf]
    %v130 = vld [vmem:[#allocation3 + $0x7c] sm:$0xf]
    %v131 = vld [vmem:[#allocation6] sm:$0xff]
    %v132 = vld [vmem:[#allocation6 + $0x8] sm:$0xff]
    %v133 = vld [vmem:[#allocation6 + $0x10] sm:$0xff]
    %v134 = vld [vmem:[#allocation6 + $0x18] sm:$0xff]
    %v135 = vld [vmem:[#allocation6 + $0x20] sm:$0xff]
    %v136 = vld [vmem:[#allocation6 + $0x28] sm:$0xff]
    %v137 = vld [vmem:[#allocation6 + $0x30] sm:$0xff]
    %v138 = vld [vmem:[#allocation6 + $0x38] sm:$0xff]
    %v139 = vld [vmem:[#allocation6 + $0x40] sm:$0xff]
    %v140 = vld [vmem:[#allocation6 + $0x48] sm:$0xff]
    %v141 = vld [vmem:[#allocation6 + $0x50] sm:$0xff]
    %v142 = vld [vmem:[#allocation6 + $0x58] sm:$0xff]
    %v143 = vld [vmem:[#allocation6 + $0x60] sm:$0xff]
    %v144 = vld [vmem:[#allocation6 + $0x68] sm:$0xff]
    %v145 = vld [vmem:[#allocation6 + $0x70] sm:$0xff]
    %v146 = vld [vmem:[#allocation6 + $0x78] sm:$0xff]
    %v147 = vld [vmem:[%s2] sm:$0x3]
    %v149 = vlaneseq
    %v150 = vshrl.u32 %v149, 7
    %v151 = vsub.s32 0, %v150
    %v152 = vrot.slane %v147, %v151
    %v153 = vlaneseq
    %v154 = vshrl.u32 %v153, 7
    %v155 = vsub.s32 1, %v154
    %v156 = vrot.slane %v147, %v155
    %v191 = vunpack.c.l.b16 %v99
    %v192 = vunpack.c.l.b16 %v100
    %v193 = vunpack.c.l.b16 %v101
    %v194 = vunpack.c.l.b16 %v102
    %v195 = vunpack.c.l.b16 %v103
    %v196 = vunpack.c.l.b16 %v104
    %v197 = vunpack.c.l.b16 %v105
    %v198 = vunpack.c.l.b16 %v106
    %v199 = vunpack.c.l.b16 %v107
    %v200 = vunpack.c.l.b16 %v108
    %v201 = vunpack.c.l.b16 %v109
    %v202 = vunpack.c.l.b16 %v110
    %v203 = vunpack.c.l.b16 %v111
    %v204 = vunpack.c.l.b16 %v112
    %v205 = vunpack.c.l.b16 %v113
    %v206 = vunpack.c.l.b16 %v114
    %v207 = vunpack.c.l.b16 %v115
    %v208 = vunpack.c.l.b16 %v116
    %v209 = vunpack.c.l.b16 %v117
    %v210 = vunpack.c.l.b16 %v118
    %v211 = vunpack.c.l.b16 %v119
    %v212 = vunpack.c.l.b16 %v120
    %v213 = vunpack.c.l.b16 %v121
    %v214 = vunpack.c.l.b16 %v122
    %v215 = vunpack.c.l.b16 %v123
    %v216 = vunpack.c.l.b16 %v124
    %v217 = vunpack.c.l.b16 %v125
    %v218 = vunpack.c.l.b16 %v126
    %v219 = vunpack.c.l.b16 %v127
    %v220 = vunpack.c.l.b16 %v128
    %v221 = vunpack.c.l.b16 %v129
    %v222 = vunpack.c.l.b16 %v130
    %v223 = vpack.c.b16 %v192, %v191
    %v224 = vpack.c.b16 %v194, %v193
    %v225 = vpack.c.b16 %v196, %v195
    %v226 = vpack.c.b16 %v198, %v197
    %v227 = vpack.c.b16 %v200, %v199
    %v228 = vpack.c.b16 %v202, %v201
    %v229 = vpack.c.b16 %v204, %v203
    %v230 = vpack.c.b16 %v206, %v205
    %v231 = vpack.c.b16 %v208, %v207
    %v232 = vpack.c.b16 %v210, %v209
    %v233 = vpack.c.b16 %v212, %v211
    %v234 = vpack.c.b16 %v214, %v213
    %v235 = vpack.c.b16 %v216, %v215
    %v236 = vpack.c.b16 %v218, %v217
    %v237 = vpack.c.b16 %v220, %v219
    %v238 = vpack.c.b16 %v222, %v221
    %v271 = vunpack.c.l.b16 %v131
    %v272 = vunpack.c.h.b16 %v131
    %v273 = vunpack.c.l.b16 %v132
    %v274 = vunpack.c.h.b16 %v132
    %v275 = vunpack.c.l.b16 %v133
    %v276 = vunpack.c.h.b16 %v133
    %v277 = vunpack.c.l.b16 %v134
    %v278 = vunpack.c.h.b16 %v134
    %v279 = vunpack.c.l.b16 %v135
    %v280 = vunpack.c.h.b16 %v135
    %v281 = vunpack.c.l.b16 %v136
    %v282 = vunpack.c.h.b16 %v136
    %v283 = vunpack.c.l.b16 %v137
    %v284 = vunpack.c.h.b16 %v137
    %v285 = vunpack.c.l.b16 %v138
    %v286 = vunpack.c.h.b16 %v138
    %v287 = vunpack.c.l.b16 %v139
    %v288 = vunpack.c.h.b16 %v139
    %v289 = vunpack.c.l.b16 %v140
    %v290 = vunpack.c.h.b16 %v140
    %v291 = vunpack.c.l.b16 %v141
    %v292 = vunpack.c.h.b16 %v141
    %v293 = vunpack.c.l.b16 %v142
    %v294 = vunpack.c.h.b16 %v142
    %v295 = vunpack.c.l.b16 %v143
    %v296 = vunpack.c.h.b16 %v143
    %v297 = vunpack.c.l.b16 %v144
    %v298 = vunpack.c.h.b16 %v144
    %v299 = vunpack.c.l.b16 %v145
    %v300 = vunpack.c.h.b16 %v145
    %v301 = vunpack.c.l.b16 %v146
    %v302 = vunpack.c.h.b16 %v146
    %v303 = vpack.c.b16 %v273, %v271
    %v304 = vpack.c.b16 %v274, %v272
    %v305 = vpack.c.b16 %v277, %v275
    %v306 = vpack.c.b16 %v278, %v276
    %v307 = vpack.c.b16 %v281, %v279
    %v308 = vpack.c.b16 %v282, %v280
    %v309 = vpack.c.b16 %v285, %v283
    %v310 = vpack.c.b16 %v286, %v284
    %v311 = vpack.c.b16 %v289, %v287
    %v312 = vpack.c.b16 %v290, %v288
    %v313 = vpack.c.b16 %v293, %v291
    %v314 = vpack.c.b16 %v294, %v292
    %v315 = vpack.c.b16 %v297, %v295
    %v316 = vpack.c.b16 %v298, %v296
    %v317 = vpack.c.b16 %v301, %v299
    %v318 = vpack.c.b16 %v302, %v300
    %335 = vmatprep.subr.bf16.mxu0 %v304
    %336 = vmatpush1.bf16.msra.mxu0 %v303
    %337 = vmatprep.subr.bf16.mxu0 %v306
    %338 = vmatpush1.bf16.msra.mxu0 %v305
    %339 = vmatprep.subr.bf16.mxu0 %v308
    %340 = vmatpush1.bf16.msra.mxu0 %v307
    %341 = vmatprep.subr.bf16.mxu0 %v310
    %342 = vmatpush1.bf16.msra.mxu0 %v309
    %343 = vmatprep.subr.bf16.mxu0 %v312
    %344 = vmatpush1.bf16.msra.mxu0 %v311
    %345 = vmatprep.subr.bf16.mxu0 %v314
    %346 = vmatpush1.bf16.msra.mxu0 %v313
    %347 = vmatprep.subr.bf16.mxu0 %v316
    %348 = vmatpush1.bf16.msra.mxu0 %v315
    %349 = vmatprep.subr.bf16.mxu0 %v318
    %350 = vmatpush1.bf16.msra.mxu0 %v317
    %351 = vmatprep.subr.bf16.mxu0 0
    %352 = vmatpush1.bf16.msra.mxu0 0
    %353 = vmatprep.subr.bf16.mxu0 0
    %354 = vmatpush1.bf16.msra.mxu0 0
    %355 = vmatprep.subr.bf16.mxu0 0
    %356 = vmatpush1.bf16.msra.mxu0 0
    %357 = vmatprep.subr.bf16.mxu0 0
    %358 = vmatpush1.bf16.msra.mxu0 0
    %359 = vmatprep.subr.bf16.mxu0 0
    %360 = vmatpush1.bf16.msra.mxu0 0
    %361 = vmatprep.subr.bf16.mxu0 0
    %362 = vmatpush1.bf16.msra.mxu0 0
    %363 = vmatprep.subr.bf16.mxu0 0
    %364 = vmatpush1.bf16.msra.mxu0 0
    %365 = vmatprep.subr.bf16.mxu0 0
    %366 = vmatpush1.bf16.msra.mxu0 0
    %367 = vmatprep.mubr.bf16.mxu0 0
    %368 = vmatmul.mubr.bf16.gmra.mrb[0].mxu0 %v223
    %v369 = vpop.f32.mrb[0].mxu0
    %v370 = vadd.f32 %v152, %v369
    %v371 = vpop.f32.mrb[0].mxu0
    %v372 = vadd.f32 %v156, %v371
    %v373 = vpop.f32.mrb[0].mxu0
    %v374 = vadd.f32 %v152, %v373
    %v375 = vpop.f32.mrb[0].mxu0
    %v376 = vadd.f32 %v156, %v375
    %377 = vmatprep.mubr.bf16.mxu0 0
    %378 = vmatmul.mubr.bf16.gmra.mrb[0].mxu0 %v224
    %v379 = vpop.f32.mrb[0].mxu0
    %v380 = vadd.f32 %v152, %v379
    %v381 = vpop.f32.mrb[0].mxu0
    %v382 = vadd.f32 %v156, %v381
    %v383 = vpop.f32.mrb[0].mxu0
    %v384 = vadd.f32 %v152, %v383
    %v385 = vpop.f32.mrb[0].mxu0
    %v386 = vadd.f32 %v156, %v385
    %387 = vmatprep.mubr.bf16.mxu0 0
    %388 = vmatmul.mubr.bf16.gmra.mrb[0].mxu0 %v225
    %v389 = vpop.f32.mrb[0].mxu0
    %v390 = vadd.f32 %v152, %v389
    %v391 = vpop.f32.mrb[0].mxu0
    %v392 = vadd.f32 %v156, %v391
    %v393 = vpop.f32.mrb[0].mxu0
    %v394 = vadd.f32 %v152, %v393
    %v395 = vpop.f32.mrb[0].mxu0
    %v396 = vadd.f32 %v156, %v395
    %397 = vmatprep.mubr.bf16.mxu0 0
    %398 = vmatmul.mubr.bf16.gmra.mrb[0].mxu0 %v226
    %v399 = vpop.f32.mrb[0].mxu0
    %v400 = vadd.f32 %v152, %v399
    %v401 = vpop.f32.mrb[0].mxu0
    %v402 = vadd.f32 %v156, %v401
    %v403 = vpop.f32.mrb[0].mxu0
    %v404 = vadd.f32 %v152, %v403
    %v405 = vpop.f32.mrb[0].mxu0
    %v406 = vadd.f32 %v156, %v405
    %407 = vmatprep.mubr.bf16.mxu0 0
    %408 = vmatmul.mubr.bf16.gmra.mrb[0].mxu0 %v227
    %v409 = vpop.f32.mrb[0].mxu0
    %v410 = vadd.f32 %v152, %v409
    %v411 = vpop.f32.mrb[0].mxu0
    %v412 = vadd.f32 %v156, %v411
    %v413 = vpop.f32.mrb[0].mxu0
    %v414 = vadd.f32 %v152, %v413
    %v415 = vpop.f32.mrb[0].mxu0
    %v416 = vadd.f32 %v156, %v415
    %417 = vmatprep.mubr.bf16.mxu0 0
    %418 = vmatmul.mubr.bf16.gmra.mrb[0].mxu0 %v228
    %v419 = vpop.f32.mrb[0].mxu0
    %v420 = vadd.f32 %v152, %v419
    %v421 = vpop.f32.mrb[0].mxu0
    %v422 = vadd.f32 %v156, %v421
    %v423 = vpop.f32.mrb[0].mxu0
    %v424 = vadd.f32 %v152, %v423
    %v425 = vpop.f32.mrb[0].mxu0
    %v426 = vadd.f32 %v156, %v425
    %427 = vmatprep.mubr.bf16.mxu0 0
    %428 = vmatmul.mubr.bf16.gmra.mrb[0].mxu0 %v229
    %v429 = vpop.f32.mrb[0].mxu0
    %v430 = vadd.f32 %v152, %v429
    %v431 = vpop.f32.mrb[0].mxu0
    %v432 = vadd.f32 %v156, %v431
    %v433 = vpop.f32.mrb[0].mxu0
    %v434 = vadd.f32 %v152, %v433
    %v435 = vpop.f32.mrb[0].mxu0
    %v436 = vadd.f32 %v156, %v435
    %437 = vmatprep.mubr.bf16.mxu0 0
    %438 = vmatmul.mubr.bf16.gmra.mrb[0].mxu0 %v230
    %v439 = vpop.f32.mrb[0].mxu0
    %v440 = vadd.f32 %v152, %v439
    %v441 = vpop.f32.mrb[0].mxu0
    %v442 = vadd.f32 %v156, %v441
    %v443 = vpop.f32.mrb[0].mxu0
    %v444 = vadd.f32 %v152, %v443
    %v445 = vpop.f32.mrb[0].mxu0
    %v446 = vadd.f32 %v156, %v445
    %447 = vmatprep.mubr.bf16.mxu0 0
    %448 = vmatmul.mubr.bf16.gmra.mrb[0].mxu0 %v231
    %v449 = vpop.f32.mrb[0].mxu0
    %v450 = vadd.f32 %v152, %v449
    %v451 = vpop.f32.mrb[0].mxu0
    %v452 = vadd.f32 %v156, %v451
    %v453 = vpop.f32.mrb[0].mxu0
    %v454 = vadd.f32 %v152, %v453
    %v455 = vpop.f32.mrb[0].mxu0
    %v456 = vadd.f32 %v156, %v455
    %457 = vmatprep.mubr.bf16.mxu0 0
    %458 = vmatmul.mubr.bf16.gmra.mrb[0].mxu0 %v232
    %v459 = vpop.f32.mrb[0].mxu0
    %v460 = vadd.f32 %v152, %v459
    %v461 = vpop.f32.mrb[0].mxu0
    %v462 = vadd.f32 %v156, %v461
    %v463 = vpop.f32.mrb[0].mxu0
    %v464 = vadd.f32 %v152, %v463
    %v465 = vpop.f32.mrb[0].mxu0
    %v466 = vadd.f32 %v156, %v465
    %467 = vmatprep.mubr.bf16.mxu0 0
    %468 = vmatmul.mubr.bf16.gmra.mrb[0].mxu0 %v233
    %v469 = vpop.f32.mrb[0].mxu0
    %v470 = vadd.f32 %v152, %v469
    %v471 = vpop.f32.mrb[0].mxu0
    %v472 = vadd.f32 %v156, %v471
    %v473 = vpop.f32.mrb[0].mxu0
    %v474 = vadd.f32 %v152, %v473
    %v475 = vpop.f32.mrb[0].mxu0
    %v476 = vadd.f32 %v156, %v475
    %477 = vmatprep.mubr.bf16.mxu0 0
    %478 = vmatmul.mubr.bf16.gmra.mrb[0].mxu0 %v234
    %v479 = vpop.f32.mrb[0].mxu0
    %v480 = vadd.f32 %v152, %v479
    %v481 = vpop.f32.mrb[0].mxu0
    %v482 = vadd.f32 %v156, %v481
    %v483 = vpop.f32.mrb[0].mxu0
    %v484 = vadd.f32 %v152, %v483
    %v485 = vpop.f32.mrb[0].mxu0
    %v486 = vadd.f32 %v156, %v485
    %487 = vmatprep.mubr.bf16.mxu0 0
    %488 = vmatmul.mubr.bf16.gmra.mrb[0].mxu0 %v235
    %v489 = vpop.f32.mrb[0].mxu0
    %v490 = vadd.f32 %v152, %v489
    %v491 = vpop.f32.mrb[0].mxu0
    %v492 = vadd.f32 %v156, %v491
    %v493 = vpop.f32.mrb[0].mxu0
    %v494 = vadd.f32 %v152, %v493
    %v495 = vpop.f32.mrb[0].mxu0
    %v496 = vadd.f32 %v156, %v495
    %497 = vmatprep.mubr.bf16.mxu0 0
    %498 = vmatmul.mubr.bf16.gmra.mrb[0].mxu0 %v236
    %v499 = vpop.f32.mrb[0].mxu0
    %v500 = vadd.f32 %v152, %v499
    %v501 = vpop.f32.mrb[0].mxu0
    %v502 = vadd.f32 %v156, %v501
    %v503 = vpop.f32.mrb[0].mxu0
    %v504 = vadd.f32 %v152, %v503
    %v505 = vpop.f32.mrb[0].mxu0
    %v506 = vadd.f32 %v156, %v505
    %507 = vmatprep.mubr.bf16.mxu0 0
    %508 = vmatmul.mubr.bf16.gmra.mrb[0].mxu0 %v237
    %v509 = vpop.f32.mrb[0].mxu0
    %v510 = vadd.f32 %v152, %v509
    %v511 = vpop.f32.mrb[0].mxu0
    %v512 = vadd.f32 %v156, %v511
    %v513 = vpop.f32.mrb[0].mxu0
    %v514 = vadd.f32 %v152, %v513
    %v515 = vpop.f32.mrb[0].mxu0
    %v516 = vadd.f32 %v156, %v515
    %517 = vmatprep.mubr.bf16.mxu0 0
    %518 = vmatmul.mubr.bf16.gmra.mrb[0].mxu0 %v238
    %v519 = vpop.f32.mrb[0].mxu0
    %v520 = vadd.f32 %v152, %v519
    %v521 = vpop.f32.mrb[0].mxu0
    %v522 = vadd.f32 %v156, %v521
    %v523 = vpop.f32.mrb[0].mxu0
    %v524 = vadd.f32 %v152, %v523
    %v525 = vpop.f32.mrb[0].mxu0
    %v526 = vadd.f32 %v156, %v525
    %527 = vdwg.mxu0
    %v528 = vmul.f32 %v370, 0.044715
    %v529 = vmul.f32 %v372, 0.044715
    %v530 = vmul.f32 %v374, 0.044715
    %v531 = vmul.f32 %v376, 0.044715
    %v532 = vmul.f32 %v380, 0.044715
    %v533 = vmul.f32 %v382, 0.044715
    %v534 = vmul.f32 %v384, 0.044715
    %v535 = vmul.f32 %v386, 0.044715
    %v536 = vmul.f32 %v390, 0.044715
    %v537 = vmul.f32 %v392, 0.044715
    %v538 = vmul.f32 %v394, 0.044715
    %v539 = vmul.f32 %v396, 0.044715
    %v540 = vmul.f32 %v400, 0.044715
    %v541 = vmul.f32 %v402, 0.044715
    %v542 = vmul.f32 %v404, 0.044715
    %v543 = vmul.f32 %v406, 0.044715
    %v544 = vmul.f32 %v410, 0.044715
    %v545 = vmul.f32 %v412, 0.044715
    %v546 = vmul.f32 %v414, 0.044715
    %v547 = vmul.f32 %v416, 0.044715
    %v548 = vmul.f32 %v420, 0.044715
    %v549 = vmul.f32 %v422, 0.044715
    %v550 = vmul.f32 %v424, 0.044715
    %v551 = vmul.f32 %v426, 0.044715
    %v552 = vmul.f32 %v430, 0.044715
    %v553 = vmul.f32 %v432, 0.044715
    %v554 = vmul.f32 %v434, 0.044715
    %v555 = vmul.f32 %v436, 0.044715
    %v556 = vmul.f32 %v440, 0.044715
    %v557 = vmul.f32 %v442, 0.044715
    %v558 = vmul.f32 %v444, 0.044715
    %v559 = vmul.f32 %v446, 0.044715
    %v560 = vmul.f32 %v450, 0.044715
    %v561 = vmul.f32 %v452, 0.044715
    %v562 = vmul.f32 %v454, 0.044715
    %v563 = vmul.f32 %v456, 0.044715
    %v564 = vmul.f32 %v460, 0.044715
    %v565 = vmul.f32 %v462, 0.044715
    %v566 = vmul.f32 %v464, 0.044715
    %v567 = vmul.f32 %v466, 0.044715
    %v568 = vmul.f32 %v470, 0.044715
    %v569 = vmul.f32 %v472, 0.044715
    %v570 = vmul.f32 %v474, 0.044715
    %v571 = vmul.f32 %v476, 0.044715
    %v572 = vmul.f32 %v480, 0.044715
    %v573 = vmul.f32 %v482, 0.044715
    %v574 = vmul.f32 %v484, 0.044715
    %v575 = vmul.f32 %v486, 0.044715
    %v576 = vmul.f32 %v490, 0.044715
    %v577 = vmul.f32 %v492, 0.044715
    %v578 = vmul.f32 %v494, 0.044715
    %v579 = vmul.f32 %v496, 0.044715
    %v580 = vmul.f32 %v500, 0.044715
    %v581 = vmul.f32 %v502, 0.044715
    %v582 = vmul.f32 %v504, 0.044715
    %v583 = vmul.f32 %v506, 0.044715
    %v584 = vmul.f32 %v510, 0.044715
    %v585 = vmul.f32 %v512, 0.044715
    %v586 = vmul.f32 %v514, 0.044715
    %v587 = vmul.f32 %v516, 0.044715
    %v588 = vmul.f32 %v520, 0.044715
    %v589 = vmul.f32 %v522, 0.044715
    %v590 = vmul.f32 %v524, 0.044715
    %v591 = vmul.f32 %v526, 0.044715
    %v592 = vmul.f32 %v528, %v370
    %v593 = vmul.f32 %v529, %v372
    %v594 = vmul.f32 %v530, %v374
    %v595 = vmul.f32 %v531, %v376
    %v596 = vmul.f32 %v532, %v380
    %v597 = vmul.f32 %v533, %v382
    %v598 = vmul.f32 %v534, %v384
    %v599 = vmul.f32 %v535, %v386
    %v600 = vmul.f32 %v536, %v390
    %v601 = vmul.f32 %v537, %v392
    %v602 = vmul.f32 %v538, %v394
    %v603 = vmul.f32 %v539, %v396
    %v604 = vmul.f32 %v540, %v400
    %v605 = vmul.f32 %v541, %v402
    %v606 = vmul.f32 %v542, %v404
    %v607 = vmul.f32 %v543, %v406
    %v608 = vmul.f32 %v544, %v410
    %v609 = vmul.f32 %v545, %v412
    %v610 = vmul.f32 %v546, %v414
    %v611 = vmul.f32 %v547, %v416
    %v612 = vmul.f32 %v548, %v420
    %v613 = vmul.f32 %v549, %v422
    %v614 = vmul.f32 %v550, %v424
    %v615 = vmul.f32 %v551, %v426
    %v616 = vmul.f32 %v552, %v430
    %v617 = vmul.f32 %v553, %v432
    %v618 = vmul.f32 %v554, %v434
    %v619 = vmul.f32 %v555, %v436
    %v620 = vmul.f32 %v556, %v440
    %v621 = vmul.f32 %v557, %v442
    %v622 = vmul.f32 %v558, %v444
    %v623 = vmul.f32 %v559, %v446
    %v624 = vmul.f32 %v560, %v450
    %v625 = vmul.f32 %v561, %v452
    %v626 = vmul.f32 %v562, %v454
    %v627 = vmul.f32 %v563, %v456
    %v628 = vmul.f32 %v564, %v460
    %v629 = vmul.f32 %v565, %v462
    %v630 = vmul.f32 %v566, %v464
    %v631 = vmul.f32 %v567, %v466
    %v632 = vmul.f32 %v568, %v470
    %v633 = vmul.f32 %v569, %v472
    %v634 = vmul.f32 %v570, %v474
    %v635 = vmul.f32 %v571, %v476
    %v636 = vmul.f32 %v572, %v480
    %v637 = vmul.f32 %v573, %v482
    %v638 = vmul.f32 %v574, %v484
    %v639 = vmul.f32 %v575, %v486
    %v640 = vmul.f32 %v576, %v490
    %v641 = vmul.f32 %v577, %v492
    %v642 = vmul.f32 %v578, %v494
    %v643 = vmul.f32 %v579, %v496
    %v644 = vmul.f32 %v580, %v500
    %v645 = vmul.f32 %v581, %v502
    %v646 = vmul.f32 %v582, %v504
    %v647 = vmul.f32 %v583, %v506
    %v648 = vmul.f32 %v584, %v510
    %v649 = vmul.f32 %v585, %v512
    %v650 = vmul.f32 %v586, %v514
    %v651 = vmul.f32 %v587, %v516
    %v652 = vmul.f32 %v588, %v520
    %v653 = vmul.f32 %v589, %v522
    %v654 = vmul.f32 %v590, %v524
    %v655 = vmul.f32 %v591, %v526
    %v656 = vadd.f32 %v592, 1.0
    %v657 = vadd.f32 %v593, 1.0
    %v658 = vadd.f32 %v594, 1.0
    %v659 = vadd.f32 %v595, 1.0
    %v660 = vadd.f32 %v596, 1.0
    %v661 = vadd.f32 %v597, 1.0
    %v662 = vadd.f32 %v598, 1.0
    %v663 = vadd.f32 %v599, 1.0
    %v664 = vadd.f32 %v600, 1.0
    %v665 = vadd.f32 %v601, 1.0
    %v666 = vadd.f32 %v602, 1.0
    %v667 = vadd.f32 %v603, 1.0
    %v668 = vadd.f32 %v604, 1.0
    %v669 = vadd.f32 %v605, 1.0
    %v670 = vadd.f32 %v606, 1.0
    %v671 = vadd.f32 %v607, 1.0
    %v672 = vadd.f32 %v608, 1.0
    %v673 = vadd.f32 %v609, 1.0
    %v674 = vadd.f32 %v610, 1.0
    %v675 = vadd.f32 %v611, 1.0
    %v676 = vadd.f32 %v612, 1.0
    %v677 = vadd.f32 %v613, 1.0
    %v678 = vadd.f32 %v614, 1.0
    %v679 = vadd.f32 %v615, 1.0
    %v680 = vadd.f32 %v616, 1.0
    %v681 = vadd.f32 %v617, 1.0
    %v682 = vadd.f32 %v618, 1.0
    %v683 = vadd.f32 %v619, 1.0
    %v684 = vadd.f32 %v620, 1.0
    %v685 = vadd.f32 %v621, 1.0
    %v686 = vadd.f32 %v622, 1.0
    %v687 = vadd.f32 %v623, 1.0
    %v688 = vadd.f32 %v624, 1.0
    %v689 = vadd.f32 %v625, 1.0
    %v690 = vadd.f32 %v626, 1.0
    %v691 = vadd.f32 %v627, 1.0
    %v692 = vadd.f32 %v628, 1.0
    %v693 = vadd.f32 %v629, 1.0
    %v694 = vadd.f32 %v630, 1.0
    %v695 = vadd.f32 %v631, 1.0
    %v696 = vadd.f32 %v632, 1.0
    %v697 = vadd.f32 %v633, 1.0
    %v698 = vadd.f32 %v634, 1.0
    %v699 = vadd.f32 %v635, 1.0
    %v700 = vadd.f32 %v636, 1.0
    %v701 = vadd.f32 %v637, 1.0
    %v702 = vadd.f32 %v638, 1.0
    %v703 = vadd.f32 %v639, 1.0
    %v704 = vadd.f32 %v640, 1.0
    %v705 = vadd.f32 %v641, 1.0
    %v706 = vadd.f32 %v642, 1.0
    %v707 = vadd.f32 %v643, 1.0
    %v708 = vadd.f32 %v644, 1.0
    %v709 = vadd.f32 %v645, 1.0
    %v710 = vadd.f32 %v646, 1.0
    %v711 = vadd.f32 %v647, 1.0
    %v712 = vadd.f32 %v648, 1.0
    %v713 = vadd.f32 %v649, 1.0
    %v714 = vadd.f32 %v650, 1.0
    %v715 = vadd.f32 %v651, 1.0
    %v716 = vadd.f32 %v652, 1.0
    %v717 = vadd.f32 %v653, 1.0
    %v718 = vadd.f32 %v654, 1.0
    %v719 = vadd.f32 %v655, 1.0
    %v720 = vmul.f32 %v370, %v656
    %v721 = vmul.f32 %v372, %v657
    %v722 = vmul.f32 %v374, %v658
    %v723 = vmul.f32 %v376, %v659
    %v724 = vmul.f32 %v380, %v660
    %v725 = vmul.f32 %v382, %v661
    %v726 = vmul.f32 %v384, %v662
    %v727 = vmul.f32 %v386, %v663
    %v728 = vmul.f32 %v390, %v664
    %v729 = vmul.f32 %v392, %v665
    %v730 = vmul.f32 %v394, %v666
    %v731 = vmul.f32 %v396, %v667
    %v732 = vmul.f32 %v400, %v668
    %v733 = vmul.f32 %v402, %v669
    %v734 = vmul.f32 %v404, %v670
    %v735 = vmul.f32 %v406, %v671
    %v736 = vmul.f32 %v410, %v672
    %v737 = vmul.f32 %v412, %v673
    %v738 = vmul.f32 %v414, %v674
    %v739 = vmul.f32 %v416, %v675
    %v740 = vmul.f32 %v420, %v676
    %v741 = vmul.f32 %v422, %v677
    %v742 = vmul.f32 %v424, %v678
    %v743 = vmul.f32 %v426, %v679
    %v744 = vmul.f32 %v430, %v680
    %v745 = vmul.f32 %v432, %v681
    %v746 = vmul.f32 %v434, %v682
    %v747 = vmul.f32 %v436, %v683
    %v748 = vmul.f32 %v440, %v684
    %v749 = vmul.f32 %v442, %v685
    %v750 = vmul.f32 %v444, %v686
    %v751 = vmul.f32 %v446, %v687
    %v752 = vmul.f32 %v450, %v688
    %v753 = vmul.f32 %v452, %v689
    %v754 = vmul.f32 %v454, %v690
    %v755 = vmul.f32 %v456, %v691
    %v756 = vmul.f32 %v460, %v692
    %v757 = vmul.f32 %v462, %v693
    %v758 = vmul.f32 %v464, %v694
    %v759 = vmul.f32 %v466, %v695
    %v760 = vmul.f32 %v470, %v696
    %v761 = vmul.f32 %v472, %v697
    %v762 = vmul.f32 %v474, %v698
    %v763 = vmul.f32 %v476, %v699
    %v764 = vmul.f32 %v480, %v700
    %v765 = vmul.f32 %v482, %v701
    %v766 = vmul.f32 %v484, %v702
    %v767 = vmul.f32 %v486, %v703
    %v768 = vmul.f32 %v490, %v704
    %v769 = vmul.f32 %v492, %v705
    %v770 = vmul.f32 %v494, %v706
    %v771 = vmul.f32 %v496, %v707
    %v772 = vmul.f32 %v500, %v708
    %v773 = vmul.f32 %v502, %v709
    %v774 = vmul.f32 %v504, %v710
    %v775 = vmul.f32 %v506, %v711
    %v776 = vmul.f32 %v510, %v712
    %v777 = vmul.f32 %v512, %v713
    %v778 = vmul.f32 %v514, %v714
    %v779 = vmul.f32 %v516, %v715
    %v780 = vmul.f32 %v520, %v716
    %v781 = vmul.f32 %v522, %v717
    %v782 = vmul.f32 %v524, %v718
    %v783 = vmul.f32 %v526, %v719
    %v784 = vmul.f32 %v370, 0.5
    %v785 = vmul.f32 %v372, 0.5
    %v786 = vmul.f32 %v374, 0.5
    %v787 = vmul.f32 %v376, 0.5
    %v788 = vmul.f32 %v380, 0.5
    %v789 = vmul.f32 %v382, 0.5
    %v790 = vmul.f32 %v384, 0.5
    %v791 = vmul.f32 %v386, 0.5
    %v792 = vmul.f32 %v390, 0.5
    %v793 = vmul.f32 %v392, 0.5
    %v794 = vmul.f32 %v394, 0.5
    %v795 = vmul.f32 %v396, 0.5
    %v796 = vmul.f32 %v400, 0.5
    %v797 = vmul.f32 %v402, 0.5
    %v798 = vmul.f32 %v404, 0.5
    %v799 = vmul.f32 %v406, 0.5
    %v800 = vmul.f32 %v410, 0.5
    %v801 = vmul.f32 %v412, 0.5
    %v802 = vmul.f32 %v414, 0.5
    %v803 = vmul.f32 %v416, 0.5
    %v804 = vmul.f32 %v420, 0.5
    %v805 = vmul.f32 %v422, 0.5
    %v806 = vmul.f32 %v424, 0.5
    %v807 = vmul.f32 %v426, 0.5
    %v808 = vmul.f32 %v430, 0.5
    %v809 = vmul.f32 %v432, 0.5
    %v810 = vmul.f32 %v434, 0.5
    %v811 = vmul.f32 %v436, 0.5
    %v812 = vmul.f32 %v440, 0.5
    %v813 = vmul.f32 %v442, 0.5
    %v814 = vmul.f32 %v444, 0.5
    %v815 = vmul.f32 %v446, 0.5
    %v816 = vmul.f32 %v450, 0.5
    %v817 = vmul.f32 %v452, 0.5
    %v818 = vmul.f32 %v454, 0.5
    %v819 = vmul.f32 %v456, 0.5
    %v820 = vmul.f32 %v460, 0.5
    %v821 = vmul.f32 %v462, 0.5
    %v822 = vmul.f32 %v464, 0.5
    %v823 = vmul.f32 %v466, 0.5
    %v824 = vmul.f32 %v470, 0.5
    %v825 = vmul.f32 %v472, 0.5
    %v826 = vmul.f32 %v474, 0.5
    %v827 = vmul.f32 %v476, 0.5
    %v828 = vmul.f32 %v480, 0.5
    %v829 = vmul.f32 %v482, 0.5
    %v830 = vmul.f32 %v484, 0.5
    %v831 = vmul.f32 %v486, 0.5
    %v832 = vmul.f32 %v490, 0.5
    %v833 = vmul.f32 %v492, 0.5
    %v834 = vmul.f32 %v494, 0.5
    %v835 = vmul.f32 %v496, 0.5
    %v836 = vmul.f32 %v500, 0.5
    %v837 = vmul.f32 %v502, 0.5
    %v838 = vmul.f32 %v504, 0.5
    %v839 = vmul.f32 %v506, 0.5
    %v840 = vmul.f32 %v510, 0.5
    %v841 = vmul.f32 %v512, 0.5
    %v842 = vmul.f32 %v514, 0.5
    %v843 = vmul.f32 %v516, 0.5
    %v844 = vmul.f32 %v520, 0.5
    %v845 = vmul.f32 %v522, 0.5
    %v846 = vmul.f32 %v524, 0.5
    %v847 = vmul.f32 %v526, 0.5
    %v848 = vmul.f32 %v720, 0.7978846
    %v849 = vmul.f32 %v721, 0.7978846
    %v850 = vmul.f32 %v722, 0.7978846
    %v851 = vmul.f32 %v723, 0.7978846
    %v852 = vmul.f32 %v724, 0.7978846
    %v853 = vmul.f32 %v725, 0.7978846
    %v854 = vmul.f32 %v726, 0.7978846
    %v855 = vmul.f32 %v727, 0.7978846
    %v856 = vmul.f32 %v728, 0.7978846
    %v857 = vmul.f32 %v729, 0.7978846
    %v858 = vmul.f32 %v730, 0.7978846
    %v859 = vmul.f32 %v731, 0.7978846
    %v860 = vmul.f32 %v732, 0.7978846
    %v861 = vmul.f32 %v733, 0.7978846
    %v862 = vmul.f32 %v734, 0.7978846
    %v863 = vmul.f32 %v735, 0.7978846
    %v864 = vmul.f32 %v736, 0.7978846
    %v865 = vmul.f32 %v737, 0.7978846
    %v866 = vmul.f32 %v738, 0.7978846
    %v867 = vmul.f32 %v739, 0.7978846
    %v868 = vmul.f32 %v740, 0.7978846
    %v869 = vmul.f32 %v741, 0.7978846
    %v870 = vmul.f32 %v742, 0.7978846
    %v871 = vmul.f32 %v743, 0.7978846
    %v872 = vmul.f32 %v744, 0.7978846
    %v873 = vmul.f32 %v745, 0.7978846
    %v874 = vmul.f32 %v746, 0.7978846
    %v875 = vmul.f32 %v747, 0.7978846
    %v876 = vmul.f32 %v748, 0.7978846
    %v877 = vmul.f32 %v749, 0.7978846
    %v878 = vmul.f32 %v750, 0.7978846
    %v879 = vmul.f32 %v751, 0.7978846
    %v880 = vmul.f32 %v752, 0.7978846
    %v881 = vmul.f32 %v753, 0.7978846
    %v882 = vmul.f32 %v754, 0.7978846
    %v883 = vmul.f32 %v755, 0.7978846
    %v884 = vmul.f32 %v756, 0.7978846
    %v885 = vmul.f32 %v757, 0.7978846
    %v886 = vmul.f32 %v758, 0.7978846
    %v887 = vmul.f32 %v759, 0.7978846
    %v888 = vmul.f32 %v760, 0.7978846
    %v889 = vmul.f32 %v761, 0.7978846
    %v890 = vmul.f32 %v762, 0.7978846
    %v891 = vmul.f32 %v763, 0.7978846
    %v892 = vmul.f32 %v764, 0.7978846
    %v893 = vmul.f32 %v765, 0.7978846
    %v894 = vmul.f32 %v766, 0.7978846
    %v895 = vmul.f32 %v767, 0.7978846
    %v896 = vmul.f32 %v768, 0.7978846
    %v897 = vmul.f32 %v769, 0.7978846
    %v898 = vmul.f32 %v770, 0.7978846
    %v899 = vmul.f32 %v771, 0.7978846
    %v900 = vmul.f32 %v772, 0.7978846
    %v901 = vmul.f32 %v773, 0.7978846
    %v902 = vmul.f32 %v774, 0.7978846
    %v903 = vmul.f32 %v775, 0.7978846
    %v904 = vmul.f32 %v776, 0.7978846
    %v905 = vmul.f32 %v777, 0.7978846
    %v906 = vmul.f32 %v778, 0.7978846
    %v907 = vmul.f32 %v779, 0.7978846
    %v908 = vmul.f32 %v780, 0.7978846
    %v909 = vmul.f32 %v781, 0.7978846
    %v910 = vmul.f32 %v782, 0.7978846
    %v911 = vmul.f32 %v783, 0.7978846
    %v912 = vtanh.pop %v848
    %v913 = vtanh.pop %v849
    %v914 = vtanh.pop %v850
    %v915 = vtanh.pop %v851
    %v916 = vtanh.pop %v852
    %v917 = vtanh.pop %v853
    %v918 = vtanh.pop %v854
    %v919 = vtanh.pop %v855
    %v920 = vtanh.pop %v856
    %v921 = vtanh.pop %v857
    %v922 = vtanh.pop %v858
    %v923 = vtanh.pop %v859
    %v924 = vtanh.pop %v860
    %v925 = vtanh.pop %v861
    %v926 = vtanh.pop %v862
    %v927 = vtanh.pop %v863
    %v928 = vtanh.pop %v864
    %v929 = vtanh.pop %v865
    %v930 = vtanh.pop %v866
    %v931 = vtanh.pop %v867
    %v932 = vtanh.pop %v868
    %v933 = vtanh.pop %v869
    %v934 = vtanh.pop %v870
    %v935 = vtanh.pop %v871
    %v936 = vtanh.pop %v872
    %v937 = vtanh.pop %v873
    %v938 = vtanh.pop %v874
    %v939 = vtanh.pop %v875
    %v940 = vtanh.pop %v876
    %v941 = vtanh.pop %v877
    %v942 = vtanh.pop %v878
    %v943 = vtanh.pop %v879
    %v944 = vtanh.pop %v880
    %v945 = vtanh.pop %v881
    %v946 = vtanh.pop %v882
    %v947 = vtanh.pop %v883
    %v948 = vtanh.pop %v884
    %v949 = vtanh.pop %v885
    %v950 = vtanh.pop %v886
    %v951 = vtanh.pop %v887
    %v952 = vtanh.pop %v888
    %v953 = vtanh.pop %v889
    %v954 = vtanh.pop %v890
    %v955 = vtanh.pop %v891
    %v956 = vtanh.pop %v892
    %v957 = vtanh.pop %v893
    %v958 = vtanh.pop %v894
    %v959 = vtanh.pop %v895
    %v960 = vtanh.pop %v896
    %v961 = vtanh.pop %v897
    %v962 = vtanh.pop %v898
    %v963 = vtanh.pop %v899
    %v964 = vtanh.pop %v900
    %v965 = vtanh.pop %v901
    %v966 = vtanh.pop %v902
    %v967 = vtanh.pop %v903
    %v968 = vtanh.pop %v904
    %v969 = vtanh.pop %v905
    %v970 = vtanh.pop %v906
    %v971 = vtanh.pop %v907
    %v972 = vtanh.pop %v908
    %v973 = vtanh.pop %v909
    %v974 = vtanh.pop %v910
    %v975 = vtanh.pop %v911
    %v976 = vadd.f32 %v912, 1.0
    %v977 = vadd.f32 %v913, 1.0
    %v978 = vadd.f32 %v914, 1.0
    %v979 = vadd.f32 %v915, 1.0
    %v980 = vadd.f32 %v916, 1.0
    %v981 = vadd.f32 %v917, 1.0
    %v982 = vadd.f32 %v918, 1.0
    %v983 = vadd.f32 %v919, 1.0
    %v984 = vadd.f32 %v920, 1.0
    %v985 = vadd.f32 %v921, 1.0
    %v986 = vadd.f32 %v922, 1.0
    %v987 = vadd.f32 %v923, 1.0
    %v988 = vadd.f32 %v924, 1.0
    %v989 = vadd.f32 %v925, 1.0
    %v990 = vadd.f32 %v926, 1.0
    %v991 = vadd.f32 %v927, 1.0
    %v992 = vadd.f32 %v928, 1.0
    %v993 = vadd.f32 %v929, 1.0
    %v994 = vadd.f32 %v930, 1.0
    %v995 = vadd.f32 %v931, 1.0
    %v996 = vadd.f32 %v932, 1.0
    %v997 = vadd.f32 %v933, 1.0
    %v998 = vadd.f32 %v934, 1.0
    %v999 = vadd.f32 %v935, 1.0
    %v1000 = vadd.f32 %v936, 1.0
    %v1001 = vadd.f32 %v937, 1.0
    %v1002 = vadd.f32 %v938, 1.0
    %v1003 = vadd.f32 %v939, 1.0
    %v1004 = vadd.f32 %v940, 1.0
    %v1005 = vadd.f32 %v941, 1.0
    %v1006 = vadd.f32 %v942, 1.0
    %v1007 = vadd.f32 %v943, 1.0
    %v1008 = vadd.f32 %v944, 1.0
    %v1009 = vadd.f32 %v945, 1.0
    %v1010 = vadd.f32 %v946, 1.0
    %v1011 = vadd.f32 %v947, 1.0
    %v1012 = vadd.f32 %v948, 1.0
    %v1013 = vadd.f32 %v949, 1.0
    %v1014 = vadd.f32 %v950, 1.0
    %v1015 = vadd.f32 %v951, 1.0
    %v1016 = vadd.f32 %v952, 1.0
    %v1017 = vadd.f32 %v953, 1.0
    %v1018 = vadd.f32 %v954, 1.0
    %v1019 = vadd.f32 %v955, 1.0
    %v1020 = vadd.f32 %v956, 1.0
    %v1021 = vadd.f32 %v957, 1.0
    %v1022 = vadd.f32 %v958, 1.0
    %v1023 = vadd.f32 %v959, 1.0
    %v1024 = vadd.f32 %v960, 1.0
    %v1025 = vadd.f32 %v961, 1.0
    %v1026 = vadd.f32 %v962, 1.0
    %v1027 = vadd.f32 %v963, 1.0
    %v1028 = vadd.f32 %v964, 1.0
    %v1029 = vadd.f32 %v965, 1.0
    %v1030 = vadd.f32 %v966, 1.0
    %v1031 = vadd.f32 %v967, 1.0
    %v1032 = vadd.f32 %v968, 1.0
    %v1033 = vadd.f32 %v969, 1.0
    %v1034 = vadd.f32 %v970, 1.0
    %v1035 = vadd.f32 %v971, 1.0
    %v1036 = vadd.f32 %v972, 1.0
    %v1037 = vadd.f32 %v973, 1.0
    %v1038 = vadd.f32 %v974, 1.0
    %v1039 = vadd.f32 %v975, 1.0
    %v1040 = vmul.f32 %v784, %v976
    %v1041 = vmul.f32 %v785, %v977
    %v1042 = vmul.f32 %v786, %v978
    %v1043 = vmul.f32 %v787, %v979
    %v1044 = vmul.f32 %v788, %v980
    %v1045 = vmul.f32 %v789, %v981
    %v1046 = vmul.f32 %v790, %v982
    %v1047 = vmul.f32 %v791, %v983
    %v1048 = vmul.f32 %v792, %v984
    %v1049 = vmul.f32 %v793, %v985
    %v1050 = vmul.f32 %v794, %v986
    %v1051 = vmul.f32 %v795, %v987
    %v1052 = vmul.f32 %v796, %v988
    %v1053 = vmul.f32 %v797, %v989
    %v1054 = vmul.f32 %v798, %v990
    %v1055 = vmul.f32 %v799, %v991
    %v1056 = vmul.f32 %v800, %v992
    %v1057 = vmul.f32 %v801, %v993
    %v1058 = vmul.f32 %v802, %v994
    %v1059 = vmul.f32 %v803, %v995
    %v1060 = vmul.f32 %v804, %v996
    %v1061 = vmul.f32 %v805, %v997
    %v1062 = vmul.f32 %v806, %v998
    %v1063 = vmul.f32 %v807, %v999
    %v1064 = vmul.f32 %v808, %v1000
    %v1065 = vmul.f32 %v809, %v1001
    %v1066 = vmul.f32 %v810, %v1002
    %v1067 = vmul.f32 %v811, %v1003
    %v1068 = vmul.f32 %v812, %v1004
    %v1069 = vmul.f32 %v813, %v1005
    %v1070 = vmul.f32 %v814, %v1006
    %v1071 = vmul.f32 %v815, %v1007
    %v1072 = vmul.f32 %v816, %v1008
    %v1073 = vmul.f32 %v817, %v1009
    %v1074 = vmul.f32 %v818, %v1010
    %v1075 = vmul.f32 %v819, %v1011
    %v1076 = vmul.f32 %v820, %v1012
    %v1077 = vmul.f32 %v821, %v1013
    %v1078 = vmul.f32 %v822, %v1014
    %v1079 = vmul.f32 %v823, %v1015
    %v1080 = vmul.f32 %v824, %v1016
    %v1081 = vmul.f32 %v825, %v1017
    %v1082 = vmul.f32 %v826, %v1018
    %v1083 = vmul.f32 %v827, %v1019
    %v1084 = vmul.f32 %v828, %v1020
    %v1085 = vmul.f32 %v829, %v1021
    %v1086 = vmul.f32 %v830, %v1022
    %v1087 = vmul.f32 %v831, %v1023
    %v1088 = vmul.f32 %v832, %v1024
    %v1089 = vmul.f32 %v833, %v1025
    %v1090 = vmul.f32 %v834, %v1026
    %v1091 = vmul.f32 %v835, %v1027
    %v1092 = vmul.f32 %v836, %v1028
    %v1093 = vmul.f32 %v837, %v1029
    %v1094 = vmul.f32 %v838, %v1030
    %v1095 = vmul.f32 %v839, %v1031
    %v1096 = vmul.f32 %v840, %v1032
    %v1097 = vmul.f32 %v841, %v1033
    %v1098 = vmul.f32 %v842, %v1034
    %v1099 = vmul.f32 %v843, %v1035
    %v1100 = vmul.f32 %v844, %v1036
    %v1101 = vmul.f32 %v845, %v1037
    %v1102 = vmul.f32 %v846, %v1038
    %v1103 = vmul.f32 %v847, %v1039
    %v1104 = vld [vmem:[#allocation2] sm:$0xff]
    %v1105 = vld [vmem:[#allocation2 + $0x8] sm:$0xff]
    %v1106 = vld [vmem:[#allocation2 + $0x10] sm:$0xff]
    %v1107 = vld [vmem:[#allocation2 + $0x18] sm:$0xff]
    %v1108 = vld [vmem:[#allocation2 + $0x20] sm:$0xff]
    %v1109 = vld [vmem:[#allocation2 + $0x28] sm:$0xff]
    %v1110 = vld [vmem:[#allocation2 + $0x30] sm:$0xff]
    %v1111 = vld [vmem:[#allocation2 + $0x38] sm:$0xff]
    %v1112 = vld [vmem:[#allocation2 + $0x40] sm:$0xff]
    %v1113 = vld [vmem:[#allocation2 + $0x48] sm:$0xff]
    %v1114 = vld [vmem:[#allocation2 + $0x50] sm:$0xff]
    %v1115 = vld [vmem:[#allocation2 + $0x58] sm:$0xff]
    %v1116 = vld [vmem:[#allocation2 + $0x60] sm:$0xff]
    %v1117 = vld [vmem:[#allocation2 + $0x68] sm:$0xff]
    %v1118 = vld [vmem:[#allocation2 + $0x70] sm:$0xff]
    %v1119 = vld [vmem:[#allocation2 + $0x78] sm:$0xff]
    %v1120 = vld [vmem:[#allocation2 + $0x80] sm:$0xff]
    %v1121 = vld [vmem:[#allocation2 + $0x88] sm:$0xff]
    %v1122 = vld [vmem:[#allocation2 + $0x90] sm:$0xff]
    %v1123 = vld [vmem:[#allocation2 + $0x98] sm:$0xff]
    %v1124 = vld [vmem:[#allocation2 + $0xa0] sm:$0xff]
    %v1125 = vld [vmem:[#allocation2 + $0xa8] sm:$0xff]
    %v1126 = vld [vmem:[#allocation2 + $0xb0] sm:$0xff]
    %v1127 = vld [vmem:[#allocation2 + $0xb8] sm:$0xff]
    %v1128 = vld [vmem:[#allocation2 + $0xc0] sm:$0xff]
    %v1129 = vld [vmem:[#allocation2 + $0xc8] sm:$0xff]
    %v1130 = vld [vmem:[#allocation2 + $0xd0] sm:$0xff]
    %v1131 = vld [vmem:[#allocation2 + $0xd8] sm:$0xff]
    %v1132 = vld [vmem:[#allocation2 + $0xe0] sm:$0xff]
    %v1133 = vld [vmem:[#allocation2 + $0xe8] sm:$0xff]
    %v1134 = vld [vmem:[#allocation2 + $0xf0] sm:$0xff]
    %v1135 = vld [vmem:[#allocation2 + $0xf8] sm:$0xff]
    %v1136 = vpack.c.bf16 %v1042, %v1040
    %v1137 = vpack.c.bf16 %v1043, %v1041
    %v1138 = vpack.c.bf16 %v1046, %v1044
    %v1139 = vpack.c.bf16 %v1047, %v1045
    %v1140 = vpack.c.bf16 %v1050, %v1048
    %v1141 = vpack.c.bf16 %v1051, %v1049
    %v1142 = vpack.c.bf16 %v1054, %v1052
    %v1143 = vpack.c.bf16 %v1055, %v1053
    %v1144 = vpack.c.bf16 %v1058, %v1056
    %v1145 = vpack.c.bf16 %v1059, %v1057
    %v1146 = vpack.c.bf16 %v1062, %v1060
    %v1147 = vpack.c.bf16 %v1063, %v1061
    %v1148 = vpack.c.bf16 %v1066, %v1064
    %v1149 = vpack.c.bf16 %v1067, %v1065
    %v1150 = vpack.c.bf16 %v1070, %v1068
    %v1151 = vpack.c.bf16 %v1071, %v1069
    %v1152 = vpack.c.bf16 %v1074, %v1072
    %v1153 = vpack.c.bf16 %v1075, %v1073
    %v1154 = vpack.c.bf16 %v1078, %v1076
    %v1155 = vpack.c.bf16 %v1079, %v1077
    %v1156 = vpack.c.bf16 %v1082, %v1080
    %v1157 = vpack.c.bf16 %v1083, %v1081
    %v1158 = vpack.c.bf16 %v1086, %v1084
    %v1159 = vpack.c.bf16 %v1087, %v1085
    %v1160 = vpack.c.bf16 %v1090, %v1088
    %v1161 = vpack.c.bf16 %v1091, %v1089
    %v1162 = vpack.c.bf16 %v1094, %v1092
    %v1163 = vpack.c.bf16 %v1095, %v1093
    %v1164 = vpack.c.bf16 %v1098, %v1096
    %v1165 = vpack.c.bf16 %v1099, %v1097
    %v1166 = vpack.c.bf16 %v1102, %v1100
    %v1167 = vpack.c.bf16 %v1103, %v1101
    %v1168 = vld [vmem:[#allocation8] sm:$0xf]
    %v1169 = vld [vmem:[#allocation8 + $0x4] sm:$0xf]
    %v1170 = vld [vmem:[#allocation8 + $0x8] sm:$0xf]
    %v1171 = vld [vmem:[#allocation8 + $0xc] sm:$0xf]
    %v1172 = vld [vmem:[#allocation8 + $0x10] sm:$0xf]
    %v1173 = vld [vmem:[#allocation8 + $0x14] sm:$0xf]
    %v1174 = vld [vmem:[#allocation8 + $0x18] sm:$0xf]
    %v1175 = vld [vmem:[#allocation8 + $0x1c] sm:$0xf]
    %v1176 = vld [vmem:[#allocation8 + $0x20] sm:$0xf]
    %v1177 = vld [vmem:[#allocation8 + $0x24] sm:$0xf]
    %v1178 = vld [vmem:[#allocation8 + $0x28] sm:$0xf]
    %v1179 = vld [vmem:[#allocation8 + $0x2c] sm:$0xf]
    %v1180 = vld [vmem:[#allocation8 + $0x30] sm:$0xf]
    %v1181 = vld [vmem:[#allocation8 + $0x34] sm:$0xf]
    %v1182 = vld [vmem:[#allocation8 + $0x38] sm:$0xf]
    %v1183 = vld [vmem:[#allocation8 + $0x3c] sm:$0xf]
    %v1184 = vld [vmem:[#allocation8 + $0x40] sm:$0xf]
    %v1185 = vld [vmem:[#allocation8 + $0x44] sm:$0xf]
    %v1186 = vld [vmem:[#allocation8 + $0x48] sm:$0xf]
    %v1187 = vld [vmem:[#allocation8 + $0x4c] sm:$0xf]
    %v1188 = vld [vmem:[#allocation8 + $0x50] sm:$0xf]
    %v1189 = vld [vmem:[#allocation8 + $0x54] sm:$0xf]
    %v1190 = vld [vmem:[#allocation8 + $0x58] sm:$0xf]
    %v1191 = vld [vmem:[#allocation8 + $0x5c] sm:$0xf]
    %v1192 = vld [vmem:[#allocation8 + $0x60] sm:$0xf]
    %v1193 = vld [vmem:[#allocation8 + $0x64] sm:$0xf]
    %v1194 = vld [vmem:[#allocation8 + $0x68] sm:$0xf]
    %v1195 = vld [vmem:[#allocation8 + $0x6c] sm:$0xf]
    %v1196 = vld [vmem:[#allocation8 + $0x70] sm:$0xf]
    %v1197 = vld [vmem:[#allocation8 + $0x74] sm:$0xf]
    %v1198 = vld [vmem:[#allocation8 + $0x78] sm:$0xf]
    %v1199 = vld [vmem:[#allocation8 + $0x7c] sm:$0xf]
    %v1232 = vunpack.c.l.b16 %v1168
    %v1233 = vunpack.c.l.b16 %v1169
    %v1234 = vunpack.c.l.b16 %v1170
    %v1235 = vunpack.c.l.b16 %v1171
    %v1236 = vunpack.c.l.b16 %v1172
    %v1237 = vunpack.c.l.b16 %v1173
    %v1238 = vunpack.c.l.b16 %v1174
    %v1239 = vunpack.c.l.b16 %v1175
    %v1240 = vunpack.c.l.b16 %v1176
    %v1241 = vunpack.c.l.b16 %v1177
    %v1242 = vunpack.c.l.b16 %v1178
    %v1243 = vunpack.c.l.b16 %v1179
    %v1244 = vunpack.c.l.b16 %v1180
    %v1245 = vunpack.c.l.b16 %v1181
    %v1246 = vunpack.c.l.b16 %v1182
    %v1247 = vunpack.c.l.b16 %v1183
    %v1248 = vunpack.c.l.b16 %v1184
    %v1249 = vunpack.c.l.b16 %v1185
    %v1250 = vunpack.c.l.b16 %v1186
    %v1251 = vunpack.c.l.b16 %v1187
    %v1252 = vunpack.c.l.b16 %v1188
    %v1253 = vunpack.c.l.b16 %v1189
    %v1254 = vunpack.c.l.b16 %v1190
    %v1255 = vunpack.c.l.b16 %v1191
    %v1256 = vunpack.c.l.b16 %v1192
    %v1257 = vunpack.c.l.b16 %v1193
    %v1258 = vunpack.c.l.b16 %v1194
    %v1259 = vunpack.c.l.b16 %v1195
    %v1260 = vunpack.c.l.b16 %v1196
    %v1261 = vunpack.c.l.b16 %v1197
    %v1262 = vunpack.c.l.b16 %v1198
    %v1263 = vunpack.c.l.b16 %v1199
    %v1264 = vpack.c.b16 %v1233, %v1232
    %v1265 = vpack.c.b16 %v1235, %v1234
    %v1266 = vpack.c.b16 %v1237, %v1236
    %v1267 = vpack.c.b16 %v1239, %v1238
    %v1268 = vpack.c.b16 %v1241, %v1240
    %v1269 = vpack.c.b16 %v1243, %v1242
    %v1270 = vpack.c.b16 %v1245, %v1244
    %v1271 = vpack.c.b16 %v1247, %v1246
    %v1272 = vpack.c.b16 %v1249, %v1248
    %v1273 = vpack.c.b16 %v1251, %v1250
    %v1274 = vpack.c.b16 %v1253, %v1252
    %v1275 = vpack.c.b16 %v1255, %v1254
    %v1276 = vpack.c.b16 %v1257, %v1256
    %v1277 = vpack.c.b16 %v1259, %v1258
    %v1278 = vpack.c.b16 %v1261, %v1260
    %v1279 = vpack.c.b16 %v1263, %v1262
    %1296 = vmatprep.subr.bf16.mxu0 0
    %1297 = vmatpush1.bf16.msra.mxu0 %v1264
    %1298 = vmatprep.subr.bf16.mxu0 0
    %1299 = vmatpush1.bf16.msra.mxu0 %v1265
    %1300 = vmatprep.subr.bf16.mxu0 0
    %1301 = vmatpush1.bf16.msra.mxu0 %v1266
    %1302 = vmatprep.subr.bf16.mxu0 0
    %1303 = vmatpush1.bf16.msra.mxu0 %v1267
    %1304 = vmatprep.subr.bf16.mxu0 0
    %1305 = vmatpush1.bf16.msra.mxu0 %v1268
    %1306 = vmatprep.subr.bf16.mxu0 0
    %1307 = vmatpush1.bf16.msra.mxu0 %v1269
    %1308 = vmatprep.subr.bf16.mxu0 0
    %1309 = vmatpush1.bf16.msra.mxu0 %v1270
    %1310 = vmatprep.subr.bf16.mxu0 0
    %1311 = vmatpush1.bf16.msra.mxu0 %v1271
    %1312 = vmatprep.subr.bf16.mxu0 0
    %1313 = vmatpush1.bf16.msra.mxu0 %v1272
    %1314 = vmatprep.subr.bf16.mxu0 0
    %1315 = vmatpush1.bf16.msra.mxu0 %v1273
    %1316 = vmatprep.subr.bf16.mxu0 0
    %1317 = vmatpush1.bf16.msra.mxu0 %v1274
    %1318 = vmatprep.subr.bf16.mxu0 0
    %1319 = vmatpush1.bf16.msra.mxu0 %v1275
    %1320 = vmatprep.subr.bf16.mxu0 0
    %1321 = vmatpush1.bf16.msra.mxu0 %v1276
    %1322 = vmatprep.subr.bf16.mxu0 0
    %1323 = vmatpush1.bf16.msra.mxu0 %v1277
    %1324 = vmatprep.subr.bf16.mxu0 0
    %1325 = vmatpush1.bf16.msra.mxu0 %v1278
    %1326 = vmatprep.subr.bf16.mxu0 0
    %1327 = vmatpush1.bf16.msra.mxu0 %v1279
    %1328 = vmatprep.mubr.bf16.mxu0 %v1137
    %1329 = vmatmul.mubr.bf16.gmra.mrb[0].mxu0 %v1136
    %v1330 = vpop.f32.mrb[0].mxu0
    %v1331 = vadd.f32 0.0, %v1330
    %v1332 = vpop.f32.mrb[0].mxu0
    %v1333 = vpop.f32.mrb[0].mxu0
    %v1334 = vadd.f32 0.0, %v1333
    %v1335 = vpop.f32.mrb[0].mxu0
    %1336 = vmatprep.mubr.bf16.mxu0 %v1139
    %1337 = vmatmul.mubr.bf16.gmra.mrb[0].mxu0 %v1138
    %v1338 = vpop.f32.mrb[0].mxu0
    %v1339 = vadd.f32 0.0, %v1338
    %v1340 = vpop.f32.mrb[0].mxu0
    %v1341 = vpop.f32.mrb[0].mxu0
    %v1342 = vadd.f32 0.0, %v1341
    %v1343 = vpop.f32.mrb[0].mxu0
    %1344 = vmatprep.mubr.bf16.mxu0 %v1141
    %1345 = vmatmul.mubr.bf16.gmra.mrb[0].mxu0 %v1140
    %v1346 = vpop.f32.mrb[0].mxu0
    %v1347 = vadd.f32 0.0, %v1346
    %v1348 = vpop.f32.mrb[0].mxu0
    %v1349 = vpop.f32.mrb[0].mxu0
    %v1350 = vadd.f32 0.0, %v1349
    %v1351 = vpop.f32.mrb[0].mxu0
    %1352 = vmatprep.mubr.bf16.mxu0 %v1143
    %1353 = vmatmul.mubr.bf16.gmra.mrb[0].mxu0 %v1142
    %v1354 = vpop.f32.mrb[0].mxu0
    %v1355 = vadd.f32 0.0, %v1354
    %v1356 = vpop.f32.mrb[0].mxu0
    %v1357 = vpop.f32.mrb[0].mxu0
    %v1358 = vadd.f32 0.0, %v1357
    %v1359 = vpop.f32.mrb[0].mxu0
    %1360 = vmatprep.mubr.bf16.mxu0 %v1145
    %1361 = vmatmul.mubr.bf16.gmra.mrb[0].mxu0 %v1144
    %v1362 = vpop.f32.mrb[0].mxu0
    %v1363 = vadd.f32 0.0, %v1362
    %v1364 = vpop.f32.mrb[0].mxu0
    %v1365 = vpop.f32.mrb[0].mxu0
    %v1366 = vadd.f32 0.0, %v1365
    %v1367 = vpop.f32.mrb[0].mxu0
    %1368 = vmatprep.mubr.bf16.mxu0 %v1147
    %1369 = vmatmul.mubr.bf16.gmra.mrb[0].mxu0 %v1146
    %v1370 = vpop.f32.mrb[0].mxu0
    %v1371 = vadd.f32 0.0, %v1370
    %v1372 = vpop.f32.mrb[0].mxu0
    %v1373 = vpop.f32.mrb[0].mxu0
    %v1374 = vadd.f32 0.0, %v1373
    %v1375 = vpop.f32.mrb[0].mxu0
    %1376 = vmatprep.mubr.bf16.mxu0 %v1149
    %1377 = vmatmul.mubr.bf16.gmra.mrb[0].mxu0 %v1148
    %v1378 = vpop.f32.mrb[0].mxu0
    %v1379 = vadd.f32 0.0, %v1378
    %v1380 = vpop.f32.mrb[0].mxu0
    %v1381 = vpop.f32.mrb[0].mxu0
    %v1382 = vadd.f32 0.0, %v1381
    %v1383 = vpop.f32.mrb[0].mxu0
    %1384 = vmatprep.mubr.bf16.mxu0 %v1151
    %1385 = vmatmul.mubr.bf16.gmra.mrb[0].mxu0 %v1150
    %v1386 = vpop.f32.mrb[0].mxu0
    %v1387 = vadd.f32 0.0, %v1386
    %v1388 = vpop.f32.mrb[0].mxu0
    %v1389 = vpop.f32.mrb[0].mxu0
    %v1390 = vadd.f32 0.0, %v1389
    %v1391 = vpop.f32.mrb[0].mxu0
    %1392 = vmatprep.mubr.bf16.mxu0 %v1153
    %1393 = vmatmul.mubr.bf16.gmra.mrb[0].mxu0 %v1152
    %v1394 = vpop.f32.mrb[0].mxu0
    %v1395 = vadd.f32 0.0, %v1394
    %v1396 = vpop.f32.mrb[0].mxu0
    %v1397 = vpop.f32.mrb[0].mxu0
    %v1398 = vadd.f32 0.0, %v1397
    %v1399 = vpop.f32.mrb[0].mxu0
    %1400 = vmatprep.mubr.bf16.mxu0 %v1155
    %1401 = vmatmul.mubr.bf16.gmra.mrb[0].mxu0 %v1154
    %v1402 = vpop.f32.mrb[0].mxu0
    %v1403 = vadd.f32 0.0, %v1402
    %v1404 = vpop.f32.mrb[0].mxu0
    %v1405 = vpop.f32.mrb[0].mxu0
    %v1406 = vadd.f32 0.0, %v1405
    %v1407 = vpop.f32.mrb[0].mxu0
    %1408 = vmatprep.mubr.bf16.mxu0 %v1157
    %1409 = vmatmul.mubr.bf16.gmra.mrb[0].mxu0 %v1156
    %v1410 = vpop.f32.mrb[0].mxu0
    %v1411 = vadd.f32 0.0, %v1410
    %v1412 = vpop.f32.mrb[0].mxu0
    %v1413 = vpop.f32.mrb[0].mxu0
    %v1414 = vadd.f32 0.0, %v1413
    %v1415 = vpop.f32.mrb[0].mxu0
    %1416 = vmatprep.mubr.bf16.mxu0 %v1159
    %1417 = vmatmul.mubr.bf16.gmra.mrb[0].mxu0 %v1158
    %v1418 = vpop.f32.mrb[0].mxu0
    %v1419 = vadd.f32 0.0, %v1418
    %v1420 = vpop.f32.mrb[0].mxu0
    %v1421 = vpop.f32.mrb[0].mxu0
    %v1422 = vadd.f32 0.0, %v1421
    %v1423 = vpop.f32.mrb[0].mxu0
    %1424 = vmatprep.mubr.bf16.mxu0 %v1161
    %1425 = vmatmul.mubr.bf16.gmra.mrb[0].mxu0 %v1160
    %v1426 = vpop.f32.mrb[0].mxu0
    %v1427 = vadd.f32 0.0, %v1426
    %v1428 = vpop.f32.mrb[0].mxu0
    %v1429 = vpop.f32.mrb[0].mxu0
    %v1430 = vadd.f32 0.0, %v1429
    %v1431 = vpop.f32.mrb[0].mxu0
    %1432 = vmatprep.mubr.bf16.mxu0 %v1163
    %1433 = vmatmul.mubr.bf16.gmra.mrb[0].mxu0 %v1162
    %v1434 = vpop.f32.mrb[0].mxu0
    %v1435 = vadd.f32 0.0, %v1434
    %v1436 = vpop.f32.mrb[0].mxu0
    %v1437 = vpop.f32.mrb[0].mxu0
    %v1438 = vadd.f32 0.0, %v1437
    %v1439 = vpop.f32.mrb[0].mxu0
    %1440 = vmatprep.mubr.bf16.mxu0 %v1165
    %1441 = vmatmul.mubr.bf16.gmra.mrb[0].mxu0 %v1164
    %v1442 = vpop.f32.mrb[0].mxu0
    %v1443 = vadd.f32 0.0, %v1442
    %v1444 = vpop.f32.mrb[0].mxu0
    %v1445 = vpop.f32.mrb[0].mxu0
    %v1446 = vadd.f32 0.0, %v1445
    %v1447 = vpop.f32.mrb[0].mxu0
    %1448 = vmatprep.mubr.bf16.mxu0 %v1167
    %1449 = vmatmul.mubr.bf16.gmra.mrb[0].mxu0 %v1166
    %v1450 = vpop.f32.mrb[0].mxu0
    %v1451 = vadd.f32 0.0, %v1450
    %v1452 = vpop.f32.mrb[0].mxu0
    %v1453 = vpop.f32.mrb[0].mxu0
    %v1454 = vadd.f32 0.0, %v1453
    %v1455 = vpop.f32.mrb[0].mxu0
    %1456 = vdwg.mxu0
    %v1457 = vadd.f32 %v1104, %v1331
    %v1458 = vadd.f32 %v1105, %v1334
    %v1459 = vadd.f32 %v1106, %v1339
    %v1460 = vadd.f32 %v1107, %v1342
    %v1461 = vadd.f32 %v1108, %v1347
    %v1462 = vadd.f32 %v1109, %v1350
    %v1463 = vadd.f32 %v1110, %v1355
    %v1464 = vadd.f32 %v1111, %v1358
    %v1465 = vadd.f32 %v1112, %v1363
    %v1466 = vadd.f32 %v1113, %v1366
    %v1467 = vadd.f32 %v1114, %v1371
    %v1468 = vadd.f32 %v1115, %v1374
    %v1469 = vadd.f32 %v1116, %v1379
    %v1470 = vadd.f32 %v1117, %v1382
    %v1471 = vadd.f32 %v1118, %v1387
    %v1472 = vadd.f32 %v1119, %v1390
    %v1473 = vadd.f32 %v1120, %v1395
    %v1474 = vadd.f32 %v1121, %v1398
    %v1475 = vadd.f32 %v1122, %v1403
    %v1476 = vadd.f32 %v1123, %v1406
    %v1477 = vadd.f32 %v1124, %v1411
    %v1478 = vadd.f32 %v1125, %v1414
    %v1479 = vadd.f32 %v1126, %v1419
    %v1480 = vadd.f32 %v1127, %v1422
    %v1481 = vadd.f32 %v1128, %v1427
    %v1482 = vadd.f32 %v1129, %v1430
    %v1483 = vadd.f32 %v1130, %v1435
    %v1484 = vadd.f32 %v1131, %v1438
    %v1485 = vadd.f32 %v1132, %v1443
    %v1486 = vadd.f32 %v1133, %v1446
    %v1487 = vadd.f32 %v1134, %v1451
    %v1488 = vadd.f32 %v1135, %v1454
    %1489 = vst [vmem:[#allocation2] sm:$0xff] %v1457
    %1490 = vst [vmem:[#allocation2 + $0x8] sm:$0xff] %v1458
    %1491 = vst [vmem:[#allocation2 + $0x10] sm:$0xff] %v1459
    %1492 = vst [vmem:[#allocation2 + $0x18] sm:$0xff] %v1460
    %1493 = vst [vmem:[#allocation2 + $0x20] sm:$0xff] %v1461
    %1494 = vst [vmem:[#allocation2 + $0x28] sm:$0xff] %v1462
    %1495 = vst [vmem:[#allocation2 + $0x30] sm:$0xff] %v1463
    %1496 = vst [vmem:[#allocation2 + $0x38] sm:$0xff] %v1464
    %1497 = vst [vmem:[#allocation2 + $0x40] sm:$0xff] %v1465
    %1498 = vst [vmem:[#allocation2 + $0x48] sm:$0xff] %v1466
    %1499 = vst [vmem:[#allocation2 + $0x50] sm:$0xff] %v1467
    %1500 = vst [vmem:[#allocation2 + $0x58] sm:$0xff] %v1468
    %1501 = vst [vmem:[#allocation2 + $0x60] sm:$0xff] %v1469
    %1502 = vst [vmem:[#allocation2 + $0x68] sm:$0xff] %v1470
    %1503 = vst [vmem:[#allocation2 + $0x70] sm:$0xff] %v1471
    %1504 = vst [vmem:[#allocation2 + $0x78] sm:$0xff] %v1472
    %1505 = vst [vmem:[#allocation2 + $0x80] sm:$0xff] %v1473
    %1506 = vst [vmem:[#allocation2 + $0x88] sm:$0xff] %v1474
    %1507 = vst [vmem:[#allocation2 + $0x90] sm:$0xff] %v1475
    %1508 = vst [vmem:[#allocation2 + $0x98] sm:$0xff] %v1476
    %1509 = vst [vmem:[#allocation2 + $0xa0] sm:$0xff] %v1477
    %1510 = vst [vmem:[#allocation2 + $0xa8] sm:$0xff] %v1478
    %1511 = vst [vmem:[#allocation2 + $0xb0] sm:$0xff] %v1479
    %1512 = vst [vmem:[#allocation2 + $0xb8] sm:$0xff] %v1480
    %1513 = vst [vmem:[#allocation2 + $0xc0] sm:$0xff] %v1481
    %1514 = vst [vmem:[#allocation2 + $0xc8] sm:$0xff] %v1482
    %1515 = vst [vmem:[#allocation2 + $0xd0] sm:$0xff] %v1483
    %1516 = vst [vmem:[#allocation2 + $0xd8] sm:$0xff] %v1484
    %1517 = vst [vmem:[#allocation2 + $0xe0] sm:$0xff] %v1485
    %1518 = vst [vmem:[#allocation2 + $0xe8] sm:$0xff] %v1486
    %1519 = vst [vmem:[#allocation2 + $0xf0] sm:$0xff] %v1487
    %1520 = vst [vmem:[#allocation2 + $0xf8] sm:$0xff] %v1488
    // Predicated region
    $region38: #{tpu_custom_call.1} parent=1 // pred_check
      %p1521 = pneg %p63
    $region39: #{tpu_custom_call.1} parent=1 // pred_check_branch
      %1523 = sbr.rel (%p1521) target = $region41
    $region40: #{tpu_custom_call.1} parent=1 // pred_region
      %v1524 = vld [vmem:[#allocation2] sm:$0xff]
      %v1525 = vld [vmem:[#allocation2 + $0x8] sm:$0xff]
      %v1526 = vld [vmem:[#allocation2 + $0x10] sm:$0xff]
      %v1527 = vld [vmem:[#allocation2 + $0x18] sm:$0xff]
      %v1528 = vld [vmem:[#allocation2 + $0x20] sm:$0xff]
      %v1529 = vld [vmem:[#allocation2 + $0x28] sm:$0xff]
      %v1530 = vld [vmem:[#allocation2 + $0x30] sm:$0xff]
      %v1531 = vld [vmem:[#allocation2 + $0x38] sm:$0xff]
      %v1532 = vld [vmem:[#allocation2 + $0x40] sm:$0xff]
      %v1533 = vld [vmem:[#allocation2 + $0x48] sm:$0xff]
      %v1534 = vld [vmem:[#allocation2 + $0x50] sm:$0xff]
      %v1535 = vld [vmem:[#allocation2 + $0x58] sm:$0xff]
      %v1536 = vld [vmem:[#allocation2 + $0x60] sm:$0xff]
      %v1537 = vld [vmem:[#allocation2 + $0x68] sm:$0xff]
      %v1538 = vld [vmem:[#allocation2 + $0x70] sm:$0xff]
      %v1539 = vld [vmem:[#allocation2 + $0x78] sm:$0xff]
      %v1540 = vld [vmem:[#allocation2 + $0x80] sm:$0xff]
      %v1541 = vld [vmem:[#allocation2 + $0x88] sm:$0xff]
      %v1542 = vld [vmem:[#allocation2 + $0x90] sm:$0xff]
      %v1543 = vld [vmem:[#allocation2 + $0x98] sm:$0xff]
      %v1544 = vld [vmem:[#allocation2 + $0xa0] sm:$0xff]
      %v1545 = vld [vmem:[#allocation2 + $0xa8] sm:$0xff]
      %v1546 = vld [vmem:[#allocation2 + $0xb0] sm:$0xff]
      %v1547 = vld [vmem:[#allocation2 + $0xb8] sm:$0xff]
      %v1548 = vld [vmem:[#allocation2 + $0xc0] sm:$0xff]
      %v1549 = vld [vmem:[#allocation2 + $0xc8] sm:$0xff]
      %v1550 = vld [vmem:[#allocation2 + $0xd0] sm:$0xff]
      %v1551 = vld [vmem:[#allocation2 + $0xd8] sm:$0xff]
      %v1552 = vld [vmem:[#allocation2 + $0xe0] sm:$0xff]
      %v1553 = vld [vmem:[#allocation2 + $0xe8] sm:$0xff]
      %v1554 = vld [vmem:[#allocation2 + $0xf0] sm:$0xff]
      %v1555 = vld [vmem:[#allocation2 + $0xf8] sm:$0xff]
      %v1556 = vld [vmem:[%s4] sm:$0x1]
      %v1558 = vlaneseq
      %v1559 = vshrl.u32 %v1558, 7
      %v1560 = vsub.s32 0, %v1559
      %v1561 = vrot.slane %v1556, %v1560
      %v1563 = vadd.f32 %v1524, %v1561
      %v1564 = vadd.f32 %v1525, %v1561
      %v1565 = vadd.f32 %v1526, %v1561
      %v1566 = vadd.f32 %v1527, %v1561
      %v1567 = vadd.f32 %v1528, %v1561
      %v1568 = vadd.f32 %v1529, %v1561
      %v1569 = vadd.f32 %v1530, %v1561
      %v1570 = vadd.f32 %v1531, %v1561
      %v1571 = vadd.f32 %v1532, %v1561
      %v1572 = vadd.f32 %v1533, %v1561
      %v1573 = vadd.f32 %v1534, %v1561
      %v1574 = vadd.f32 %v1535, %v1561
      %v1575 = vadd.f32 %v1536, %v1561
      %v1576 = vadd.f32 %v1537, %v1561
      %v1577 = vadd.f32 %v1538, %v1561
      %v1578 = vadd.f32 %v1539, %v1561
      %v1579 = vadd.f32 %v1540, %v1561
      %v1580 = vadd.f32 %v1541, %v1561
      %v1581 = vadd.f32 %v1542, %v1561
      %v1582 = vadd.f32 %v1543, %v1561
      %v1583 = vadd.f32 %v1544, %v1561
      %v1584 = vadd.f32 %v1545, %v1561
      %v1585 = vadd.f32 %v1546, %v1561
      %v1586 = vadd.f32 %v1547, %v1561
      %v1587 = vadd.f32 %v1548, %v1561
      %v1588 = vadd.f32 %v1549, %v1561
      %v1589 = vadd.f32 %v1550, %v1561
      %v1590 = vadd.f32 %v1551, %v1561
      %v1591 = vadd.f32 %v1552, %v1561
      %v1592 = vadd.f32 %v1553, %v1561
      %v1593 = vadd.f32 %v1554, %v1561
      %v1594 = vadd.f32 %v1555, %v1561
      %1595 = vst [vmem:[#allocation9] sm:$0xff] %v1563
      %1596 = vst [vmem:[#allocation9 + $0x8] sm:$0xff] %v1564
      %1597 = vst [vmem:[#allocation9 + $0x10] sm:$0xff] %v1565
      %1598 = vst [vmem:[#allocation9 + $0x18] sm:$0xff] %v1566
      %1599 = vst [vmem:[#allocation9 + $0x20] sm:$0xff] %v1567
      %1600 = vst [vmem:[#allocation9 + $0x28] sm:$0xff] %v1568
      %1601 = vst [vmem:[#allocation9 + $0x30] sm:$0xff] %v1569
      %1602 = vst [vmem:[#allocation9 + $0x38] sm:$0xff] %v1570
      %1603 = vst [vmem:[#allocation9 + $0x40] sm:$0xff] %v1571
      %1604 = vst [vmem:[#allocation9 + $0x48] sm:$0xff] %v1572
      %1605 = vst [vmem:[#allocation9 + $0x50] sm:$0xff] %v1573
      %1606 = vst [vmem:[#allocation9 + $0x58] sm:$0xff] %v1574
      %1607 = vst [vmem:[#allocation9 + $0x60] sm:$0xff] %v1575
      %1608 = vst [vmem:[#allocation9 + $0x68] sm:$0xff] %v1576
      %1609 = vst [vmem:[#allocation9 + $0x70] sm:$0xff] %v1577
      %1610 = vst [vmem:[#allocation9 + $0x78] sm:$0xff] %v1578
      %1611 = vst [vmem:[#allocation9 + $0x80] sm:$0xff] %v1579
      %1612 = vst [vmem:[#allocation9 + $0x88] sm:$0xff] %v1580
      %1613 = vst [vmem:[#allocation9 + $0x90] sm:$0xff] %v1581
      %1614 = vst [vmem:[#allocation9 + $0x98] sm:$0xff] %v1582
      %1615 = vst [vmem:[#allocation9 + $0xa0] sm:$0xff] %v1583
      %1616 = vst [vmem:[#allocation9 + $0xa8] sm:$0xff] %v1584
      %1617 = vst [vmem:[#allocation9 + $0xb0] sm:$0xff] %v1585
      %1618 = vst [vmem:[#allocation9 + $0xb8] sm:$0xff] %v1586
      %1619 = vst [vmem:[#allocation9 + $0xc0] sm:$0xff] %v1587
      %1620 = vst [vmem:[#allocation9 + $0xc8] sm:$0xff] %v1588
      %1621 = vst [vmem:[#allocation9 + $0xd0] sm:$0xff] %v1589
      %1622 = vst [vmem:[#allocation9 + $0xd8] sm:$0xff] %v1590
      %1623 = vst [vmem:[#allocation9 + $0xe0] sm:$0xff] %v1591
      %1624 = vst [vmem:[#allocation9 + $0xe8] sm:$0xff] %v1592
      %1625 = vst [vmem:[#allocation9 + $0xf0] sm:$0xff] %v1593
      %1626 = vst [vmem:[#allocation9 + $0xf8] sm:$0xff] %v1594
    $region41: #{tpu_custom_call.1} parent=1 // pred_fallthru
      _
    // Predicated region
    $region42: #{tpu_custom_call.1} parent=1 // pred_check
      _
    $region43: #{tpu_custom_call.1} parent=1 // pred_check_branch
      %1628 = sbr.rel (0) target = $region45
    $region44: #{tpu_custom_call.1} parent=1 // pred_region
      %s1630 = ssub.s32 4096, 4096
      %1631 = vsyncadd [#allocation5], %s1630
      %s1632 = sshll.u32 [#allocation9], 4
      %s1633 = int_to_ptr.vmem [resolvable:$true] %s1632
      %1638 = dma.vmem_to_hbm [thread:$0]  %s1633, 4096, %s5, [#allocation5], 128, 128, 8
    $region45: #{tpu_custom_call.1} parent=1 // pred_fallthru
      _
    // Predicated region
    $region46: #{tpu_custom_call.1} parent=1 // pred_check
      _
    $region47: #{tpu_custom_call.1} parent=1 // pred_check_branch
      %1640 = sbr.rel (0) target = $region49
    $region48: #{tpu_custom_call.1} parent=1 // pred_region
      %1641 = dma.done [#allocation5], 4096
    $region49: #{tpu_custom_call.1} parent=1 // pred_fallthru
      _
    %1642 = vsyncpa [#allocation4], 1
    %1643 = vsyncpa [#allocation7], 1
    %1644 = vsyncpa [#allocation5], 1

</llo_original>
